<compile_context>
chip_gen: v7x
topology: tpu7x:2x2x1
jax: 0.10.0
libtpu: 0.0.40
codegen_flags: <defaults>
</compile_context>

<pallas_src>
import functools

import numpy as np
import jax
import jax.numpy as jnp
from jax.experimental import pallas as pl
from jax.experimental.pallas import tpu as pltpu

_HIGHEST = jax.lax.Precision.HIGHEST
_VMEM_LIMIT = 32 * 1024 * 1024          # scoped-VMEM budget, safe on v7x (64MiB)


# ----------------------------- tiling helpers --------------------------------

def _pick_lane_tile(hw, max_tile=2048):
    """Largest multiple of 128 that divides hw (capped); else the full hw.

    TODO(synk): for large hw with no multiple-of-128 divisor, switch to a
    pl.cdiv grid with a masked remainder tile instead of one full-hw block.
    """
    t = min(max_tile, (hw // 128) * 128)
    while t >= 128:
        if hw % t == 0:
            return t
        t -= 128
    return hw


def _pick_row_tile(H, W, C, Co, budget_bytes=20 * 1024 * 1024):
    """Rows per tile for the fused kernel (whole rows, 1-row halo).

    Prefers the whole sample (no halo duplication); otherwise the largest
    divisor of H whose tile (TR*W lanes) is 128-aligned and whose
    double-buffered working set fits the budget."""
    def est(tr):
        L = tr * W
        x_blk = C * ((tr + 2) * W + 2) * 4 * 2          # double buffered
        cr_blk = C * L * 4 * 2
        out_blk = 4 * Co * L * 4 * 2
        tmp = (20 * C + 4 * Co) * L * 4                 # taps + stacked + acc
        return x_blk + cr_blk + out_blk + tmp

    divs = [d for d in range(H, 0, -1) if H % d == 0]
    legal = [d for d in divs if d == H or (d * W) % 128 == 0]
    for tr in legal:
        if est(tr) <= budget_bytes:
            return tr
    return legal[-1]


def _build_row_tiles(x, TR):
    """(N,C,H,W) -> (N, nt, C, (TR+2)*W + 2).

    Row tiles of x with a 1-row zero halo top/bottom and one extra zero
    element at each end of the flattened lane axis, so every conv-transpose
    tap becomes a static lane slice inside the kernel.  nt==1 is just the
    row-padded x (no duplication)."""
    N, C, H, W = x.shape
    nt = H // TR
    xf = jnp.pad(x, ((0, 0), (0, 0), (1, 1), (0, 0))).reshape(N, C, (H + 2) * W)
    xf = jnp.pad(xf, ((0, 0), (0, 0), (1, 1)))
    if nt == 1:
        return xf[:, None]
    Lin = (TR + 2) * W + 2
    tiles = [xf[:, :, j * TR * W: j * TR * W + Lin] for j in range(nt)]
    return jnp.stack(tiles, axis=1)


# ----------------------------- Pallas kernels --------------------------------

def _freq_polar_kernel(mp_ref, w1_ref, b1_ref, w2_ref, b2_ref, re_ref, im_ref):
    """amp_fuse/pha_fuse fused into one block-diagonal (2C,2C) conv1x1 pair
    (conv -> LeakyReLU(0.1) -> conv), then polar->rect on the LOW-res grid."""
    mp = mp_ref[0]                                            # (2C, ts)
    h = jnp.dot(w1_ref[...], mp, preferred_element_type=jnp.float32,
                precision=_HIGHEST) + b1_ref[...]
    h = jnp.where(h >= 0, h, 0.1 * h)                         # LeakyReLU(0.1)
    g = jnp.dot(w2_ref[...], h, preferred_element_type=jnp.float32,
                precision=_HIGHEST) + b2_ref[...]
    C = g.shape[0] // 2
    amp, pha = g[:C], g[C:]
    re_ref[0] = amp * jnp.cos(pha)
    im_ref[0] = amp * jnp.sin(pha)


def freq_polar(mp, w1, b1, w2, b2):
    N, C2, HW = mp.shape
    C = C2 // 2
    ts = _pick_lane_tile(HW)
    grid = (N, HW // ts)
    dspec_in = pl.BlockSpec((1, C2, ts), lambda n, j: (n, 0, j))
    dspec_out = pl.BlockSpec((1, C, ts), lambda n, j: (n, 0, j))
    wspec = pl.BlockSpec((C2, C2), lambda n, j: (0, 0))
    bspec = pl.BlockSpec((C2, 1), lambda n, j: (0, 0))
    oshape = jax.ShapeDtypeStruct((N, C, HW), jnp.float32)
    return pl.pallas_call(
        _freq_polar_kernel,
        out_shape=(oshape, oshape),
        grid_spec=pltpu.PrefetchScalarGridSpec(
            num_scalar_prefetch=0, grid=grid,
            in_specs=[dspec_in, wspec, bspec, wspec, bspec],
            out_specs=(dspec_out, dspec_out)),
        compiler_params=pltpu.CompilerParams(
            dimension_semantics=("parallel", "parallel"),
            vmem_limit_bytes=_VMEM_LIMIT),
    )(mp, w1, b1, w2, b2)


def _fused_out_kernel(xh_ref, crop_ref, w_ref, b_ref, o_ref, *, W, L):
    """Single matmul per tile:
         out_phases = W_full @ [ 9 conv-transpose taps of x ; |ifft| crop ]
       The 9 taps are built in VMEM from the row-halo'd tile (no im2col in
       HBM): each tap is a static lane slice; out-of-row-range values come
       from the zero halo, out-of-column-range values are masked."""
    xh = xh_ref[0, 0]                                         # (C, (TR+2)*W+2)
    crop = crop_ref[0]                                        # (C, L)
    col = jax.lax.broadcasted_iota(jnp.int32, (1, L), 1) % W
    not_left = col >= 1                                       # tap col offset -1
    not_right = col <= W - 2                                  # tap col offset +1
    taps = []
    for d in range(3):                                        # row offset d-1
        for e in range(3):                                    # col offset e-1
            t = xh[:, d * W + e: d * W + e + L]
            if e == 0:
                t = jnp.where(not_left, t, 0.0)
            elif e == 2:
                t = jnp.where(not_right, t, 0.0)
            taps.append(t)
    taps.append(crop)
    stacked = jnp.concatenate(taps, axis=0)                   # (10C, L)
    acc = jnp.dot(w_ref[...], stacked, preferred_element_type=jnp.float32,
                  precision=_HIGHEST)                         # (4Co, L)
    o_ref[0] = acc + b_ref[...]


def fused_output(x_halo, crop, w_full, bias, *, H, W, TR):
    N, nt, C, Lin = x_halo.shape
    HW = H * W
    L = TR * W
    R, K = w_full.shape
    kernel = functools.partial(_fused_out_kernel, W=W, L=L)
    return pl.pallas_call(
        kernel,
        out_shape=jax.ShapeDtypeStruct((N, R, HW), jnp.float32),
        grid_spec=pltpu.PrefetchScalarGridSpec(
            num_scalar_prefetch=0, grid=(N, nt),
            in_specs=[pl.BlockSpec((1, 1, C, Lin), lambda n, j: (n, j, 0, 0)),
                      pl.BlockSpec((1, C, L), lambda n, j: (n, 0, j)),
                      pl.BlockSpec((R, K), lambda n, j: (0, 0)),
                      pl.BlockSpec((R, 1), lambda n, j: (0, 0))],
            out_specs=pl.BlockSpec((1, R, L), lambda n, j: (n, 0, j))),
        compiler_params=pltpu.CompilerParams(
            dimension_semantics=("parallel", "parallel"),
            vmem_limit_bytes=_VMEM_LIMIT),
    )(x_halo, crop, w_full, bias)


# --------------------------- weight / map folding ----------------------------

# ConvTranspose2d(k=4, s=2, p=1): out[2i+r] += x[i + d - 1] * w[k]
#   (parity r, tap index d) -> kernel index k:
_KTAP = {(0, 0): 3, (0, 1): 1, (1, 1): 2, (1, 2): 0}


def build_fused_weights(p, C):
    """Fold ConvTranspose2d + nearest-up(post) + fuse into one (4Co, 10C)
    weight (rows = out-channel-major, then the 4 output phases)."""
    w_ct = p['up_w']                                  # (Ci, Co, 4, 4)
    Co = w_ct.shape[1]
    fuse_w = p['fuse_w'].reshape(Co, 2 * Co)
    w_a, w_b = fuse_w[:, :Co], fuse_w[:, Co:]         # fuse halves: x2 / x3
    w_post = p['post_w'].reshape(Co, Co)

    # conv-transpose as 4 output parities ("phases") over a 9-tap neighborhood
    wt = jnp.zeros((Co, 2, 2, 3, 3, C), jnp.float32)
    for (rh, d), kh in _KTAP.items():
        for (rw, e), kw in _KTAP.items():
            wt = wt.at[:, rh, rw, d, e, :].set(w_ct[:, :, kh, kw].T)
    w_ct_ph = wt.reshape(Co, 4, 9 * C)                # [up-out-ch, phase, 9*Ci]

    # fold fuse's x2-half into the conv-transpose weights (per phase)
    w_main = jnp.einsum('oc,cpk->opk', w_a, w_ct_ph,
                        precision=_HIGHEST).reshape(4 * Co, 9 * C)
    # fold fuse's x3-half with `post`; nearest-2x == same weight for 4 phases
    w_bp = jnp.matmul(w_b, w_post, precision=_HIGHEST)   # (Co, C)
    w_crop = jnp.repeat(w_bp, 4, axis=0)                 # (4Co, C)
    w_full = jnp.concatenate([w_main, w_crop], axis=1)   # (4Co, 10C)

    bias = (jnp.matmul(w_a, p['up_b'], precision=_HIGHEST)
            + jnp.matmul(w_b, p['post_b'], precision=_HIGHEST)
            + p['fuse_b'])                               # (Co,)
    bias = jnp.repeat(bias, 4).reshape(4 * Co, 1)
    return w_full, bias


def build_freq_weights(p, C):
    """Block-diagonal stacking of amp_fuse / pha_fuse 1x1 convs."""
    def blk(a, b):
        z = jnp.zeros((C, C), jnp.float32)
        top = jnp.concatenate([a.reshape(C, C), z], axis=1)
        bot = jnp.concatenate([z, b.reshape(C, C)], axis=1)
        return jnp.concatenate([top, bot], axis=0)
    w1 = blk(p['amp_w1'], p['pha_w1'])
    w2 = blk(p['amp_w2'], p['pha_w2'])
    b1 = jnp.concatenate([p['amp_b1'], p['pha_b1']]).reshape(2 * C, 1)
    b2 = jnp.concatenate([p['amp_b2'], p['pha_b2']]).reshape(2 * C, 1)
    return w1, b1, w2, b2


# ------------------------------- forward -------------------------------------

def frescat_area_v2(x, p):
    N, C, H, W = x.shape
    HW = H * W
    Co = p['fuse_w'].shape[0]

    # ---- frequency branch -------------------------------------------------
    # TODO(synk): FFT/IFFT have no Pallas primitive on TPU; kept as XLA ops.
    fx = jnp.fft.fft2(x)
    mp = jnp.concatenate([jnp.abs(fx), jnp.angle(fx)], axis=1).reshape(N, 2 * C, HW)
    w1, b1, w2, b2 = build_freq_weights(p, C)
    re_lo, im_lo = freq_polar(mp, w1, b1, w2, b2)

    # Identity: |ifft_{2H,2W}(repeat2(Z))| / D == |ifft_{H,W}(Z)| on the kept
    # quadrants, and the reference's quadrant crop re-assembles exactly
    # |ifft_{H,W}(Z)|.  So repeat + big ifft + D-map + crop collapse to one
    # small inverse FFT.
    z = jax.lax.complex(re_lo.reshape(N, C, H, W), im_lo.reshape(N, C, H, W))
    crop = jnp.abs(jnp.fft.ifft2(z)).reshape(N, C, HW)

    # ---- fused conv-transpose + post + concat + fuse -----------------------
    w_full, bias = build_fused_weights(p, C)
    TR = _pick_row_tile(H, W, C, Co)
    x_halo = _build_row_tiles(x, TR)
    out_ph = fused_output(x_halo, crop, w_full, bias, H=H, W=W, TR=TR)

    # de-interleave the 2x2 output phases: row = o*4 + rh*2 + rw
    # TODO(synk): fold this transpose into the kernel's output spec (needs an
    # in-kernel sublane/lane interleave); kept as one fused XLA transpose.
    out = out_ph.reshape(N, Co, 2, 2, H, W)
    out = jnp.transpose(out, (0, 1, 4, 2, 5, 3)).reshape(N, Co, 2 * H, 2 * W)
    return out


frescat_area_v2_jit = jax.jit(frescat_area_v2)


# ----------------------- pure-XLA reference (for checking) -------------------

def _ref_forward(x, p):
    hp = jax.lax.Precision.HIGHEST
    N, C, H, W = x.shape
    Hh, Wh = H // 2, W // 2

    def conv1x1(t, w, b):
        return (jnp.einsum('oc,nchw->nohw', w.reshape(w.shape[0], w.shape[1]),
                           t, precision=hp) + b.reshape(1, -1, 1, 1))

    def pair(t, w1, b1, w2, b2):
        h = conv1x1(t, w1, b1)
        h = jnp.where(h >= 0, h, 0.1 * h)
        return conv1x1(h, w2, b2)

    fx = jnp.fft.fft2(x)
    Mag = pair(jnp.abs(fx), p['amp_w1'], p['amp_b1'], p['amp_w2'], p['amp_b2'])
    Pha = pair(jnp.angle(fx), p['pha_w1'], p['pha_b1'], p['pha_w2'], p['pha_b2'])
    amp = jnp.repeat(jnp.repeat(Mag, 2, axis=2), 2, axis=3)
    phu = jnp.repeat(jnp.repeat(Pha, 2, axis=2), 2, axis=3)
    o = jnp.fft.ifft2(jax.lax.complex(amp * jnp.cos(phu), amp * jnp.sin(phu)))

    i = np.arange(2 * H)
    j = np.arange(2 * W)
    xi = np.where(i < H, i, 2 * H - i).astype(np.float32)
    yj = np.where(j < W, j, 2 * W - j).astype(np.float32)
    a = (np.pi * xi / H)[:, None]
    b = (np.pi * yj / W)[None, :]
    dre = 1.0 + np.cos(a) + np.cos(b) + np.cos(a + b)
    dim = np.sin(a) + np.sin(b) + np.sin(a + b)
    d = np.sqrt(dre * dre + dim * dim) / 4.0
    out = jnp.abs(o) / jnp.asarray(d, jnp.float32)

    crop = jnp.zeros_like(x)
    crop = crop.at[:, :, :Hh, :Wh].set(out[:, :, :Hh, :Wh])
    crop = crop.at[:, :, Hh:H, :Wh].set(out[:, :, 2 * H - Hh:, :Wh])
    crop = crop.at[:, :, :Hh, Wh:W].set(out[:, :, :Hh, 2 * W - Wh:])
    crop = crop.at[:, :, Hh:H, Wh:W].set(out[:, :, 2 * H - Hh:, 2 * W - Wh:])
    crop_up = jnp.repeat(jnp.repeat(crop, 2, axis=2), 2, axis=3)
    x3 = conv1x1(crop_up, p['post_w'], p['post_b'])

    rhs = jnp.transpose(p['up_w'], (1, 0, 2, 3))[:, :, ::-1, ::-1]
    x2 = jax.lax.conv_general_dilated(
        x, rhs, window_strides=(1, 1), padding=((2, 2), (2, 2)),
        lhs_dilation=(2, 2), dimension_numbers=('NCHW', 'OIHW', 'NCHW'),
        precision=hp) + p['up_b'].reshape(1, -1, 1, 1)

    cat = jnp.concatenate([x2, x3], axis=1)
    return conv1x1(cat, p['fuse_w'], p['fuse_b'])


# ------------------------------ params init ----------------------------------

def init_params(key, c):
    ks = jax.random.split(key, 14)

    def w(k, shape, scale=0.1):
        return scale * jax.random.normal(k, shape, jnp.float32)

    return {
        # ConvTranspose2d weight layout: (C_in, C_out, kH, kW)
        'up_w': w(ks[0], (c, c, 4, 4)), 'up_b': w(ks[1], (c,)),
        # amp_fuse: Conv2d(c,c,1) -> LeakyReLU(0.1) -> Conv2d(c,c,1)
        'amp_w1': w(ks[2], (c, c, 1, 1)), 'amp_b1': w(ks[3], (c,)),
        'amp_w2': w(ks[4], (c, c, 1, 1)), 'amp_b2': w(ks[5], (c,)),
        # pha_fuse
        'pha_w1': w(ks[6], (c, c, 1, 1)), 'pha_b1': w(ks[7], (c,)),
        'pha_w2': w(ks[8], (c, c, 1, 1)), 'pha_b2': w(ks[9], (c,)),
        # post: Conv2d(c,c,1)
        'post_w': w(ks[10], (c, c, 1, 1)), 'post_b': w(ks[11], (c,)),
        # fuse: Conv2d(2c, c, 1)
        'fuse_w': w(ks[12], (c, 2 * c, 1, 1)), 'fuse_b': w(ks[13], (c,)),
    }


if __name__ == "__main__":
    key = jax.random.PRNGKey(0)
    kx, kp = jax.random.split(key)

    N, C, H, W = 2, 4, 16, 16
    x = jax.random.normal(kx, (N, C, H, W), jnp.float32)
    params = init_params(kp, C)

    out = jax.block_until_ready(frescat_area_v2_jit(x, params))
    assert out.shape == (N, C, 2 * H, 2 * W), out.shape
    assert out.dtype == jnp.float32
    assert bool(jnp.all(jnp.isfinite(out)))

    # self-check against an op-for-op XLA reference of the PyTorch module
    ref = jax.block_until_ready(jax.jit(_ref_forward)(x, params))
    err = float(jnp.max(jnp.abs(out - ref)))
    assert err < 1e-2, f"mismatch vs reference: {err}"

    print("KERNEL_OK")
</pallas_src>

<mosaic_0001>
module attributes {stable_mosaic.version = 11 : i64} {
  func.func @_freq_polar_kernel(%arg0: i32, %arg1: i32, %arg2: memref<1x8x256xf32, #tpu.memory_space<vmem>>, %arg3: memref<8x8xf32, #tpu.memory_space<vmem>>, %arg4: memref<8x1xf32, #tpu.memory_space<vmem>>, %arg5: memref<8x8xf32, #tpu.memory_space<vmem>>, %arg6: memref<8x1xf32, #tpu.memory_space<vmem>>, %arg7: memref<1x4x256xf32, #tpu.memory_space<vmem>>, %arg8: memref<1x4x256xf32, #tpu.memory_space<vmem>>) attributes {dimension_semantics = [#tpu.dimension_semantics<parallel>, #tpu.dimension_semantics<parallel>], iteration_bounds = array<i64: 2, 1>, scalar_prefetch = 0 : i64, scratch_operands = 0 : i64, tpu.core_type = #tpu.core_type<tc>, window_params = [{transform_indices = @transform_0, window_bounds = array<i64: 1, 8, 256>}, {pipeline_mode = #tpu.pipeline_mode<synchronous>, transform_indices = @transform_1, window_bounds = array<i64: 8, 8>}, {pipeline_mode = #tpu.pipeline_mode<synchronous>, transform_indices = @transform_2, window_bounds = array<i64: 8, 1>}, {pipeline_mode = #tpu.pipeline_mode<synchronous>, transform_indices = @transform_3, window_bounds = array<i64: 8, 8>}, {pipeline_mode = #tpu.pipeline_mode<synchronous>, transform_indices = @transform_4, window_bounds = array<i64: 8, 1>}, {transform_indices = @transform_5, window_bounds = array<i64: 1, 4, 256>}, {transform_indices = @transform_6, window_bounds = array<i64: 1, 4, 256>}]} {
    %c0 = arith.constant 0 : index
    %c0_0 = arith.constant 0 : index
    %c0_1 = arith.constant 0 : index
    %0 = vector.load %arg2[%c0, %c0_0, %c0_1] : memref<1x8x256xf32, #tpu.memory_space<vmem>>, vector<1x8x256xf32>
    %1 = vector.shape_cast %0 : vector<1x8x256xf32> to vector<8x256xf32>
    %c0_2 = arith.constant 0 : index
    %c0_3 = arith.constant 0 : index
    %2 = vector.load %arg3[%c0_2, %c0_3] : memref<8x8xf32, #tpu.memory_space<vmem>>, vector<8x8xf32>
    %cst = arith.constant dense<0.000000e+00> : vector<8x256xf32>
    %3 = tpu.matmul %2, %1, %cst {dimension_numbers = #tpu.dot_dimension_numbers<[1], [0], [0], [1], [0, 0, 1, 1], [], []>, precision = #tpu.contract_precision<fp32>} : vector<8x8xf32>, vector<8x256xf32>, vector<8x256xf32> -> vector<8x256xf32>
    %c0_4 = arith.constant 0 : index
    %c0_5 = arith.constant 0 : index
    %4 = vector.load %arg4[%c0_4, %c0_5] : memref<8x1xf32, #tpu.memory_space<vmem>>, vector<8x1xf32>
    %5 = vector.broadcast %4 : vector<8x1xf32> to vector<8x256xf32>
    %6 = arith.addf %3, %5 : vector<8x256xf32>
    %cst_6 = arith.constant 0.000000e+00 : f32
    %7 = vector.broadcast %cst_6 : f32 to vector<8x256xf32>
    %8 = arith.cmpf oge, %6, %7 : vector<8x256xf32>
    %cst_7 = arith.constant 1.000000e-01 : f32
    %9 = vector.broadcast %cst_7 : f32 to vector<8x256xf32>
    %10 = arith.mulf %9, %6 : vector<8x256xf32>
    %11 = arith.select %8, %6, %10 : vector<8x256xi1>, vector<8x256xf32>
    %c0_8 = arith.constant 0 : index
    %c0_9 = arith.constant 0 : index
    %12 = vector.load %arg5[%c0_8, %c0_9] : memref<8x8xf32, #tpu.memory_space<vmem>>, vector<8x8xf32>
    %cst_10 = arith.constant dense<0.000000e+00> : vector<8x256xf32>
    %13 = tpu.matmul %12, %11, %cst_10 {dimension_numbers = #tpu.dot_dimension_numbers<[1], [0], [0], [1], [0, 0, 1, 1], [], []>, precision = #tpu.contract_precision<fp32>} : vector<8x8xf32>, vector<8x256xf32>, vector<8x256xf32> -> vector<8x256xf32>
    %c0_11 = arith.constant 0 : index
    %c0_12 = arith.constant 0 : index
    %14 = vector.load %arg6[%c0_11, %c0_12] : memref<8x1xf32, #tpu.memory_space<vmem>>, vector<8x1xf32>
    %15 = vector.broadcast %14 : vector<8x1xf32> to vector<8x256xf32>
    %16 = arith.addf %13, %15 : vector<8x256xf32>
    %17 = vector.extract_strided_slice %16 {offsets = [0, 0], sizes = [4, 256], strides = [1, 1]} : vector<8x256xf32> to vector<4x256xf32>
    %18 = vector.extract_strided_slice %16 {offsets = [4, 0], sizes = [4, 256], strides = [1, 1]} : vector<8x256xf32> to vector<4x256xf32>
    %19 = math.cos %18 : vector<4x256xf32>
    %20 = arith.mulf %17, %19 : vector<4x256xf32>
    %c0_13 = arith.constant 0 : index
    %c0_14 = arith.constant 0 : index
    %c0_15 = arith.constant 0 : index
    %21 = vector.load %arg7[%c0_13, %c0_14, %c0_15] : memref<1x4x256xf32, #tpu.memory_space<vmem>>, vector<1x4x256xf32>
    %22 = vector.shape_cast %21 : vector<1x4x256xf32> to vector<4x256xf32>
    %23 = vector.shape_cast %20 : vector<4x256xf32> to vector<1x4x256xf32>
    tpu.vector_store %arg7[%c0_13, %c0_14, %c0_15], %23 {strides = array<i32>} : memref<1x4x256xf32, #tpu.memory_space<vmem>>, vector<1x4x256xf32>,
    %24 = math.sin %18 : vector<4x256xf32>
    %25 = arith.mulf %17, %24 : vector<4x256xf32>
    %c0_16 = arith.constant 0 : index
    %c0_17 = arith.constant 0 : index
    %c0_18 = arith.constant 0 : index
    %26 = vector.load %arg8[%c0_16, %c0_17, %c0_18] : memref<1x4x256xf32, #tpu.memory_space<vmem>>, vector<1x4x256xf32>
    %27 = vector.shape_cast %26 : vector<1x4x256xf32> to vector<4x256xf32>
    %28 = vector.shape_cast %25 : vector<4x256xf32> to vector<1x4x256xf32>
    tpu.vector_store %arg8[%c0_16, %c0_17, %c0_18], %28 {strides = array<i32>} : memref<1x4x256xf32, #tpu.memory_space<vmem>>, vector<1x4x256xf32>,
    return
  }
  func.func @transform_0(%arg0: i32, %arg1: i32) -> (i32, i32, i32) {
    %c0_i32 = arith.constant 0 : i32
    %c0_i32_0 = arith.constant 0 : i32
    return %arg0, %c0_i32, %arg1 : i32, i32, i32
  }
  func.func @transform_1(%arg0: i32, %arg1: i32) -> (i32, i32) {
    %c0_i32 = arith.constant 0 : i32
    %c0_i32_0 = arith.constant 0 : i32
    %c0_i32_1 = arith.constant 0 : i32
    return %c0_i32, %c0_i32_0 : i32, i32
  }
  func.func @transform_2(%arg0: i32, %arg1: i32) -> (i32, i32) {
    %c0_i32 = arith.constant 0 : i32
    %c0_i32_0 = arith.constant 0 : i32
    %c0_i32_1 = arith.constant 0 : i32
    return %c0_i32, %c0_i32_0 : i32, i32
  }
  func.func @transform_3(%arg0: i32, %arg1: i32) -> (i32, i32) {
    %c0_i32 = arith.constant 0 : i32
    %c0_i32_0 = arith.constant 0 : i32
    %c0_i32_1 = arith.constant 0 : i32
    return %c0_i32, %c0_i32_0 : i32, i32
  }
  func.func @transform_4(%arg0: i32, %arg1: i32) -> (i32, i32) {
    %c0_i32 = arith.constant 0 : i32
    %c0_i32_0 = arith.constant 0 : i32
    %c0_i32_1 = arith.constant 0 : i32
    return %c0_i32, %c0_i32_0 : i32, i32
  }
  func.func @transform_5(%arg0: i32, %arg1: i32) -> (i32, i32, i32) {
    %c0_i32 = arith.constant 0 : i32
    %c0_i32_0 = arith.constant 0 : i32
    return %arg0, %c0_i32, %arg1 : i32, i32, i32
  }
  func.func @transform_6(%arg0: i32, %arg1: i32) -> (i32, i32, i32) {
    %c0_i32 = arith.constant 0 : i32
    %c0_i32_0 = arith.constant 0 : i32
    return %arg0, %c0_i32, %arg1 : i32, i32, i32
  }
}

module attributes {stable_mosaic.version = 11 : i64} {
  func.func @_fused_out_kernel(%arg0: i32, %arg1: i32, %arg2: memref<1x1x4x290xf32, #tpu.memory_space<vmem>>, %arg3: memref<1x4x256xf32, #tpu.memory_space<vmem>>, %arg4: memref<16x40xf32, #tpu.memory_space<vmem>>, %arg5: memref<16x1xf32, #tpu.memory_space<vmem>>, %arg6: memref<1x16x256xf32, #tpu.memory_space<vmem>>) attributes {dimension_semantics = [#tpu.dimension_semantics<parallel>, #tpu.dimension_semantics<parallel>], iteration_bounds = array<i64: 2, 1>, scalar_prefetch = 0 : i64, scratch_operands = 0 : i64, tpu.core_type = #tpu.core_type<tc>, window_params = [{transform_indices = @transform_0, window_bounds = array<i64: 1, 1, 4, 290>}, {transform_indices = @transform_1, window_bounds = array<i64: 1, 4, 256>}, {pipeline_mode = #tpu.pipeline_mode<synchronous>, transform_indices = @transform_2, window_bounds = array<i64: 16, 40>}, {pipeline_mode = #tpu.pipeline_mode<synchronous>, transform_indices = @transform_3, window_bounds = array<i64: 16, 1>}, {transform_indices = @transform_4, window_bounds = array<i64: 1, 16, 256>}]} {
    %c0 = arith.constant 0 : index
    %c0_0 = arith.constant 0 : index
    %c0_1 = arith.constant 0 : index
    %c0_2 = arith.constant 0 : index
    %0 = vector.load %arg2[%c0, %c0_0, %c0_1, %c0_2] : memref<1x1x4x290xf32, #tpu.memory_space<vmem>>, vector<1x1x4x290xf32>
    %1 = vector.shape_cast %0 : vector<1x1x4x290xf32> to vector<4x290xf32>
    %c0_3 = arith.constant 0 : index
    %c0_4 = arith.constant 0 : index
    %c0_5 = arith.constant 0 : index
    %2 = vector.load %arg3[%c0_3, %c0_4, %c0_5] : memref<1x4x256xf32, #tpu.memory_space<vmem>>, vector<1x4x256xf32>
    %3 = vector.shape_cast %2 : vector<1x4x256xf32> to vector<4x256xf32>
    %4 = tpu.iota {dimensions = array<i32: 1>} : vector<1x256xi32>
    %c16_i32 = arith.constant 16 : i32
    %c0_i32 = arith.constant 0 : i32
    %5 = arith.cmpi eq, %c16_i32, %c0_i32 : i32
    %c1_i32 = arith.constant 1 : i32
    %6 = arith.select %5, %c1_i32, %c16_i32 : i32
    %7 = vector.broadcast %6 : i32 to vector<1x256xi32>
    %8 = arith.remsi %4, %7 : vector<1x256xi32>
    %c0_i32_6 = arith.constant 0 : i32
    %9 = vector.broadcast %c0_i32_6 : i32 to vector<1x256xi32>
    %10 = arith.cmpi ne, %8, %9 : vector<1x256xi32>
    %c0_i32_7 = arith.constant 0 : i32
    %11 = vector.broadcast %c0_i32_7 : i32 to vector<1x256xi32>
    %12 = arith.cmpi slt, %8, %11 : vector<1x256xi32>
    %c0_i32_8 = arith.constant 0 : i32
    %13 = arith.cmpi slt, %6, %c0_i32_8 : i32
    %14 = vector.broadcast %13 : i1 to vector<1x256xi1>
    %15 = vector.broadcast %14 : vector<1x256xi1> to vector<1x256xi1>
    %16 = arith.xori %12, %15 : vector<1x256xi1>
    %17 = arith.andi %16, %10 : vector<1x256xi1>
    %18 = vector.broadcast %6 : i32 to vector<1x256xi32>
    %19 = arith.addi %8, %18 : vector<1x256xi32>
    %20 = arith.select %17, %19, %8 : vector<1x256xi1>, vector<1x256xi32>
    %c1_i32_9 = arith.constant 1 : i32
    %21 = vector.broadcast %c1_i32_9 : i32 to vector<1x256xi32>
    %22 = arith.cmpi sge, %20, %21 : vector<1x256xi32>
    %c14_i32 = arith.constant 14 : i32
    %23 = vector.broadcast %c14_i32 : i32 to vector<1x256xi32>
    %24 = arith.cmpi sle, %20, %23 : vector<1x256xi32>
    %25 = vector.extract_strided_slice %1 {offsets = [0, 0], sizes = [4, 256], strides = [1, 1]} : vector<4x290xf32> to vector<4x256xf32>
    %cst = arith.constant 0.000000e+00 : f32
    %26 = vector.shape_cast %22 : vector<1x256xi1> to vector<1x256xi1>
    %27 = vector.broadcast %26 : vector<1x256xi1> to vector<4x256xi1>
    %28 = vector.broadcast %cst : f32 to vector<4x256xf32>
    %29 = arith.select %27, %25, %28 : vector<4x256xi1>, vector<4x256xf32>
    %30 = vector.extract_strided_slice %1 {offsets = [0, 1], sizes = [4, 256], strides = [1, 1]} : vector<4x290xf32> to vector<4x256xf32>
    %31 = vector.extract_strided_slice %1 {offsets = [0, 2], sizes = [4, 256], strides = [1, 1]} : vector<4x290xf32> to vector<4x256xf32>
    %cst_10 = arith.constant 0.000000e+00 : f32
    %32 = vector.shape_cast %24 : vector<1x256xi1> to vector<1x256xi1>
    %33 = vector.broadcast %32 : vector<1x256xi1> to vector<4x256xi1>
    %34 = vector.broadcast %cst_10 : f32 to vector<4x256xf32>
    %35 = arith.select %33, %31, %34 : vector<4x256xi1>, vector<4x256xf32>
    %36 = vector.extract_strided_slice %1 {offsets = [0, 16], sizes = [4, 256], strides = [1, 1]} : vector<4x290xf32> to vector<4x256xf32>
    %cst_11 = arith.constant 0.000000e+00 : f32
    %37 = vector.shape_cast %22 : vector<1x256xi1> to vector<1x256xi1>
    %38 = vector.broadcast %37 : vector<1x256xi1> to vector<4x256xi1>
    %39 = vector.broadcast %cst_11 : f32 to vector<4x256xf32>
    %40 = arith.select %38, %36, %39 : vector<4x256xi1>, vector<4x256xf32>
    %41 = vector.extract_strided_slice %1 {offsets = [0, 17], sizes = [4, 256], strides = [1, 1]} : vector<4x290xf32> to vector<4x256xf32>
    %42 = vector.extract_strided_slice %1 {offsets = [0, 18], sizes = [4, 256], strides = [1, 1]} : vector<4x290xf32> to vector<4x256xf32>
    %cst_12 = arith.constant 0.000000e+00 : f32
    %43 = vector.shape_cast %24 : vector<1x256xi1> to vector<1x256xi1>
    %44 = vector.broadcast %43 : vector<1x256xi1> to vector<4x256xi1>
    %45 = vector.broadcast %cst_12 : f32 to vector<4x256xf32>
    %46 = arith.select %44, %42, %45 : vector<4x256xi1>, vector<4x256xf32>
    %47 = vector.extract_strided_slice %1 {offsets = [0, 32], sizes = [4, 256], strides = [1, 1]} : vector<4x290xf32> to vector<4x256xf32>
    %cst_13 = arith.constant 0.000000e+00 : f32
    %48 = vector.shape_cast %22 : vector<1x256xi1> to vector<1x256xi1>
    %49 = vector.broadcast %48 : vector<1x256xi1> to vector<4x256xi1>
    %50 = vector.broadcast %cst_13 : f32 to vector<4x256xf32>
    %51 = arith.select %49, %47, %50 : vector<4x256xi1>, vector<4x256xf32>
    %52 = vector.extract_strided_slice %1 {offsets = [0, 33], sizes = [4, 256], strides = [1, 1]} : vector<4x290xf32> to vector<4x256xf32>
    %53 = vector.extract_strided_slice %1 {offsets = [0, 34], sizes = [4, 256], strides = [1, 1]} : vector<4x290xf32> to vector<4x256xf32>
    %cst_14 = arith.constant 0.000000e+00 : f32
    %54 = vector.shape_cast %24 : vector<1x256xi1> to vector<1x256xi1>
    %55 = vector.broadcast %54 : vector<1x256xi1> to vector<4x256xi1>
    %56 = vector.broadcast %cst_14 : f32 to vector<4x256xf32>
    %57 = arith.select %55, %53, %56 : vector<4x256xi1>, vector<4x256xf32>
    %58 = tpu.concatenate %29, %30, %35, %40, %41, %46, %51, %52, %57, %3 in 0 : vector<4x256xf32>, vector<4x256xf32>, vector<4x256xf32>, vector<4x256xf32>, vector<4x256xf32>, vector<4x256xf32>, vector<4x256xf32>, vector<4x256xf32>, vector<4x256xf32>, vector<4x256xf32> -> vector<40x256xf32>
    %c0_15 = arith.constant 0 : index
    %c0_16 = arith.constant 0 : index
    %59 = vector.load %arg4[%c0_15, %c0_16] : memref<16x40xf32, #tpu.memory_space<vmem>>, vector<16x40xf32>
    %cst_17 = arith.constant dense<0.000000e+00> : vector<16x256xf32>
    %60 = tpu.matmul %59, %58, %cst_17 {dimension_numbers = #tpu.dot_dimension_numbers<[1], [0], [0], [1], [0, 0, 1, 1], [], []>, precision = #tpu.contract_precision<fp32>} : vector<16x40xf32>, vector<40x256xf32>, vector<16x256xf32> -> vector<16x256xf32>
    %c0_18 = arith.constant 0 : index
    %c0_19 = arith.constant 0 : index
    %61 = vector.load %arg5[%c0_18, %c0_19] : memref<16x1xf32, #tpu.memory_space<vmem>>, vector<16x1xf32>
    %62 = vector.broadcast %61 : vector<16x1xf32> to vector<16x256xf32>
    %63 = arith.addf %60, %62 : vector<16x256xf32>
    %c0_20 = arith.constant 0 : index
    %c0_21 = arith.constant 0 : index
    %c0_22 = arith.constant 0 : index
    %64 = vector.load %arg6[%c0_20, %c0_21, %c0_22] : memref<1x16x256xf32, #tpu.memory_space<vmem>>, vector<1x16x256xf32>
    %65 = vector.shape_cast %64 : vector<1x16x256xf32> to vector<16x256xf32>
    %66 = vector.shape_cast %63 : vector<16x256xf32> to vector<1x16x256xf32>
    tpu.vector_store %arg6[%c0_20, %c0_21, %c0_22], %66 {strides = array<i32>} : memref<1x16x256xf32, #tpu.memory_space<vmem>>, vector<1x16x256xf32>,
    return
  }
  func.func @transform_0(%arg0: i32, %arg1: i32) -> (i32, i32, i32, i32) {
    %c0_i32 = arith.constant 0 : i32
    %c0_i32_0 = arith.constant 0 : i32
    %c0_i32_1 = arith.constant 0 : i32
    return %arg0, %arg1, %c0_i32, %c0_i32_0 : i32, i32, i32, i32
  }
  func.func @transform_1(%arg0: i32, %arg1: i32) -> (i32, i32, i32) {
    %c0_i32 = arith.constant 0 : i32
    %c0_i32_0 = arith.constant 0 : i32
    return %arg0, %c0_i32, %arg1 : i32, i32, i32
  }
  func.func @transform_2(%arg0: i32, %arg1: i32) -> (i32, i32) {
    %c0_i32 = arith.constant 0 : i32
    %c0_i32_0 = arith.constant 0 : i32
    %c0_i32_1 = arith.constant 0 : i32
    return %c0_i32, %c0_i32_0 : i32, i32
  }
  func.func @transform_3(%arg0: i32, %arg1: i32) -> (i32, i32) {
    %c0_i32 = arith.constant 0 : i32
    %c0_i32_0 = arith.constant 0 : i32
    %c0_i32_1 = arith.constant 0 : i32
    return %c0_i32, %c0_i32_0 : i32, i32
  }
  func.func @transform_4(%arg0: i32, %arg1: i32) -> (i32, i32, i32) {
    %c0_i32 = arith.constant 0 : i32
    %c0_i32_0 = arith.constant 0 : i32
    return %arg0, %c0_i32, %arg1 : i32, i32, i32
  }
}

</mosaic_0001>

<llo_original>
// kernel: frescat_area_v2.2
$region0: #{frescat_area_v2.2}
  #allocation0 [shape = 'u32[]', space=smem, size = 0x4, offset = 0x4, fixed_abs, tag = 'smem constant byte address 0x4 - core index']
  #allocation1 [shape = 'u32[144,128]{1,0:T(1,128)}', space=vmem, size = 0x12000, scoped, tag = 'internal scratch']
  %s0 = inlined_call_operand.vmem [shape: f32[2,8,256], index: 0, kind: input, shape index: {}]
  %s1 = inlined_call_operand.vmem [shape: f32[8,8], index: 1, kind: input, shape index: {}]
  %s2 = inlined_call_operand.vmem [shape: f32[8,1], index: 2, kind: input, shape index: {}]
  %s3 = inlined_call_operand.vmem [shape: f32[8,8], index: 3, kind: input, shape index: {}]
  %s4 = inlined_call_operand.vmem [shape: f32[8,1], index: 4, kind: input, shape index: {}]
  %s5 = inlined_call_operand.vmem [shape: f32[2,4,256], index: 5, kind: output, shape index: {0}]
  %s6 = inlined_call_operand.vmem [shape: f32[2,4,256], index: 6, kind: output, shape index: {1}]
  %7 = xla_tuple %s5, %s6
  %s8 = sld [smem:[#allocation0]]
  $region61: #{frescat_area_v2.2} parent=0
    _
  %s10 = ssub.s32 1, %s8
  %s11 = scalar_select 0, %s10, %s8
  loop: start=0, step=1, limit=4
  $region2: #{frescat_area_v2.2} parent=0 // loop_pre_header
    _
  $region3: #{frescat_area_v2.2} parent=0 // loop_header
    %s13 = sphi 0, %s17
    %p14 = scmp.ge.s32.totalorder %s13, 4
    %s20 = sphi 0, %s32
    %s21 = sphi 0, %s28
    %s22 = sphi 0, %s20
    %s23 = sphi 0, %s21
    %s24 = sphi 0, %s22
    %s25 = sphi 0, %s23
    %s37 = sphi 0, %s39
    %s40 = sphi 0, %s37
    %s41 = sphi 0, %s40
    %s57 = sphi 0, %s41
    %s61 = sphi 0, %s61
    %s63 = sphi 0, %s61
    %s64 = sphi 0, %s63
    %s78 = sphi 0, %s64
    %s82 = sphi 0, %s82
    %s84 = sphi 0, %s82
    %s85 = sphi 0, %s84
    %s99 = sphi 0, %s85
    %s103 = sphi 0, %s103
    %s105 = sphi 0, %s103
    %s106 = sphi 0, %s105
    %s120 = sphi 0, %s106
    %s124 = sphi 0, %s124
    %s126 = sphi 0, %s124
    %s127 = sphi 0, %s126
    %s141 = sphi 0, %s127
    %s149 = sphi 0, %s151
    %s152 = sphi 0, %s149
    %s153 = sphi 0, %s152
    %s169 = sphi 0, %s153
    %s177 = sphi 0, %s179
    %s180 = sphi 0, %s177
    %s181 = sphi 0, %s180
    %s197 = sphi 0, %s181
  $region4: #{frescat_area_v2.2} parent=0 // loop_header_branch
    %16 = sbr.rel (%p14) target = $region8
  $region5: #{frescat_area_v2.2} parent=0 // loop_body
    %s18 = ssub.s32 %s13, 1
    %s19 = ssub.s32 %s13, 2
    %s26 = sadd.s32 1, %s21
    %p27 = scmp.ge.s32.totalorder %s26, 1
    %s28 = scalar_select %p27, 0, %s26
    %s29 = sadd.s32 1, %s20
    %s30 = scalar_select %p27, %s29, %s20
    %p31 = scmp.ge.s32.totalorder %s30, 2
    %s32 = scalar_select %p31, 0, %s30
    %s33 = ssub.s32 %s20, %s32
    %s34 = ssub.s32 %s21, %s28
    %s35 = sor.u32 %s33, %s34
    %p36 = scmp.eq.s32.totalorder %s35, 0
    %s38 = sadd.s32 %s37, 1
    %s39 = scalar_select %p36, %s37, %s38
    %p42 = pneg %p36
    %p43 = scmp.eq.s32.totalorder %s13, 1
    %p44 = por %p42, %p43
    %p45 = scmp.ne.s32.totalorder %s37, %s40
    %p46 = scmp.eq.s32.totalorder %s13, 0
    %p47 = por %p45, %p46
    %p48 = scmp.ne.s32.totalorder %s37, %s40
    %p49 = scmp.eq.s32.totalorder %s18, 1
    %p50 = por %p48, %p49
    %p51 = scmp.ne.s32.totalorder %s40, %s41
    %p52 = scmp.eq.s32.totalorder %s18, 0
    %p53 = por %p51, %p52
    %p54 = scmp.ne.s32.totalorder %s40, %s41
    %p55 = scmp.eq.s32.totalorder %s19, 1
    %p56 = por %p54, %p55
    %p58 = scmp.ne.s32.totalorder %s41, %s57
    %p59 = scmp.eq.s32.totalorder %s19, 0
    %p60 = por %p58, %p59
    %s62 = sadd.s32 %s61, 1
    %p65 = scmp.eq.s32.totalorder %s13, 1
    %p66 = scmp.ne.s32.totalorder %s61, %s63
    %p67 = scmp.eq.s32.totalorder %s13, 0
    %p68 = por %p66, %p67
    %p69 = scmp.ne.s32.totalorder %s61, %s63
    %p70 = scmp.eq.s32.totalorder %s18, 1
    %p71 = por %p69, %p70
    %p72 = scmp.ne.s32.totalorder %s63, %s64
    %p73 = scmp.eq.s32.totalorder %s18, 0
    %p74 = por %p72, %p73
    %p75 = scmp.ne.s32.totalorder %s63, %s64
    %p76 = scmp.eq.s32.totalorder %s19, 1
    %p77 = por %p75, %p76
    %p79 = scmp.ne.s32.totalorder %s64, %s78
    %p80 = scmp.eq.s32.totalorder %s19, 0
    %p81 = por %p79, %p80
    %s83 = sadd.s32 %s82, 1
    %p86 = scmp.eq.s32.totalorder %s13, 1
    %p87 = scmp.ne.s32.totalorder %s82, %s84
    %p88 = scmp.eq.s32.totalorder %s13, 0
    %p89 = por %p87, %p88
    %p90 = scmp.ne.s32.totalorder %s82, %s84
    %p91 = scmp.eq.s32.totalorder %s18, 1
    %p92 = por %p90, %p91
    %p93 = scmp.ne.s32.totalorder %s84, %s85
    %p94 = scmp.eq.s32.totalorder %s18, 0
    %p95 = por %p93, %p94
    %p96 = scmp.ne.s32.totalorder %s84, %s85
    %p97 = scmp.eq.s32.totalorder %s19, 1
    %p98 = por %p96, %p97
    %p100 = scmp.ne.s32.totalorder %s85, %s99
    %p101 = scmp.eq.s32.totalorder %s19, 0
    %p102 = por %p100, %p101
    %s104 = sadd.s32 %s103, 1
    %p107 = scmp.eq.s32.totalorder %s13, 1
    %p108 = scmp.ne.s32.totalorder %s103, %s105
    %p109 = scmp.eq.s32.totalorder %s13, 0
    %p110 = por %p108, %p109
    %p111 = scmp.ne.s32.totalorder %s103, %s105
    %p112 = scmp.eq.s32.totalorder %s18, 1
    %p113 = por %p111, %p112
    %p114 = scmp.ne.s32.totalorder %s105, %s106
    %p115 = scmp.eq.s32.totalorder %s18, 0
    %p116 = por %p114, %p115
    %p117 = scmp.ne.s32.totalorder %s105, %s106
    %p118 = scmp.eq.s32.totalorder %s19, 1
    %p119 = por %p117, %p118
    %p121 = scmp.ne.s32.totalorder %s106, %s120
    %p122 = scmp.eq.s32.totalorder %s19, 0
    %p123 = por %p121, %p122
    %s125 = sadd.s32 %s124, 1
    %p128 = scmp.eq.s32.totalorder %s13, 1
    %p129 = scmp.ne.s32.totalorder %s124, %s126
    %p130 = scmp.eq.s32.totalorder %s13, 0
    %p131 = por %p129, %p130
    %p132 = scmp.ne.s32.totalorder %s124, %s126
    %p133 = scmp.eq.s32.totalorder %s18, 1
    %p134 = por %p132, %p133
    %p135 = scmp.ne.s32.totalorder %s126, %s127
    %p136 = scmp.eq.s32.totalorder %s18, 0
    %p137 = por %p135, %p136
    %p138 = scmp.ne.s32.totalorder %s126, %s127
    %p139 = scmp.eq.s32.totalorder %s19, 1
    %p140 = por %p138, %p139
    %p142 = scmp.ne.s32.totalorder %s127, %s141
    %p143 = scmp.eq.s32.totalorder %s19, 0
    %p144 = por %p142, %p143
    %s145 = ssub.s32 %s20, %s32
    %s146 = ssub.s32 %s21, %s28
    %s147 = sor.u32 %s145, %s146
    %p148 = scmp.eq.s32.totalorder %s147, 0
    %s150 = sadd.s32 %s149, 1
    %s151 = scalar_select %p148, %s149, %s150
    %p154 = pneg %p148
    %p155 = scmp.eq.s32.totalorder %s13, 1
    %p156 = por %p154, %p155
    %p157 = scmp.ne.s32.totalorder %s149, %s152
    %p158 = scmp.eq.s32.totalorder %s13, 0
    %p159 = por %p157, %p158
    %p160 = scmp.ne.s32.totalorder %s149, %s152
    %p161 = scmp.eq.s32.totalorder %s18, 1
    %p162 = por %p160, %p161
    %p163 = scmp.ne.s32.totalorder %s152, %s153
    %p164 = scmp.eq.s32.totalorder %s18, 0
    %p165 = por %p163, %p164
    %p166 = scmp.ne.s32.totalorder %s152, %s153
    %p167 = scmp.eq.s32.totalorder %s19, 1
    %p168 = por %p166, %p167
    %p170 = scmp.ne.s32.totalorder %s153, %s169
    %p171 = scmp.eq.s32.totalorder %s19, 0
    %p172 = por %p170, %p171
    %s173 = ssub.s32 %s20, %s32
    %s174 = ssub.s32 %s21, %s28
    %s175 = sor.u32 %s173, %s174
    %p176 = scmp.eq.s32.totalorder %s175, 0
    %s178 = sadd.s32 %s177, 1
    %s179 = scalar_select %p176, %s177, %s178
    %p182 = pneg %p176
    %p183 = scmp.eq.s32.totalorder %s13, 1
    %p184 = por %p182, %p183
    %p185 = scmp.ne.s32.totalorder %s177, %s180
    %p186 = scmp.eq.s32.totalorder %s13, 0
    %p187 = por %p185, %p186
    %p188 = scmp.ne.s32.totalorder %s177, %s180
    %p189 = scmp.eq.s32.totalorder %s18, 1
    %p190 = por %p188, %p189
    %p191 = scmp.ne.s32.totalorder %s180, %s181
    %p192 = scmp.eq.s32.totalorder %s18, 0
    %p193 = por %p191, %p192
    %p194 = scmp.ne.s32.totalorder %s180, %s181
    %p195 = scmp.eq.s32.totalorder %s19, 1
    %p196 = por %p194, %p195
    %p198 = scmp.ne.s32.totalorder %s181, %s197
    %p199 = scmp.eq.s32.totalorder %s19, 0
    %p200 = por %p198, %p199
    %p201 = scmp.le.s32.totalorder 1, %s13
    %p202 = scmp.lt.s32.totalorder %s13, 3
    %p203 = pnand %p201, %p202
    %p204 = pneg %p203
    // Predicated region
    $region9: #{frescat_area_v2.2} parent=5 // pred_check
      _
    $region10: #{frescat_area_v2.2} parent=5 // pred_check_branch
      %206 = sbr.rel (%p203) target = $region12
    $region11: #{frescat_area_v2.2} parent=5 // pred_region
      %s207 = ssub.s32 %s13, 1
      // Predicated region
      $region13: #{frescat_area_v2.2} parent=11 // pred_check
        %p208 = pneg %p74
      $region14: #{frescat_area_v2.2} parent=11 // pred_check_branch
        %210 = sbr.rel (%p208) target = $region16
      $region15: #{frescat_area_v2.2} parent=11 // pred_region
        _
      $region16: #{frescat_area_v2.2} parent=11 // pred_fallthru
        _
      // Predicated region
      $region17: #{frescat_area_v2.2} parent=11 // pred_check
        %p211 = pneg %p95
      $region18: #{frescat_area_v2.2} parent=11 // pred_check_branch
        %213 = sbr.rel (%p211) target = $region20
      $region19: #{frescat_area_v2.2} parent=11 // pred_region
        _
      $region20: #{frescat_area_v2.2} parent=11 // pred_fallthru
        _
      // Predicated region
      $region21: #{frescat_area_v2.2} parent=11 // pred_check
        %p214 = pneg %p116
      $region22: #{frescat_area_v2.2} parent=11 // pred_check_branch
        %216 = sbr.rel (%p214) target = $region24
      $region23: #{frescat_area_v2.2} parent=11 // pred_region
        _
      $region24: #{frescat_area_v2.2} parent=11 // pred_fallthru
        _
      // Predicated region
      $region25: #{frescat_area_v2.2} parent=11 // pred_check
        %p217 = pneg %p137
      $region26: #{frescat_area_v2.2} parent=11 // pred_check_branch
        %219 = sbr.rel (%p217) target = $region28
      $region27: #{frescat_area_v2.2} parent=11 // pred_region
        _
      $region28: #{frescat_area_v2.2} parent=11 // pred_fallthru
        _
    $region12: #{frescat_area_v2.2} parent=5 // pred_fallthru
      _
    %p220 = scmp.lt.s32.totalorder %s13, 2
    // Predicated region
    $region29: #{frescat_area_v2.2} parent=5 // pred_check
      %p221 = pneg %p220
    $region30: #{frescat_area_v2.2} parent=5 // pred_check_branch
      %223 = sbr.rel (%p221) target = $region32
    $region31: #{frescat_area_v2.2} parent=5 // pred_region
      // Predicated region
      $region33: #{frescat_area_v2.2} parent=31 // pred_check
        %p224 = pneg %p47
      $region34: #{frescat_area_v2.2} parent=31 // pred_check_branch
        %226 = sbr.rel (%p224) target = $region36
      $region35: #{frescat_area_v2.2} parent=31 // pred_region
        %s227 = smul.u32 2, %s21
        %p228 = scmp.lt.s32.totalorder %s20, 1
        %s229 = scalar_select %p228, %s20, 1
        %p230 = scmp.lt.s32.totalorder %s227, 1
        %s231 = scalar_select %p230, %s227, 1
        %s232 = smul.addr %s229, 2
        %s233 = sadd.s32 %s231, %s232
        %s234 = smul.addr %s233, 8
        %s235 = scalar_lea.vmem %s0, %s234
        %s236 = smul.u32 2, %s21
      $region36: #{frescat_area_v2.2} parent=31 // pred_fallthru
        _
    $region32: #{frescat_area_v2.2} parent=5 // pred_fallthru
      _
    %p237 = scmp.le.s32.totalorder 1, %s13
    %p238 = scmp.lt.s32.totalorder %s13, 3
    %p239 = pnand %p237, %p238
    %p240 = pneg %p239
    // Predicated region
    $region37: #{frescat_area_v2.2} parent=5 // pred_check
      _
    $region38: #{frescat_area_v2.2} parent=5 // pred_check_branch
      %242 = sbr.rel (%p239) target = $region40
    $region39: #{frescat_area_v2.2} parent=5 // pred_region
      %s243 = ssub.s32 %s13, 1
      %s244 = smul.u32 2, %s23
      %p245 = scmp.lt.s32.totalorder %s22, 1
      %s246 = scalar_select %p245, %s22, 1
      %p247 = scmp.lt.s32.totalorder %s244, 1
      %s248 = scalar_select %p247, %s244, 1
      %s249 = smul.addr %s246, 2
      %s250 = sadd.s32 %s248, %s249
      %s251 = smul.addr %s250, 8
      %s252 = scalar_lea.vmem %s0, %s251
      %p253 = pneg %p53
      %p254 = pneg %p50
      %p255 = pneg %p74
      %p256 = pneg %p71
      %p257 = pneg %p95
      %p258 = pneg %p92
      %p259 = pneg %p116
      %p260 = pneg %p113
      %p261 = pneg %p137
      %p262 = pneg %p134
      %p263 = pneg %p165
      %p264 = pneg %p162
      %s265 = smul.u32 2, %s23
      %p266 = scmp.lt.s32.totalorder %s22, 1
      %s267 = scalar_select %p266, %s22, 1
      %p268 = scmp.lt.s32.totalorder %s265, 1
      %s269 = scalar_select %p268, %s265, 1
      %s270 = smul.addr %s267, 2
      %s271 = sadd.s32 %s269, %s270
      %s272 = smul.addr %s271, 4
      %s273 = scalar_lea.vmem %s5, %s272
      %p274 = pneg %p193
      %p275 = pneg %p190
      %s276 = smul.u32 2, %s23
      %p277 = scmp.lt.s32.totalorder %s22, 1
      %s278 = scalar_select %p277, %s22, 1
      %p279 = scmp.lt.s32.totalorder %s276, 1
      %s280 = scalar_select %p279, %s276, 1
      %s281 = smul.addr %s278, 2
      %s282 = sadd.s32 %s280, %s281
      %s283 = smul.addr %s282, 4
      %s284 = scalar_lea.vmem %s6, %s283
      %s285 = smul.u32 2, %s23
      %p286 = scmp.lt.s32.totalorder %s22, 1
      %s287 = scalar_select %p286, %s22, 1
      %p288 = scmp.lt.s32.totalorder %s285, 1
      %s289 = scalar_select %p288, %s285, 1
      %s290 = smul.addr %s287, 2
      %s291 = sadd.s32 %s289, %s290
      %s292 = smul.addr %s291, 8
      %s293 = scalar_lea.vmem %s0, %s292
      %s294 = smul.u32 2, %s23
      %s295 = smul.u32 2, %s23
      %p296 = scmp.lt.s32.totalorder %s22, 1
      %s297 = scalar_select %p296, %s22, 1
      %p298 = scmp.lt.s32.totalorder %s295, 1
      %s299 = scalar_select %p298, %s295, 1
      %s300 = smul.addr %s297, 2
      %s301 = sadd.s32 %s299, %s300
      %s302 = smul.addr %s301, 4
      %s303 = scalar_lea.vmem %s5, %s302
      %s304 = smul.u32 2, %s23
      %s305 = smul.u32 2, %s23
      %p306 = scmp.lt.s32.totalorder %s22, 1
      %s307 = scalar_select %p306, %s22, 1
      %p308 = scmp.lt.s32.totalorder %s305, 1
      %s309 = scalar_select %p308, %s305, 1
      %s310 = smul.addr %s307, 2
      %s311 = sadd.s32 %s309, %s310
      %s312 = smul.addr %s311, 4
      %s313 = scalar_lea.vmem %s6, %s312
      %s314 = smul.u32 2, %s23
      %v315 = vld [vmem:[%s293] sm:$0xff]
      %v316 = vld [vmem:[%s293 + $0x8] sm:$0xff]
      %v317 = vld [vmem:[%s1] sm:$0xff]
      %v318 = vld [vmem:[%s2] sm:$0xff]
      %320 = vset.pattern.permute.xlu0 0
      %321 = vperm.xlu0 %320, %v318
      %v322 = vpop.permute.xlu0 %321
      %vm324 = vcmask 64512
      %v326 = vsel %vm324, %v317, 0
      %v328 = vand.u32 %v316, 4294901760
      %329 = vmatprep.subr.mxu0 %v328
      %v330 = vand.u32 %v315, 4294901760
      %331 = vmatpush1.msra.mxu0 %v330
      %332 = vmatprep.subr.mxu0 0.0
      %333 = vmatpush1.msra.mxu0 0.0
      %334 = vmatprep.subr.mxu0 0.0
      %335 = vmatpush1.msra.mxu0 0.0
      %336 = vmatprep.subr.mxu0 0.0
      %337 = vmatpush1.msra.mxu0 0.0
      %338 = vmatprep.subr.mxu0 0.0
      %339 = vmatpush1.msra.mxu0 0.0
      %340 = vmatprep.subr.mxu0 0.0
      %341 = vmatpush1.msra.mxu0 0.0
      %342 = vmatprep.subr.mxu0 0.0
      %343 = vmatpush1.msra.mxu0 0.0
      %344 = vmatprep.subr.mxu0 0.0
      %345 = vmatpush1.msra.mxu0 0.0
      %346 = vmatprep.subr.mxu0 0.0
      %347 = vmatpush1.msra.mxu0 0.0
      %348 = vmatprep.subr.mxu0 0.0
      %349 = vmatpush1.msra.mxu0 0.0
      %350 = vmatprep.subr.mxu0 0.0
      %351 = vmatpush1.msra.mxu0 0.0
      %352 = vmatprep.subr.mxu0 0.0
      %353 = vmatpush1.msra.mxu0 0.0
      %354 = vmatprep.subr.mxu0 0.0
      %355 = vmatpush1.msra.mxu0 0.0
      %356 = vmatprep.subr.mxu0 0.0
      %357 = vmatpush1.msra.mxu0 0.0
      %358 = vmatprep.subr.mxu0 0.0
      %359 = vmatpush1.msra.mxu0 0.0
      %360 = vmatprep.subr.mxu0 0.0
      %361 = vmatpush1.msra.mxu0 0.0
      %362 = vmatprep.subr.mxu0 0.0
      %363 = vmatpush1.msra.mxu0 0.0
      %364 = vmatprep.subr.mxu0 0.0
      %365 = vmatpush1.msra.mxu0 0.0
      %366 = vmatprep.subr.mxu0 0.0
      %367 = vmatpush1.msra.mxu0 0.0
      %368 = vmatprep.subr.mxu0 0.0
      %369 = vmatpush1.msra.mxu0 0.0
      %370 = vmatprep.subr.mxu0 0.0
      %371 = vmatpush1.msra.mxu0 0.0
      %372 = vmatprep.subr.mxu0 0.0
      %373 = vmatpush1.msra.mxu0 0.0
      %374 = vmatprep.subr.mxu0 0.0
      %375 = vmatpush1.msra.mxu0 0.0
      %376 = vmatprep.subr.mxu0 0.0
      %377 = vmatpush1.msra.mxu0 0.0
      %378 = vmatprep.subr.mxu0 0.0
      %379 = vmatpush1.msra.mxu0 0.0
      %380 = vmatprep.subr.mxu0 0.0
      %381 = vmatpush1.msra.mxu0 0.0
      %382 = vmatprep.subr.mxu0 0.0
      %383 = vmatpush1.msra.mxu0 0.0
      %384 = vmatprep.subr.mxu0 0.0
      %385 = vmatpush1.msra.mxu0 0.0
      %386 = vmatprep.subr.mxu0 0.0
      %387 = vmatpush1.msra.mxu0 0.0
      %388 = vmatprep.subr.mxu0 0.0
      %389 = vmatpush1.msra.mxu0 0.0
      %390 = vmatprep.subr.mxu0 0.0
      %391 = vmatpush1.msra.mxu0 0.0
      %392 = vmatprep.subr.mxu0 0.0
      %393 = vmatpush1.msra.mxu0 0.0
      %394 = vmatprep.mubr.f32.mxu0 0.0
      %v395 = vand.u32 %v326, 4294901760
      %v396 = vsub.f32 %v326, %v395
      %v397 = vand.u32 %v396, 4294901760
      %v398 = vsub.f32 %v396, %v397
      %v399 = vand.u32 %v398, 4294901760
      %400 = vmatmul.mubr.f32.gmra.mrb[0].mxu0 %v399
      %v401 = vpop.f32.mrb[0].mxu0
      %v402 = vadd.f32 %v322, %v401
      %v403 = vpop.f32.mrb[0].mxu0
      %v404 = vadd.f32 %v322, %v403
      %405 = vdwg.mxu0
      %v406 = vand.u32 %v316, 4294901760
      %v407 = vsub.f32 %v316, %v406
      %v408 = vand.u32 %v407, 4294901760
      %v409 = vsub.f32 %v407, %v408
      %v410 = vand.u32 %v409, 4294901760
      %411 = vmatprep.subr.mxu0 %v410
      %v412 = vand.u32 %v315, 4294901760
      %v413 = vsub.f32 %v315, %v412
      %v414 = vand.u32 %v413, 4294901760
      %v415 = vsub.f32 %v413, %v414
      %v416 = vand.u32 %v415, 4294901760
      %417 = vmatpush1.msra.mxu0 %v416
      %418 = vmatprep.subr.mxu0 0.0
      %419 = vmatpush1.msra.mxu0 0.0
      %420 = vmatprep.subr.mxu0 0.0
      %421 = vmatpush1.msra.mxu0 0.0
      %422 = vmatprep.subr.mxu0 0.0
      %423 = vmatpush1.msra.mxu0 0.0
      %424 = vmatprep.subr.mxu0 0.0
      %425 = vmatpush1.msra.mxu0 0.0
      %426 = vmatprep.subr.mxu0 0.0
      %427 = vmatpush1.msra.mxu0 0.0
      %428 = vmatprep.subr.mxu0 0.0
      %429 = vmatpush1.msra.mxu0 0.0
      %430 = vmatprep.subr.mxu0 0.0
      %431 = vmatpush1.msra.mxu0 0.0
      %432 = vmatprep.subr.mxu0 0.0
      %433 = vmatpush1.msra.mxu0 0.0
      %434 = vmatprep.subr.mxu0 0.0
      %435 = vmatpush1.msra.mxu0 0.0
      %436 = vmatprep.subr.mxu0 0.0
      %437 = vmatpush1.msra.mxu0 0.0
      %438 = vmatprep.subr.mxu0 0.0
      %439 = vmatpush1.msra.mxu0 0.0
      %440 = vmatprep.subr.mxu0 0.0
      %441 = vmatpush1.msra.mxu0 0.0
      %442 = vmatprep.subr.mxu0 0.0
      %443 = vmatpush1.msra.mxu0 0.0
      %444 = vmatprep.subr.mxu0 0.0
      %445 = vmatpush1.msra.mxu0 0.0
      %446 = vmatprep.subr.mxu0 0.0
      %447 = vmatpush1.msra.mxu0 0.0
      %448 = vmatprep.subr.mxu0 0.0
      %449 = vmatpush1.msra.mxu0 0.0
      %450 = vmatprep.subr.mxu0 0.0
      %451 = vmatpush1.msra.mxu0 0.0
      %452 = vmatprep.subr.mxu0 0.0
      %453 = vmatpush1.msra.mxu0 0.0
      %454 = vmatprep.subr.mxu0 0.0
      %455 = vmatpush1.msra.mxu0 0.0
      %456 = vmatprep.subr.mxu0 0.0
      %457 = vmatpush1.msra.mxu0 0.0
      %458 = vmatprep.subr.mxu0 0.0
      %459 = vmatpush1.msra.mxu0 0.0
      %460 = vmatprep.subr.mxu0 0.0
      %461 = vmatpush1.msra.mxu0 0.0
      %462 = vmatprep.subr.mxu0 0.0
      %463 = vmatpush1.msra.mxu0 0.0
      %464 = vmatprep.subr.mxu0 0.0
      %465 = vmatpush1.msra.mxu0 0.0
      %466 = vmatprep.subr.mxu0 0.0
      %467 = vmatpush1.msra.mxu0 0.0
      %468 = vmatprep.subr.mxu0 0.0
      %469 = vmatpush1.msra.mxu0 0.0
      %470 = vmatprep.subr.mxu0 0.0
      %471 = vmatpush1.msra.mxu0 0.0
      %472 = vmatprep.subr.mxu0 0.0
      %473 = vmatpush1.msra.mxu0 0.0
      %474 = vmatprep.subr.mxu0 0.0
      %475 = vmatpush1.msra.mxu0 0.0
      %476 = vmatprep.subr.mxu0 0.0
      %477 = vmatpush1.msra.mxu0 0.0
      %478 = vmatprep.subr.mxu0 0.0
      %479 = vmatpush1.msra.mxu0 0.0
      %480 = vmatprep.mubr.f32.mxu0 0.0
      %v481 = vand.u32 %v326, 4294901760
      %482 = vmatmul.mubr.f32.gmra.mrb[0].mxu0 %v481
      %v483 = vpop.f32.mrb[0].mxu0
      %v484 = vadd.f32 %v402, %v483
      %v485 = vpop.f32.mrb[0].mxu0
      %v486 = vadd.f32 %v404, %v485
      %487 = vdwg.mxu0
      %v488 = vand.u32 %v316, 4294901760
      %v489 = vsub.f32 %v316, %v488
      %490 = vmatprep.subr.mxu0 %v489
      %v491 = vand.u32 %v315, 4294901760
      %v492 = vsub.f32 %v315, %v491
      %493 = vmatpush1.msra.mxu0 %v492
      %494 = vmatprep.subr.mxu0 0.0
      %495 = vmatpush1.msra.mxu0 0.0
      %496 = vmatprep.subr.mxu0 0.0
      %497 = vmatpush1.msra.mxu0 0.0
      %498 = vmatprep.subr.mxu0 0.0
      %499 = vmatpush1.msra.mxu0 0.0
      %500 = vmatprep.subr.mxu0 0.0
      %501 = vmatpush1.msra.mxu0 0.0
      %502 = vmatprep.subr.mxu0 0.0
      %503 = vmatpush1.msra.mxu0 0.0
      %504 = vmatprep.subr.mxu0 0.0
      %505 = vmatpush1.msra.mxu0 0.0
      %506 = vmatprep.subr.mxu0 0.0
      %507 = vmatpush1.msra.mxu0 0.0
      %508 = vmatprep.subr.mxu0 0.0
      %509 = vmatpush1.msra.mxu0 0.0
      %510 = vmatprep.subr.mxu0 0.0
      %511 = vmatpush1.msra.mxu0 0.0
      %512 = vmatprep.subr.mxu0 0.0
      %513 = vmatpush1.msra.mxu0 0.0
      %514 = vmatprep.subr.mxu0 0.0
      %515 = vmatpush1.msra.mxu0 0.0
      %516 = vmatprep.subr.mxu0 0.0
      %517 = vmatpush1.msra.mxu0 0.0
      %518 = vmatprep.subr.mxu0 0.0
      %519 = vmatpush1.msra.mxu0 0.0
      %520 = vmatprep.subr.mxu0 0.0
      %521 = vmatpush1.msra.mxu0 0.0
      %522 = vmatprep.subr.mxu0 0.0
      %523 = vmatpush1.msra.mxu0 0.0
      %524 = vmatprep.subr.mxu0 0.0
      %525 = vmatpush1.msra.mxu0 0.0
      %526 = vmatprep.subr.mxu0 0.0
      %527 = vmatpush1.msra.mxu0 0.0
      %528 = vmatprep.subr.mxu0 0.0
      %529 = vmatpush1.msra.mxu0 0.0
      %530 = vmatprep.subr.mxu0 0.0
      %531 = vmatpush1.msra.mxu0 0.0
      %532 = vmatprep.subr.mxu0 0.0
      %533 = vmatpush1.msra.mxu0 0.0
      %534 = vmatprep.subr.mxu0 0.0
      %535 = vmatpush1.msra.mxu0 0.0
      %536 = vmatprep.subr.mxu0 0.0
      %537 = vmatpush1.msra.mxu0 0.0
      %538 = vmatprep.subr.mxu0 0.0
      %539 = vmatpush1.msra.mxu0 0.0
      %540 = vmatprep.subr.mxu0 0.0
      %541 = vmatpush1.msra.mxu0 0.0
      %542 = vmatprep.subr.mxu0 0.0
      %543 = vmatpush1.msra.mxu0 0.0
      %544 = vmatprep.subr.mxu0 0.0
      %545 = vmatpush1.msra.mxu0 0.0
      %546 = vmatprep.subr.mxu0 0.0
      %547 = vmatpush1.msra.mxu0 0.0
      %548 = vmatprep.subr.mxu0 0.0
      %549 = vmatpush1.msra.mxu0 0.0
      %550 = vmatprep.subr.mxu0 0.0
      %551 = vmatpush1.msra.mxu0 0.0
      %552 = vmatprep.subr.mxu0 0.0
      %553 = vmatpush1.msra.mxu0 0.0
      %554 = vmatprep.subr.mxu0 0.0
      %555 = vmatpush1.msra.mxu0 0.0
      %556 = vmatprep.mubr.f32.mxu0 0.0
      %v557 = vand.u32 %v326, 4294901760
      %v558 = vsub.f32 %v326, %v557
      %559 = vmatmul.mubr.f32.gmra.mrb[0].mxu0 %v558
      %v560 = vpop.f32.mrb[0].mxu0
      %v561 = vadd.f32 %v484, %v560
      %v562 = vpop.f32.mrb[0].mxu0
      %v563 = vadd.f32 %v486, %v562
      %564 = vdwg.mxu0
      %v565 = vand.u32 %v316, 4294901760
      %566 = vmatprep.subr.mxu0 %v565
      %v567 = vand.u32 %v315, 4294901760
      %568 = vmatpush1.msra.mxu0 %v567
      %569 = vmatprep.subr.mxu0 0.0
      %570 = vmatpush1.msra.mxu0 0.0
      %571 = vmatprep.subr.mxu0 0.0
      %572 = vmatpush1.msra.mxu0 0.0
      %573 = vmatprep.subr.mxu0 0.0
      %574 = vmatpush1.msra.mxu0 0.0
      %575 = vmatprep.subr.mxu0 0.0
      %576 = vmatpush1.msra.mxu0 0.0
      %577 = vmatprep.subr.mxu0 0.0
      %578 = vmatpush1.msra.mxu0 0.0
      %579 = vmatprep.subr.mxu0 0.0
      %580 = vmatpush1.msra.mxu0 0.0
      %581 = vmatprep.subr.mxu0 0.0
      %582 = vmatpush1.msra.mxu0 0.0
      %583 = vmatprep.subr.mxu0 0.0
      %584 = vmatpush1.msra.mxu0 0.0
      %585 = vmatprep.subr.mxu0 0.0
      %586 = vmatpush1.msra.mxu0 0.0
      %587 = vmatprep.subr.mxu0 0.0
      %588 = vmatpush1.msra.mxu0 0.0
      %589 = vmatprep.subr.mxu0 0.0
      %590 = vmatpush1.msra.mxu0 0.0
      %591 = vmatprep.subr.mxu0 0.0
      %592 = vmatpush1.msra.mxu0 0.0
      %593 = vmatprep.subr.mxu0 0.0
      %594 = vmatpush1.msra.mxu0 0.0
      %595 = vmatprep.subr.mxu0 0.0
      %596 = vmatpush1.msra.mxu0 0.0
      %597 = vmatprep.subr.mxu0 0.0
      %598 = vmatpush1.msra.mxu0 0.0
      %599 = vmatprep.subr.mxu0 0.0
      %600 = vmatpush1.msra.mxu0 0.0
      %601 = vmatprep.subr.mxu0 0.0
      %602 = vmatpush1.msra.mxu0 0.0
      %603 = vmatprep.subr.mxu0 0.0
      %604 = vmatpush1.msra.mxu0 0.0
      %605 = vmatprep.subr.mxu0 0.0
      %606 = vmatpush1.msra.mxu0 0.0
      %607 = vmatprep.subr.mxu0 0.0
      %608 = vmatpush1.msra.mxu0 0.0
      %609 = vmatprep.subr.mxu0 0.0
      %610 = vmatpush1.msra.mxu0 0.0
      %611 = vmatprep.subr.mxu0 0.0
      %612 = vmatpush1.msra.mxu0 0.0
      %613 = vmatprep.subr.mxu0 0.0
      %614 = vmatpush1.msra.mxu0 0.0
      %615 = vmatprep.subr.mxu0 0.0
      %616 = vmatpush1.msra.mxu0 0.0
      %617 = vmatprep.subr.mxu0 0.0
      %618 = vmatpush1.msra.mxu0 0.0
      %619 = vmatprep.subr.mxu0 0.0
      %620 = vmatpush1.msra.mxu0 0.0
      %621 = vmatprep.subr.mxu0 0.0
      %622 = vmatpush1.msra.mxu0 0.0
      %623 = vmatprep.subr.mxu0 0.0
      %624 = vmatpush1.msra.mxu0 0.0
      %625 = vmatprep.subr.mxu0 0.0
      %626 = vmatpush1.msra.mxu0 0.0
      %627 = vmatprep.subr.mxu0 0.0
      %628 = vmatpush1.msra.mxu0 0.0
      %629 = vmatprep.subr.mxu0 0.0
      %630 = vmatpush1.msra.mxu0 0.0
      %631 = vmatprep.mubr.f32.mxu0 0.0
      %v632 = vand.u32 %v326, 4294901760
      %v633 = vsub.f32 %v326, %v632
      %v634 = vand.u32 %v633, 4294901760
      %635 = vmatmul.mubr.f32.gmra.mrb[0].mxu0 %v634
      %v636 = vpop.f32.mrb[0].mxu0
      %v637 = vadd.f32 %v561, %v636
      %v638 = vpop.f32.mrb[0].mxu0
      %v639 = vadd.f32 %v563, %v638
      %640 = vdwg.mxu0
      %v641 = vand.u32 %v316, 4294901760
      %v642 = vsub.f32 %v316, %v641
      %v643 = vand.u32 %v642, 4294901760
      %644 = vmatprep.subr.mxu0 %v643
      %v645 = vand.u32 %v315, 4294901760
      %v646 = vsub.f32 %v315, %v645
      %v647 = vand.u32 %v646, 4294901760
      %648 = vmatpush1.msra.mxu0 %v647
      %649 = vmatprep.subr.mxu0 0.0
      %650 = vmatpush1.msra.mxu0 0.0
      %651 = vmatprep.subr.mxu0 0.0
      %652 = vmatpush1.msra.mxu0 0.0
      %653 = vmatprep.subr.mxu0 0.0
      %654 = vmatpush1.msra.mxu0 0.0
      %655 = vmatprep.subr.mxu0 0.0
      %656 = vmatpush1.msra.mxu0 0.0
      %657 = vmatprep.subr.mxu0 0.0
      %658 = vmatpush1.msra.mxu0 0.0
      %659 = vmatprep.subr.mxu0 0.0
      %660 = vmatpush1.msra.mxu0 0.0
      %661 = vmatprep.subr.mxu0 0.0
      %662 = vmatpush1.msra.mxu0 0.0
      %663 = vmatprep.subr.mxu0 0.0
      %664 = vmatpush1.msra.mxu0 0.0
      %665 = vmatprep.subr.mxu0 0.0
      %666 = vmatpush1.msra.mxu0 0.0
      %667 = vmatprep.subr.mxu0 0.0
      %668 = vmatpush1.msra.mxu0 0.0
      %669 = vmatprep.subr.mxu0 0.0
      %670 = vmatpush1.msra.mxu0 0.0
      %671 = vmatprep.subr.mxu0 0.0
      %672 = vmatpush1.msra.mxu0 0.0
      %673 = vmatprep.subr.mxu0 0.0
      %674 = vmatpush1.msra.mxu0 0.0
      %675 = vmatprep.subr.mxu0 0.0
      %676 = vmatpush1.msra.mxu0 0.0
      %677 = vmatprep.subr.mxu0 0.0
      %678 = vmatpush1.msra.mxu0 0.0
      %679 = vmatprep.subr.mxu0 0.0
      %680 = vmatpush1.msra.mxu0 0.0
      %681 = vmatprep.subr.mxu0 0.0
      %682 = vmatpush1.msra.mxu0 0.0
      %683 = vmatprep.subr.mxu0 0.0
      %684 = vmatpush1.msra.mxu0 0.0
      %685 = vmatprep.subr.mxu0 0.0
      %686 = vmatpush1.msra.mxu0 0.0
      %687 = vmatprep.subr.mxu0 0.0
      %688 = vmatpush1.msra.mxu0 0.0
      %689 = vmatprep.subr.mxu0 0.0
      %690 = vmatpush1.msra.mxu0 0.0
      %691 = vmatprep.subr.mxu0 0.0
      %692 = vmatpush1.msra.mxu0 0.0
      %693 = vmatprep.subr.mxu0 0.0
      %694 = vmatpush1.msra.mxu0 0.0
      %695 = vmatprep.subr.mxu0 0.0
      %696 = vmatpush1.msra.mxu0 0.0
      %697 = vmatprep.subr.mxu0 0.0
      %698 = vmatpush1.msra.mxu0 0.0
      %699 = vmatprep.subr.mxu0 0.0
      %700 = vmatpush1.msra.mxu0 0.0
      %701 = vmatprep.subr.mxu0 0.0
      %702 = vmatpush1.msra.mxu0 0.0
      %703 = vmatprep.subr.mxu0 0.0
      %704 = vmatpush1.msra.mxu0 0.0
      %705 = vmatprep.subr.mxu0 0.0
      %706 = vmatpush1.msra.mxu0 0.0
      %707 = vmatprep.subr.mxu0 0.0
      %708 = vmatpush1.msra.mxu0 0.0
      %709 = vmatprep.subr.mxu0 0.0
      %710 = vmatpush1.msra.mxu0 0.0
      %711 = vmatprep.mubr.f32.mxu0 0.0
      %v712 = vand.u32 %v326, 4294901760
      %713 = vmatmul.mubr.f32.gmra.mrb[0].mxu0 %v712
      %v714 = vpop.f32.mrb[0].mxu0
      %v715 = vadd.f32 %v637, %v714
      %v716 = vpop.f32.mrb[0].mxu0
      %v717 = vadd.f32 %v639, %v716
      %718 = vdwg.mxu0
      %v719 = vand.u32 %v316, 4294901760
      %720 = vmatprep.subr.mxu0 %v719
      %v721 = vand.u32 %v315, 4294901760
      %722 = vmatpush1.msra.mxu0 %v721
      %723 = vmatprep.subr.mxu0 0.0
      %724 = vmatpush1.msra.mxu0 0.0
      %725 = vmatprep.subr.mxu0 0.0
      %726 = vmatpush1.msra.mxu0 0.0
      %727 = vmatprep.subr.mxu0 0.0
      %728 = vmatpush1.msra.mxu0 0.0
      %729 = vmatprep.subr.mxu0 0.0
      %730 = vmatpush1.msra.mxu0 0.0
      %731 = vmatprep.subr.mxu0 0.0
      %732 = vmatpush1.msra.mxu0 0.0
      %733 = vmatprep.subr.mxu0 0.0
      %734 = vmatpush1.msra.mxu0 0.0
      %735 = vmatprep.subr.mxu0 0.0
      %736 = vmatpush1.msra.mxu0 0.0
      %737 = vmatprep.subr.mxu0 0.0
      %738 = vmatpush1.msra.mxu0 0.0
      %739 = vmatprep.subr.mxu0 0.0
      %740 = vmatpush1.msra.mxu0 0.0
      %741 = vmatprep.subr.mxu0 0.0
      %742 = vmatpush1.msra.mxu0 0.0
      %743 = vmatprep.subr.mxu0 0.0
      %744 = vmatpush1.msra.mxu0 0.0
      %745 = vmatprep.subr.mxu0 0.0
      %746 = vmatpush1.msra.mxu0 0.0
      %747 = vmatprep.subr.mxu0 0.0
      %748 = vmatpush1.msra.mxu0 0.0
      %749 = vmatprep.subr.mxu0 0.0
      %750 = vmatpush1.msra.mxu0 0.0
      %751 = vmatprep.subr.mxu0 0.0
      %752 = vmatpush1.msra.mxu0 0.0
      %753 = vmatprep.subr.mxu0 0.0
      %754 = vmatpush1.msra.mxu0 0.0
      %755 = vmatprep.subr.mxu0 0.0
      %756 = vmatpush1.msra.mxu0 0.0
      %757 = vmatprep.subr.mxu0 0.0
      %758 = vmatpush1.msra.mxu0 0.0
      %759 = vmatprep.subr.mxu0 0.0
      %760 = vmatpush1.msra.mxu0 0.0
      %761 = vmatprep.subr.mxu0 0.0
      %762 = vmatpush1.msra.mxu0 0.0
      %763 = vmatprep.subr.mxu0 0.0
      %764 = vmatpush1.msra.mxu0 0.0
      %765 = vmatprep.subr.mxu0 0.0
      %766 = vmatpush1.msra.mxu0 0.0
      %767 = vmatprep.subr.mxu0 0.0
      %768 = vmatpush1.msra.mxu0 0.0
      %769 = vmatprep.subr.mxu0 0.0
      %770 = vmatpush1.msra.mxu0 0.0
      %771 = vmatprep.subr.mxu0 0.0
      %772 = vmatpush1.msra.mxu0 0.0
      %773 = vmatprep.subr.mxu0 0.0
      %774 = vmatpush1.msra.mxu0 0.0
      %775 = vmatprep.subr.mxu0 0.0
      %776 = vmatpush1.msra.mxu0 0.0
      %777 = vmatprep.subr.mxu0 0.0
      %778 = vmatpush1.msra.mxu0 0.0
      %779 = vmatprep.subr.mxu0 0.0
      %780 = vmatpush1.msra.mxu0 0.0
      %781 = vmatprep.subr.mxu0 0.0
      %782 = vmatpush1.msra.mxu0 0.0
      %783 = vmatprep.subr.mxu0 0.0
      %784 = vmatpush1.msra.mxu0 0.0
      %785 = vmatprep.mubr.f32.mxu0 0.0
      %v786 = vand.u32 %v326, 4294901760
      %787 = vmatmul.mubr.f32.gmra.mrb[0].mxu0 %v786
      %v788 = vpop.f32.mrb[0].mxu0
      %v789 = vadd.f32 %v715, %v788
      %v790 = vpop.f32.mrb[0].mxu0
      %v791 = vadd.f32 %v717, %v790
      %792 = vdwg.mxu0
      %vm793 = vcmp.ge.f32.partialorder %v789, 0.0
      %vm794 = vcmp.ge.f32.partialorder %v791, 0.0
      %v795 = vmul.f32 %v789, 0.1
      %v796 = vmul.f32 %v791, 0.1
      %v797 = vsel %vm793, %v789, %v795
      %v798 = vsel %vm794, %v791, %v796
      %v799 = vld [vmem:[%s3] sm:$0xff]
      %v800 = vld [vmem:[%s4] sm:$0xff]
      %802 = vset.pattern.permute.xlu0 0
      %803 = vperm.xlu0 %802, %v800
      %v804 = vpop.permute.xlu0 %803
      %v807 = vsel %vm324, %v799, 0
      %v809 = vand.u32 %v798, 4294901760
      %810 = vmatprep.subr.mxu0 %v809
      %v811 = vand.u32 %v797, 4294901760
      %812 = vmatpush1.msra.mxu0 %v811
      %813 = vmatprep.subr.mxu0 0.0
      %814 = vmatpush1.msra.mxu0 0.0
      %815 = vmatprep.subr.mxu0 0.0
      %816 = vmatpush1.msra.mxu0 0.0
      %817 = vmatprep.subr.mxu0 0.0
      %818 = vmatpush1.msra.mxu0 0.0
      %819 = vmatprep.subr.mxu0 0.0
      %820 = vmatpush1.msra.mxu0 0.0
      %821 = vmatprep.subr.mxu0 0.0
      %822 = vmatpush1.msra.mxu0 0.0
      %823 = vmatprep.subr.mxu0 0.0
      %824 = vmatpush1.msra.mxu0 0.0
      %825 = vmatprep.subr.mxu0 0.0
      %826 = vmatpush1.msra.mxu0 0.0
      %827 = vmatprep.subr.mxu0 0.0
      %828 = vmatpush1.msra.mxu0 0.0
      %829 = vmatprep.subr.mxu0 0.0
      %830 = vmatpush1.msra.mxu0 0.0
      %831 = vmatprep.subr.mxu0 0.0
      %832 = vmatpush1.msra.mxu0 0.0
      %833 = vmatprep.subr.mxu0 0.0
      %834 = vmatpush1.msra.mxu0 0.0
      %835 = vmatprep.subr.mxu0 0.0
      %836 = vmatpush1.msra.mxu0 0.0
      %837 = vmatprep.subr.mxu0 0.0
      %838 = vmatpush1.msra.mxu0 0.0
      %839 = vmatprep.subr.mxu0 0.0
      %840 = vmatpush1.msra.mxu0 0.0
      %841 = vmatprep.subr.mxu0 0.0
      %842 = vmatpush1.msra.mxu0 0.0
      %843 = vmatprep.subr.mxu0 0.0
      %844 = vmatpush1.msra.mxu0 0.0
      %845 = vmatprep.subr.mxu0 0.0
      %846 = vmatpush1.msra.mxu0 0.0
      %847 = vmatprep.subr.mxu0 0.0
      %848 = vmatpush1.msra.mxu0 0.0
      %849 = vmatprep.subr.mxu0 0.0
      %850 = vmatpush1.msra.mxu0 0.0
      %851 = vmatprep.subr.mxu0 0.0
      %852 = vmatpush1.msra.mxu0 0.0
      %853 = vmatprep.subr.mxu0 0.0
      %854 = vmatpush1.msra.mxu0 0.0
      %855 = vmatprep.subr.mxu0 0.0
      %856 = vmatpush1.msra.mxu0 0.0
      %857 = vmatprep.subr.mxu0 0.0
      %858 = vmatpush1.msra.mxu0 0.0
      %859 = vmatprep.subr.mxu0 0.0
      %860 = vmatpush1.msra.mxu0 0.0
      %861 = vmatprep.subr.mxu0 0.0
      %862 = vmatpush1.msra.mxu0 0.0
      %863 = vmatprep.subr.mxu0 0.0
      %864 = vmatpush1.msra.mxu0 0.0
      %865 = vmatprep.subr.mxu0 0.0
      %866 = vmatpush1.msra.mxu0 0.0
      %867 = vmatprep.subr.mxu0 0.0
      %868 = vmatpush1.msra.mxu0 0.0
      %869 = vmatprep.subr.mxu0 0.0
      %870 = vmatpush1.msra.mxu0 0.0
      %871 = vmatprep.subr.mxu0 0.0
      %872 = vmatpush1.msra.mxu0 0.0
      %873 = vmatprep.subr.mxu0 0.0
      %874 = vmatpush1.msra.mxu0 0.0
      %875 = vmatprep.mubr.f32.mxu0 0.0
      %v876 = vand.u32 %v807, 4294901760
      %v877 = vsub.f32 %v807, %v876
      %v878 = vand.u32 %v877, 4294901760
      %v879 = vsub.f32 %v877, %v878
      %v880 = vand.u32 %v879, 4294901760
      %881 = vmatmul.mubr.f32.gmra.mrb[0].mxu0 %v880
      %v882 = vpop.f32.mrb[0].mxu0
      %v883 = vadd.f32 %v804, %v882
      %v884 = vpop.f32.mrb[0].mxu0
      %v885 = vadd.f32 %v804, %v884
      %886 = vdwg.mxu0
      %v887 = vand.u32 %v798, 4294901760
      %v888 = vsub.f32 %v798, %v887
      %v889 = vand.u32 %v888, 4294901760
      %v890 = vsub.f32 %v888, %v889
      %v891 = vand.u32 %v890, 4294901760
      %892 = vmatprep.subr.mxu0 %v891
      %v893 = vand.u32 %v797, 4294901760
      %v894 = vsub.f32 %v797, %v893
      %v895 = vand.u32 %v894, 4294901760
      %v896 = vsub.f32 %v894, %v895
      %v897 = vand.u32 %v896, 4294901760
      %898 = vmatpush1.msra.mxu0 %v897
      %899 = vmatprep.subr.mxu0 0.0
      %900 = vmatpush1.msra.mxu0 0.0
      %901 = vmatprep.subr.mxu0 0.0
      %902 = vmatpush1.msra.mxu0 0.0
      %903 = vmatprep.subr.mxu0 0.0
      %904 = vmatpush1.msra.mxu0 0.0
      %905 = vmatprep.subr.mxu0 0.0
      %906 = vmatpush1.msra.mxu0 0.0
      %907 = vmatprep.subr.mxu0 0.0
      %908 = vmatpush1.msra.mxu0 0.0
      %909 = vmatprep.subr.mxu0 0.0
      %910 = vmatpush1.msra.mxu0 0.0
      %911 = vmatprep.subr.mxu0 0.0
      %912 = vmatpush1.msra.mxu0 0.0
      %913 = vmatprep.subr.mxu0 0.0
      %914 = vmatpush1.msra.mxu0 0.0
      %915 = vmatprep.subr.mxu0 0.0
      %916 = vmatpush1.msra.mxu0 0.0
      %917 = vmatprep.subr.mxu0 0.0
      %918 = vmatpush1.msra.mxu0 0.0
      %919 = vmatprep.subr.mxu0 0.0
      %920 = vmatpush1.msra.mxu0 0.0
      %921 = vmatprep.subr.mxu0 0.0
      %922 = vmatpush1.msra.mxu0 0.0
      %923 = vmatprep.subr.mxu0 0.0
      %924 = vmatpush1.msra.mxu0 0.0
      %925 = vmatprep.subr.mxu0 0.0
      %926 = vmatpush1.msra.mxu0 0.0
      %927 = vmatprep.subr.mxu0 0.0
      %928 = vmatpush1.msra.mxu0 0.0
      %929 = vmatprep.subr.mxu0 0.0
      %930 = vmatpush1.msra.mxu0 0.0
      %931 = vmatprep.subr.mxu0 0.0
      %932 = vmatpush1.msra.mxu0 0.0
      %933 = vmatprep.subr.mxu0 0.0
      %934 = vmatpush1.msra.mxu0 0.0
      %935 = vmatprep.subr.mxu0 0.0
      %936 = vmatpush1.msra.mxu0 0.0
      %937 = vmatprep.subr.mxu0 0.0
      %938 = vmatpush1.msra.mxu0 0.0
      %939 = vmatprep.subr.mxu0 0.0
      %940 = vmatpush1.msra.mxu0 0.0
      %941 = vmatprep.subr.mxu0 0.0
      %942 = vmatpush1.msra.mxu0 0.0
      %943 = vmatprep.subr.mxu0 0.0
      %944 = vmatpush1.msra.mxu0 0.0
      %945 = vmatprep.subr.mxu0 0.0
      %946 = vmatpush1.msra.mxu0 0.0
      %947 = vmatprep.subr.mxu0 0.0
      %948 = vmatpush1.msra.mxu0 0.0
      %949 = vmatprep.subr.mxu0 0.0
      %950 = vmatpush1.msra.mxu0 0.0
      %951 = vmatprep.subr.mxu0 0.0
      %952 = vmatpush1.msra.mxu0 0.0
      %953 = vmatprep.subr.mxu0 0.0
      %954 = vmatpush1.msra.mxu0 0.0
      %955 = vmatprep.subr.mxu0 0.0
      %956 = vmatpush1.msra.mxu0 0.0
      %957 = vmatprep.subr.mxu0 0.0
      %958 = vmatpush1.msra.mxu0 0.0
      %959 = vmatprep.subr.mxu0 0.0
      %960 = vmatpush1.msra.mxu0 0.0
      %961 = vmatprep.mubr.f32.mxu0 0.0
      %v962 = vand.u32 %v807, 4294901760
      %963 = vmatmul.mubr.f32.gmra.mrb[0].mxu0 %v962
      %v964 = vpop.f32.mrb[0].mxu0
      %v965 = vadd.f32 %v883, %v964
      %v966 = vpop.f32.mrb[0].mxu0
      %v967 = vadd.f32 %v885, %v966
      %968 = vdwg.mxu0
      %v969 = vand.u32 %v798, 4294901760
      %v970 = vsub.f32 %v798, %v969
      %971 = vmatprep.subr.mxu0 %v970
      %v972 = vand.u32 %v797, 4294901760
      %v973 = vsub.f32 %v797, %v972
      %974 = vmatpush1.msra.mxu0 %v973
      %975 = vmatprep.subr.mxu0 0.0
      %976 = vmatpush1.msra.mxu0 0.0
      %977 = vmatprep.subr.mxu0 0.0
      %978 = vmatpush1.msra.mxu0 0.0
      %979 = vmatprep.subr.mxu0 0.0
      %980 = vmatpush1.msra.mxu0 0.0
      %981 = vmatprep.subr.mxu0 0.0
      %982 = vmatpush1.msra.mxu0 0.0
      %983 = vmatprep.subr.mxu0 0.0
      %984 = vmatpush1.msra.mxu0 0.0
      %985 = vmatprep.subr.mxu0 0.0
      %986 = vmatpush1.msra.mxu0 0.0
      %987 = vmatprep.subr.mxu0 0.0
      %988 = vmatpush1.msra.mxu0 0.0
      %989 = vmatprep.subr.mxu0 0.0
      %990 = vmatpush1.msra.mxu0 0.0
      %991 = vmatprep.subr.mxu0 0.0
      %992 = vmatpush1.msra.mxu0 0.0
      %993 = vmatprep.subr.mxu0 0.0
      %994 = vmatpush1.msra.mxu0 0.0
      %995 = vmatprep.subr.mxu0 0.0
      %996 = vmatpush1.msra.mxu0 0.0
      %997 = vmatprep.subr.mxu0 0.0
      %998 = vmatpush1.msra.mxu0 0.0
      %999 = vmatprep.subr.mxu0 0.0
      %1000 = vmatpush1.msra.mxu0 0.0
      %1001 = vmatprep.subr.mxu0 0.0
      %1002 = vmatpush1.msra.mxu0 0.0
      %1003 = vmatprep.subr.mxu0 0.0
      %1004 = vmatpush1.msra.mxu0 0.0
      %1005 = vmatprep.subr.mxu0 0.0
      %1006 = vmatpush1.msra.mxu0 0.0
      %1007 = vmatprep.subr.mxu0 0.0
      %1008 = vmatpush1.msra.mxu0 0.0
      %1009 = vmatprep.subr.mxu0 0.0
      %1010 = vmatpush1.msra.mxu0 0.0
      %1011 = vmatprep.subr.mxu0 0.0
      %1012 = vmatpush1.msra.mxu0 0.0
      %1013 = vmatprep.subr.mxu0 0.0
      %1014 = vmatpush1.msra.mxu0 0.0
      %1015 = vmatprep.subr.mxu0 0.0
      %1016 = vmatpush1.msra.mxu0 0.0
      %1017 = vmatprep.subr.mxu0 0.0
      %1018 = vmatpush1.msra.mxu0 0.0
      %1019 = vmatprep.subr.mxu0 0.0
      %1020 = vmatpush1.msra.mxu0 0.0
      %1021 = vmatprep.subr.mxu0 0.0
      %1022 = vmatpush1.msra.mxu0 0.0
      %1023 = vmatprep.subr.mxu0 0.0
      %1024 = vmatpush1.msra.mxu0 0.0
      %1025 = vmatprep.subr.mxu0 0.0
      %1026 = vmatpush1.msra.mxu0 0.0
      %1027 = vmatprep.subr.mxu0 0.0
      %1028 = vmatpush1.msra.mxu0 0.0
      %1029 = vmatprep.subr.mxu0 0.0
      %1030 = vmatpush1.msra.mxu0 0.0
      %1031 = vmatprep.subr.mxu0 0.0
      %1032 = vmatpush1.msra.mxu0 0.0
      %1033 = vmatprep.subr.mxu0 0.0
      %1034 = vmatpush1.msra.mxu0 0.0
      %1035 = vmatprep.subr.mxu0 0.0
      %1036 = vmatpush1.msra.mxu0 0.0
      %1037 = vmatprep.mubr.f32.mxu0 0.0
      %v1038 = vand.u32 %v807, 4294901760
      %v1039 = vsub.f32 %v807, %v1038
      %1040 = vmatmul.mubr.f32.gmra.mrb[0].mxu0 %v1039
      %v1041 = vpop.f32.mrb[0].mxu0
      %v1042 = vadd.f32 %v965, %v1041
      %v1043 = vpop.f32.mrb[0].mxu0
      %v1044 = vadd.f32 %v967, %v1043
      %1045 = vdwg.mxu0
      %v1046 = vand.u32 %v798, 4294901760
      %1047 = vmatprep.subr.mxu0 %v1046
      %v1048 = vand.u32 %v797, 4294901760
      %1049 = vmatpush1.msra.mxu0 %v1048
      %1050 = vmatprep.subr.mxu0 0.0
      %1051 = vmatpush1.msra.mxu0 0.0
      %1052 = vmatprep.subr.mxu0 0.0
      %1053 = vmatpush1.msra.mxu0 0.0
      %1054 = vmatprep.subr.mxu0 0.0
      %1055 = vmatpush1.msra.mxu0 0.0
      %1056 = vmatprep.subr.mxu0 0.0
      %1057 = vmatpush1.msra.mxu0 0.0
      %1058 = vmatprep.subr.mxu0 0.0
      %1059 = vmatpush1.msra.mxu0 0.0
      %1060 = vmatprep.subr.mxu0 0.0
      %1061 = vmatpush1.msra.mxu0 0.0
      %1062 = vmatprep.subr.mxu0 0.0
      %1063 = vmatpush1.msra.mxu0 0.0
      %1064 = vmatprep.subr.mxu0 0.0
      %1065 = vmatpush1.msra.mxu0 0.0
      %1066 = vmatprep.subr.mxu0 0.0
      %1067 = vmatpush1.msra.mxu0 0.0
      %1068 = vmatprep.subr.mxu0 0.0
      %1069 = vmatpush1.msra.mxu0 0.0
      %1070 = vmatprep.subr.mxu0 0.0
      %1071 = vmatpush1.msra.mxu0 0.0
      %1072 = vmatprep.subr.mxu0 0.0
      %1073 = vmatpush1.msra.mxu0 0.0
      %1074 = vmatprep.subr.mxu0 0.0
      %1075 = vmatpush1.msra.mxu0 0.0
      %1076 = vmatprep.subr.mxu0 0.0
      %1077 = vmatpush1.msra.mxu0 0.0
      %1078 = vmatprep.subr.mxu0 0.0
      %1079 = vmatpush1.msra.mxu0 0.0
      %1080 = vmatprep.subr.mxu0 0.0
      %1081 = vmatpush1.msra.mxu0 0.0
      %1082 = vmatprep.subr.mxu0 0.0
      %1083 = vmatpush1.msra.mxu0 0.0
      %1084 = vmatprep.subr.mxu0 0.0
      %1085 = vmatpush1.msra.mxu0 0.0
      %1086 = vmatprep.subr.mxu0 0.0
      %1087 = vmatpush1.msra.mxu0 0.0
      %1088 = vmatprep.subr.mxu0 0.0
      %1089 = vmatpush1.msra.mxu0 0.0
      %1090 = vmatprep.subr.mxu0 0.0
      %1091 = vmatpush1.msra.mxu0 0.0
      %1092 = vmatprep.subr.mxu0 0.0
      %1093 = vmatpush1.msra.mxu0 0.0
      %1094 = vmatprep.subr.mxu0 0.0
      %1095 = vmatpush1.msra.mxu0 0.0
      %1096 = vmatprep.subr.mxu0 0.0
      %1097 = vmatpush1.msra.mxu0 0.0
      %1098 = vmatprep.subr.mxu0 0.0
      %1099 = vmatpush1.msra.mxu0 0.0
      %1100 = vmatprep.subr.mxu0 0.0
      %1101 = vmatpush1.msra.mxu0 0.0
      %1102 = vmatprep.subr.mxu0 0.0
      %1103 = vmatpush1.msra.mxu0 0.0
      %1104 = vmatprep.subr.mxu0 0.0
      %1105 = vmatpush1.msra.mxu0 0.0
      %1106 = vmatprep.subr.mxu0 0.0
      %1107 = vmatpush1.msra.mxu0 0.0
      %1108 = vmatprep.subr.mxu0 0.0
      %1109 = vmatpush1.msra.mxu0 0.0
      %1110 = vmatprep.subr.mxu0 0.0
      %1111 = vmatpush1.msra.mxu0 0.0
      %1112 = vmatprep.mubr.f32.mxu0 0.0
      %v1113 = vand.u32 %v807, 4294901760
      %v1114 = vsub.f32 %v807, %v1113
      %v1115 = vand.u32 %v1114, 4294901760
      %1116 = vmatmul.mubr.f32.gmra.mrb[0].mxu0 %v1115
      %v1117 = vpop.f32.mrb[0].mxu0
      %v1118 = vadd.f32 %v1042, %v1117
      %v1119 = vpop.f32.mrb[0].mxu0
      %v1120 = vadd.f32 %v1044, %v1119
      %1121 = vdwg.mxu0
      %v1122 = vand.u32 %v798, 4294901760
      %v1123 = vsub.f32 %v798, %v1122
      %v1124 = vand.u32 %v1123, 4294901760
      %1125 = vmatprep.subr.mxu0 %v1124
      %v1126 = vand.u32 %v797, 4294901760
      %v1127 = vsub.f32 %v797, %v1126
      %v1128 = vand.u32 %v1127, 4294901760
      %1129 = vmatpush1.msra.mxu0 %v1128
      %1130 = vmatprep.subr.mxu0 0.0
      %1131 = vmatpush1.msra.mxu0 0.0
      %1132 = vmatprep.subr.mxu0 0.0
      %1133 = vmatpush1.msra.mxu0 0.0
      %1134 = vmatprep.subr.mxu0 0.0
      %1135 = vmatpush1.msra.mxu0 0.0
      %1136 = vmatprep.subr.mxu0 0.0
      %1137 = vmatpush1.msra.mxu0 0.0
      %1138 = vmatprep.subr.mxu0 0.0
      %1139 = vmatpush1.msra.mxu0 0.0
      %1140 = vmatprep.subr.mxu0 0.0
      %1141 = vmatpush1.msra.mxu0 0.0
      %1142 = vmatprep.subr.mxu0 0.0
      %1143 = vmatpush1.msra.mxu0 0.0
      %1144 = vmatprep.subr.mxu0 0.0
      %1145 = vmatpush1.msra.mxu0 0.0
      %1146 = vmatprep.subr.mxu0 0.0
      %1147 = vmatpush1.msra.mxu0 0.0
      %1148 = vmatprep.subr.mxu0 0.0
      %1149 = vmatpush1.msra.mxu0 0.0
      %1150 = vmatprep.subr.mxu0 0.0
      %1151 = vmatpush1.msra.mxu0 0.0
      %1152 = vmatprep.subr.mxu0 0.0
      %1153 = vmatpush1.msra.mxu0 0.0
      %1154 = vmatprep.subr.mxu0 0.0
      %1155 = vmatpush1.msra.mxu0 0.0
      %1156 = vmatprep.subr.mxu0 0.0
      %1157 = vmatpush1.msra.mxu0 0.0
      %1158 = vmatprep.subr.mxu0 0.0
      %1159 = vmatpush1.msra.mxu0 0.0
      %1160 = vmatprep.subr.mxu0 0.0
      %1161 = vmatpush1.msra.mxu0 0.0
      %1162 = vmatprep.subr.mxu0 0.0
      %1163 = vmatpush1.msra.mxu0 0.0
      %1164 = vmatprep.subr.mxu0 0.0
      %1165 = vmatpush1.msra.mxu0 0.0
      %1166 = vmatprep.subr.mxu0 0.0
      %1167 = vmatpush1.msra.mxu0 0.0
      %1168 = vmatprep.subr.mxu0 0.0
      %1169 = vmatpush1.msra.mxu0 0.0
      %1170 = vmatprep.subr.mxu0 0.0
      %1171 = vmatpush1.msra.mxu0 0.0
      %1172 = vmatprep.subr.mxu0 0.0
      %1173 = vmatpush1.msra.mxu0 0.0
      %1174 = vmatprep.subr.mxu0 0.0
      %1175 = vmatpush1.msra.mxu0 0.0
      %1176 = vmatprep.subr.mxu0 0.0
      %1177 = vmatpush1.msra.mxu0 0.0
      %1178 = vmatprep.subr.mxu0 0.0
      %1179 = vmatpush1.msra.mxu0 0.0
      %1180 = vmatprep.subr.mxu0 0.0
      %1181 = vmatpush1.msra.mxu0 0.0
      %1182 = vmatprep.subr.mxu0 0.0
      %1183 = vmatpush1.msra.mxu0 0.0
      %1184 = vmatprep.subr.mxu0 0.0
      %1185 = vmatpush1.msra.mxu0 0.0
      %1186 = vmatprep.subr.mxu0 0.0
      %1187 = vmatpush1.msra.mxu0 0.0
      %1188 = vmatprep.subr.mxu0 0.0
      %1189 = vmatpush1.msra.mxu0 0.0
      %1190 = vmatprep.subr.mxu0 0.0
      %1191 = vmatpush1.msra.mxu0 0.0
      %1192 = vmatprep.mubr.f32.mxu0 0.0
      %v1193 = vand.u32 %v807, 4294901760
      %1194 = vmatmul.mubr.f32.gmra.mrb[0].mxu0 %v1193
      %v1195 = vpop.f32.mrb[0].mxu0
      %v1196 = vadd.f32 %v1118, %v1195
      %v1197 = vpop.f32.mrb[0].mxu0
      %v1198 = vadd.f32 %v1120, %v1197
      %1199 = vdwg.mxu0
      %v1200 = vand.u32 %v798, 4294901760
      %1201 = vmatprep.subr.mxu0 %v1200
      %v1202 = vand.u32 %v797, 4294901760
      %1203 = vmatpush1.msra.mxu0 %v1202
      %1204 = vmatprep.subr.mxu0 0.0
      %1205 = vmatpush1.msra.mxu0 0.0
      %1206 = vmatprep.subr.mxu0 0.0
      %1207 = vmatpush1.msra.mxu0 0.0
      %1208 = vmatprep.subr.mxu0 0.0
      %1209 = vmatpush1.msra.mxu0 0.0
      %1210 = vmatprep.subr.mxu0 0.0
      %1211 = vmatpush1.msra.mxu0 0.0
      %1212 = vmatprep.subr.mxu0 0.0
      %1213 = vmatpush1.msra.mxu0 0.0
      %1214 = vmatprep.subr.mxu0 0.0
      %1215 = vmatpush1.msra.mxu0 0.0
      %1216 = vmatprep.subr.mxu0 0.0
      %1217 = vmatpush1.msra.mxu0 0.0
      %1218 = vmatprep.subr.mxu0 0.0
      %1219 = vmatpush1.msra.mxu0 0.0
      %1220 = vmatprep.subr.mxu0 0.0
      %1221 = vmatpush1.msra.mxu0 0.0
      %1222 = vmatprep.subr.mxu0 0.0
      %1223 = vmatpush1.msra.mxu0 0.0
      %1224 = vmatprep.subr.mxu0 0.0
      %1225 = vmatpush1.msra.mxu0 0.0
      %1226 = vmatprep.subr.mxu0 0.0
      %1227 = vmatpush1.msra.mxu0 0.0
      %1228 = vmatprep.subr.mxu0 0.0
      %1229 = vmatpush1.msra.mxu0 0.0
      %1230 = vmatprep.subr.mxu0 0.0
      %1231 = vmatpush1.msra.mxu0 0.0
      %1232 = vmatprep.subr.mxu0 0.0
      %1233 = vmatpush1.msra.mxu0 0.0
      %1234 = vmatprep.subr.mxu0 0.0
      %1235 = vmatpush1.msra.mxu0 0.0
      %1236 = vmatprep.subr.mxu0 0.0
      %1237 = vmatpush1.msra.mxu0 0.0
      %1238 = vmatprep.subr.mxu0 0.0
      %1239 = vmatpush1.msra.mxu0 0.0
      %1240 = vmatprep.subr.mxu0 0.0
      %1241 = vmatpush1.msra.mxu0 0.0
      %1242 = vmatprep.subr.mxu0 0.0
      %1243 = vmatpush1.msra.mxu0 0.0
      %1244 = vmatprep.subr.mxu0 0.0
      %1245 = vmatpush1.msra.mxu0 0.0
      %1246 = vmatprep.subr.mxu0 0.0
      %1247 = vmatpush1.msra.mxu0 0.0
      %1248 = vmatprep.subr.mxu0 0.0
      %1249 = vmatpush1.msra.mxu0 0.0
      %1250 = vmatprep.subr.mxu0 0.0
      %1251 = vmatpush1.msra.mxu0 0.0
      %1252 = vmatprep.subr.mxu0 0.0
      %1253 = vmatpush1.msra.mxu0 0.0
      %1254 = vmatprep.subr.mxu0 0.0
      %1255 = vmatpush1.msra.mxu0 0.0
      %1256 = vmatprep.subr.mxu0 0.0
      %1257 = vmatpush1.msra.mxu0 0.0
      %1258 = vmatprep.subr.mxu0 0.0
      %1259 = vmatpush1.msra.mxu0 0.0
      %1260 = vmatprep.subr.mxu0 0.0
      %1261 = vmatpush1.msra.mxu0 0.0
      %1262 = vmatprep.subr.mxu0 0.0
      %1263 = vmatpush1.msra.mxu0 0.0
      %1264 = vmatprep.subr.mxu0 0.0
      %1265 = vmatpush1.msra.mxu0 0.0
      %1266 = vmatprep.mubr.f32.mxu0 0.0
      %v1267 = vand.u32 %v807, 4294901760
      %1268 = vmatmul.mubr.f32.gmra.mrb[0].mxu0 %v1267
      %v1269 = vpop.f32.mrb[0].mxu0
      %v1270 = vadd.f32 %v1196, %v1269
      %v1271 = vpop.f32.mrb[0].mxu0
      %v1272 = vadd.f32 %v1198, %v1271
      %1273 = vdwg.mxu0
      %v1274 = vand.u32 2147483647, %v1270
      %vm1275 = vcmp.le.f32.partialorder %v1274, 0.7853982
      %vm1276 = vcmp.lt.s32.totalorder %v1270, 0
      %v1277 = vand.u32 %v1270, 2139095040
      %v1278 = vshrl.u32 %v1277, 23
      %v1279 = vsub.s32 %v1278, 127
      %v1280 = vand.u32 2147483647, %v1270
      %v1281 = vand.u32 %v1280, 8388607
      %v1282 = vor.u32 %v1281, 8388608
      %v1283 = vsub.s32 0, %v1282
      %v1284 = vadd.s32 %v1279, 1
      %vm1285 = vcmp.gt.s32.totalorder %v1284, 0
      %v1286 = vsel %vm1285, %v1284, 0
      %v1287 = vshrl.u32 %v1286, 5
      %v1288 = vand.u32 %v1286, 31
      %v1289 = vsub.s32 32, %v1288
      %v1290 = vshrl.u32 683565275, %v1289
      %v1291 = vshll.u32 683565275, %v1288
      %v1292 = vshrl.u32 2475754826, %v1289
      %v1293 = vor.u32 %v1291, %v1292
      %v1294 = vshll.u32 2475754826, %v1288
      %v1295 = vshrl.u32 2131351028, %v1289
      %v1296 = vor.u32 %v1294, %v1295
      %v1297 = vshll.u32 2131351028, %v1288
      %v1298 = vshrl.u32 2102212464, %v1289
      %v1299 = vor.u32 %v1297, %v1298
      %v1300 = vshll.u32 2102212464, %v1288
      %v1301 = vshrl.u32 920167782, %v1289
      %v1302 = vor.u32 %v1300, %v1301
      %v1303 = vshll.u32 920167782, %v1288
      %v1304 = vshrl.u32 1326507024, %v1289
      %v1305 = vor.u32 %v1303, %v1304
      %vm1306 = vcmp.lt.s32.totalorder %v1287, 1
      %vm1307 = vcmp.lt.s32.totalorder %v1287, 2
      %vm1308 = vcmp.lt.s32.totalorder %v1287, 3
      %vm1309 = vcmp.lt.s32.totalorder %v1287, 4
      %v1310 = vsel %vm1306, %v1290, %v1293
      %v1311 = vsel %vm1309, %v1299, 2102212464
      %v1312 = vsel %vm1308, %v1296, %v1311
      %v1313 = vsel %vm1307, %v1310, %v1312
      %v1314 = vsel %vm1306, %v1293, %v1296
      %v1315 = vsel %vm1309, %v1302, 920167782
      %v1316 = vsel %vm1308, %v1299, %v1315
      %v1317 = vsel %vm1307, %v1314, %v1316
      %v1318 = vsel %vm1306, %v1296, %v1299
      %v1319 = vsel %vm1309, %v1305, 1326507024
      %v1320 = vsel %vm1308, %v1302, %v1319
      %v1321 = vsel %vm1307, %v1318, %v1320
      %v1322 = vshll.u32 %v1282, 8
      %v1323 = vmul.u32.u64.compose %v1322, %v1321
      %v1324 = vextract.low.u32 %v1323
      %v1325 = vextract.high.u32 %v1323
      %v1326 = vmul.u32.u64.compose %v1322, %v1317
      %v1327 = vextract.low.u32 %v1326
      %v1328 = vextract.high.u32 %v1326
      %v1329 = vmul.u32 %v1322, %v1313
      %v1330 = vadd.s32 %v1325, %v1327
      %vm1331 = vc.u32 %v1325, %v1327
      %v1332 = vadd.s32 %v1328, 1
      %v1333 = vsel %vm1331, %v1332, %v1328
      %v1334 = vadd.s32 %v1329, %v1333
      %v1335 = vadd.s32 %v1334, 536870912
      %v1336 = vshrl.u32 %v1335, 30
      %v1337 = vshll.u32 %v1336, 30
      %v1338 = vsub.s32 %v1334, %v1337
      %vm1339 = vcmp.lt.s32.totalorder %v1338, 0
      %v1340 = vsub.s32 0, %v1338
      %v1341 = vsel %vm1339, %v1340, %v1338
      %v1342 = vclz %v1341
      %v1343 = vsub.s32 %v1342, 2
      %vm1344 = vcmp.gt.s32.totalorder 0, %v1343
      %v1345 = vsel %vm1344, 0, %v1343
      %v1346 = vsub.s32 32, %v1345
      %v1347 = vshll.u32 %v1338, %v1345
      %v1348 = vshrl.u32 %v1330, %v1346
      %v1349 = vor.u32 %v1347, %v1348
      %v1350 = vsub.s32 4294967266, %v1345
      %v1351 = vadd.s32 %v1350, 127
      %v1352 = vshll.u32 %v1351, 23
      %v1353 = vor.u32 4788187, %v1352
      %v1354 = vand.u32 2147483647, %v1353
      %v1356 = vcvt.s32.f32 %v1349
      %v1357 = vmul.f32 %v1356, %v1354
      %v1358 = vxor.u32 %v1357, 2147483648
      %v1359 = vsel %vm1276, %v1358, %v1357
      %v1360 = vsub.s32 4, %v1336
      %v1361 = vsel %vm1276, %v1360, %v1336
      %v1362 = vsel %vm1275, %v1270, %v1359
      %v1363 = vsel %vm1275, 0, %v1361
      %v1364 = vcosq.f32.pop %v1362
      %v1365 = vsinq.f32.pop %v1362
      %vm1366 = vweird.f32 %v1270
      %v1367 = vand.u32 %v1363, 3
      %vm1368 = vcmp.lt.s32.totalorder %v1367, 2
      %vm1369 = vcmp.eq.s32.totalorder %v1367, 0
      %v1370 = vxor.u32 %v1365, 2147483648
      %v1371 = vsel %vm1369, %v1364, %v1370
      %vm1372 = vcmp.eq.s32.totalorder %v1367, 2
      %v1373 = vxor.u32 %v1364, 2147483648
      %v1374 = vsel %vm1372, %v1373, %v1365
      %v1375 = vsel %vm1368, %v1371, %v1374
      %v1376 = vsel %vm1366, nan, %v1375
      %v1377 = vand.u32 2147483647, %v1272
      %vm1378 = vcmp.le.f32.partialorder %v1377, 0.7853982
      %vm1379 = vcmp.lt.s32.totalorder %v1272, 0
      %v1380 = vand.u32 %v1272, 2139095040
      %v1381 = vshrl.u32 %v1380, 23
      %v1382 = vsub.s32 %v1381, 127
      %v1383 = vand.u32 2147483647, %v1272
      %v1384 = vand.u32 %v1383, 8388607
      %v1385 = vor.u32 %v1384, 8388608
      %v1386 = vsub.s32 0, %v1385
      %v1387 = vadd.s32 %v1382, 1
      %vm1388 = vcmp.gt.s32.totalorder %v1387, 0
      %v1389 = vsel %vm1388, %v1387, 0
      %v1390 = vshrl.u32 %v1389, 5
      %v1391 = vand.u32 %v1389, 31
      %v1392 = vsub.s32 32, %v1391
      %v1393 = vshrl.u32 683565275, %v1392
      %v1394 = vshll.u32 683565275, %v1391
      %v1395 = vshrl.u32 2475754826, %v1392
      %v1396 = vor.u32 %v1394, %v1395
      %v1397 = vshll.u32 2475754826, %v1391
      %v1398 = vshrl.u32 2131351028, %v1392
      %v1399 = vor.u32 %v1397, %v1398
      %v1400 = vshll.u32 2131351028, %v1391
      %v1401 = vshrl.u32 2102212464, %v1392
      %v1402 = vor.u32 %v1400, %v1401
      %v1403 = vshll.u32 2102212464, %v1391
      %v1404 = vshrl.u32 920167782, %v1392
      %v1405 = vor.u32 %v1403, %v1404
      %v1406 = vshll.u32 920167782, %v1391
      %v1407 = vshrl.u32 1326507024, %v1392
      %v1408 = vor.u32 %v1406, %v1407
      %vm1409 = vcmp.lt.s32.totalorder %v1390, 1
      %vm1410 = vcmp.lt.s32.totalorder %v1390, 2
      %vm1411 = vcmp.lt.s32.totalorder %v1390, 3
      %vm1412 = vcmp.lt.s32.totalorder %v1390, 4
      %v1413 = vsel %vm1409, %v1393, %v1396
      %v1414 = vsel %vm1412, %v1402, 2102212464
      %v1415 = vsel %vm1411, %v1399, %v1414
      %v1416 = vsel %vm1410, %v1413, %v1415
      %v1417 = vsel %vm1409, %v1396, %v1399
      %v1418 = vsel %vm1412, %v1405, 920167782
      %v1419 = vsel %vm1411, %v1402, %v1418
      %v1420 = vsel %vm1410, %v1417, %v1419
      %v1421 = vsel %vm1409, %v1399, %v1402
      %v1422 = vsel %vm1412, %v1408, 1326507024
      %v1423 = vsel %vm1411, %v1405, %v1422
      %v1424 = vsel %vm1410, %v1421, %v1423
      %v1425 = vshll.u32 %v1385, 8
      %v1426 = vmul.u32.u64.compose %v1425, %v1424
      %v1427 = vextract.low.u32 %v1426
      %v1428 = vextract.high.u32 %v1426
      %v1429 = vmul.u32.u64.compose %v1425, %v1420
      %v1430 = vextract.low.u32 %v1429
      %v1431 = vextract.high.u32 %v1429
      %v1432 = vmul.u32 %v1425, %v1416
      %v1433 = vadd.s32 %v1428, %v1430
      %vm1434 = vc.u32 %v1428, %v1430
      %v1435 = vadd.s32 %v1431, 1
      %v1436 = vsel %vm1434, %v1435, %v1431
      %v1437 = vadd.s32 %v1432, %v1436
      %v1438 = vadd.s32 %v1437, 536870912
      %v1439 = vshrl.u32 %v1438, 30
      %v1440 = vshll.u32 %v1439, 30
      %v1441 = vsub.s32 %v1437, %v1440
      %vm1442 = vcmp.lt.s32.totalorder %v1441, 0
      %v1443 = vsub.s32 0, %v1441
      %v1444 = vsel %vm1442, %v1443, %v1441
      %v1445 = vclz %v1444
      %v1446 = vsub.s32 %v1445, 2
      %vm1447 = vcmp.gt.s32.totalorder 0, %v1446
      %v1448 = vsel %vm1447, 0, %v1446
      %v1449 = vsub.s32 32, %v1448
      %v1450 = vshll.u32 %v1441, %v1448
      %v1451 = vshrl.u32 %v1433, %v1449
      %v1452 = vor.u32 %v1450, %v1451
      %v1453 = vsub.s32 4294967266, %v1448
      %v1454 = vadd.s32 %v1453, 127
      %v1455 = vshll.u32 %v1454, 23
      %v1456 = vor.u32 4788187, %v1455
      %v1457 = vand.u32 2147483647, %v1456
      %v1459 = vcvt.s32.f32 %v1452
      %v1460 = vmul.f32 %v1459, %v1457
      %v1461 = vxor.u32 %v1460, 2147483648
      %v1462 = vsel %vm1379, %v1461, %v1460
      %v1463 = vsub.s32 4, %v1439
      %v1464 = vsel %vm1379, %v1463, %v1439
      %v1465 = vsel %vm1378, %v1272, %v1462
      %v1466 = vsel %vm1378, 0, %v1464
      %v1467 = vcosq.f32.pop %v1465
      %v1468 = vsinq.f32.pop %v1465
      %vm1469 = vweird.f32 %v1272
      %v1470 = vand.u32 %v1466, 3
      %vm1471 = vcmp.lt.s32.totalorder %v1470, 2
      %vm1472 = vcmp.eq.s32.totalorder %v1470, 0
      %v1473 = vxor.u32 %v1468, 2147483648
      %v1474 = vsel %vm1472, %v1467, %v1473
      %vm1475 = vcmp.eq.s32.totalorder %v1470, 2
      %v1476 = vxor.u32 %v1467, 2147483648
      %v1477 = vsel %vm1475, %v1476, %v1468
      %v1478 = vsel %vm1471, %v1474, %v1477
      %v1479 = vsel %vm1469, nan, %v1478
      %v1482 = vrot.slane %v1376, 4
      %v1483 = vrot.slane %v1479, 4
      %v1486 = vmul.f32 %v1270, %v1482
      %v1487 = vmul.f32 %v1272, %v1483
      %v1490 = vcombine.low %v1486, %v1487
      %1492 = vst [vmem:[%s303] sm:$0xff] %v1490
      %v1493 = vand.u32 2147483647, %v1270
      %vm1494 = vcmp.le.f32.partialorder %v1493, 0.7853982
      %vm1495 = vcmp.lt.s32.totalorder %v1270, 0
      %v1496 = vand.u32 %v1270, 2139095040
      %v1497 = vshrl.u32 %v1496, 23
      %v1498 = vsub.s32 %v1497, 127
      %v1499 = vand.u32 2147483647, %v1270
      %v1500 = vand.u32 %v1499, 8388607
      %v1501 = vor.u32 %v1500, 8388608
      %v1502 = vsub.s32 0, %v1501
      %v1503 = vadd.s32 %v1498, 1
      %vm1504 = vcmp.gt.s32.totalorder %v1503, 0
      %v1505 = vsel %vm1504, %v1503, 0
      %v1506 = vshrl.u32 %v1505, 5
      %v1507 = vand.u32 %v1505, 31
      %v1508 = vsub.s32 32, %v1507
      %v1509 = vshrl.u32 683565275, %v1508
      %v1510 = vshll.u32 683565275, %v1507
      %v1511 = vshrl.u32 2475754826, %v1508
      %v1512 = vor.u32 %v1510, %v1511
      %v1513 = vshll.u32 2475754826, %v1507
      %v1514 = vshrl.u32 2131351028, %v1508
      %v1515 = vor.u32 %v1513, %v1514
      %v1516 = vshll.u32 2131351028, %v1507
      %v1517 = vshrl.u32 2102212464, %v1508
      %v1518 = vor.u32 %v1516, %v1517
      %v1519 = vshll.u32 2102212464, %v1507
      %v1520 = vshrl.u32 920167782, %v1508
      %v1521 = vor.u32 %v1519, %v1520
      %v1522 = vshll.u32 920167782, %v1507
      %v1523 = vshrl.u32 1326507024, %v1508
      %v1524 = vor.u32 %v1522, %v1523
      %vm1525 = vcmp.lt.s32.totalorder %v1506, 1
      %vm1526 = vcmp.lt.s32.totalorder %v1506, 2
      %vm1527 = vcmp.lt.s32.totalorder %v1506, 3
      %vm1528 = vcmp.lt.s32.totalorder %v1506, 4
      %v1529 = vsel %vm1525, %v1509, %v1512
      %v1530 = vsel %vm1528, %v1518, 2102212464
      %v1531 = vsel %vm1527, %v1515, %v1530
      %v1532 = vsel %vm1526, %v1529, %v1531
      %v1533 = vsel %vm1525, %v1512, %v1515
      %v1534 = vsel %vm1528, %v1521, 920167782
      %v1535 = vsel %vm1527, %v1518, %v1534
      %v1536 = vsel %vm1526, %v1533, %v1535
      %v1537 = vsel %vm1525, %v1515, %v1518
      %v1538 = vsel %vm1528, %v1524, 1326507024
      %v1539 = vsel %vm1527, %v1521, %v1538
      %v1540 = vsel %vm1526, %v1537, %v1539
      %v1541 = vshll.u32 %v1501, 8
      %v1542 = vmul.u32.u64.compose %v1541, %v1540
      %v1543 = vextract.low.u32 %v1542
      %v1544 = vextract.high.u32 %v1542
      %v1545 = vmul.u32.u64.compose %v1541, %v1536
      %v1546 = vextract.low.u32 %v1545
      %v1547 = vextract.high.u32 %v1545
      %v1548 = vmul.u32 %v1541, %v1532
      %v1549 = vadd.s32 %v1544, %v1546
      %vm1550 = vc.u32 %v1544, %v1546
      %v1551 = vadd.s32 %v1547, 1
      %v1552 = vsel %vm1550, %v1551, %v1547
      %v1553 = vadd.s32 %v1548, %v1552
      %v1554 = vadd.s32 %v1553, 536870912
      %v1555 = vshrl.u32 %v1554, 30
      %v1556 = vshll.u32 %v1555, 30
      %v1557 = vsub.s32 %v1553, %v1556
      %vm1558 = vcmp.lt.s32.totalorder %v1557, 0
      %v1559 = vsub.s32 0, %v1557
      %v1560 = vsel %vm1558, %v1559, %v1557
      %v1561 = vclz %v1560
      %v1562 = vsub.s32 %v1561, 2
      %vm1563 = vcmp.gt.s32.totalorder 0, %v1562
      %v1564 = vsel %vm1563, 0, %v1562
      %v1565 = vsub.s32 32, %v1564
      %v1566 = vshll.u32 %v1557, %v1564
      %v1567 = vshrl.u32 %v1549, %v1565
      %v1568 = vor.u32 %v1566, %v1567
      %v1569 = vsub.s32 4294967266, %v1564
      %v1570 = vadd.s32 %v1569, 127
      %v1571 = vshll.u32 %v1570, 23
      %v1572 = vor.u32 4788187, %v1571
      %v1573 = vand.u32 2147483647, %v1572
      %v1575 = vcvt.s32.f32 %v1568
      %v1576 = vmul.f32 %v1575, %v1573
      %v1577 = vxor.u32 %v1576, 2147483648
      %v1578 = vsel %vm1495, %v1577, %v1576
      %v1579 = vsub.s32 4, %v1555
      %v1580 = vsel %vm1495, %v1579, %v1555
      %v1581 = vsel %vm1494, %v1270, %v1578
      %v1582 = vsel %vm1494, 0, %v1580
      %v1583 = vcosq.f32.pop %v1581
      %v1584 = vsinq.f32.pop %v1581
      %vm1585 = vweird.f32 %v1270
      %v1586 = vadd.s32 %v1582, 3
      %v1587 = vand.u32 %v1586, 3
      %vm1588 = vcmp.lt.s32.totalorder %v1587, 2
      %vm1589 = vcmp.eq.s32.totalorder %v1587, 0
      %v1590 = vxor.u32 %v1584, 2147483648
      %v1591 = vsel %vm1589, %v1583, %v1590
      %vm1592 = vcmp.eq.s32.totalorder %v1587, 2
      %v1593 = vxor.u32 %v1583, 2147483648
      %v1594 = vsel %vm1592, %v1593, %v1584
      %v1595 = vsel %vm1588, %v1591, %v1594
      %v1596 = vsel %vm1585, nan, %v1595
      %v1597 = vand.u32 2147483647, %v1272
      %vm1598 = vcmp.le.f32.partialorder %v1597, 0.7853982
      %vm1599 = vcmp.lt.s32.totalorder %v1272, 0
      %v1600 = vand.u32 %v1272, 2139095040
      %v1601 = vshrl.u32 %v1600, 23
      %v1602 = vsub.s32 %v1601, 127
      %v1603 = vand.u32 2147483647, %v1272
      %v1604 = vand.u32 %v1603, 8388607
      %v1605 = vor.u32 %v1604, 8388608
      %v1606 = vsub.s32 0, %v1605
      %v1607 = vadd.s32 %v1602, 1
      %vm1608 = vcmp.gt.s32.totalorder %v1607, 0
      %v1609 = vsel %vm1608, %v1607, 0
      %v1610 = vshrl.u32 %v1609, 5
      %v1611 = vand.u32 %v1609, 31
      %v1612 = vsub.s32 32, %v1611
      %v1613 = vshrl.u32 683565275, %v1612
      %v1614 = vshll.u32 683565275, %v1611
      %v1615 = vshrl.u32 2475754826, %v1612
      %v1616 = vor.u32 %v1614, %v1615
      %v1617 = vshll.u32 2475754826, %v1611
      %v1618 = vshrl.u32 2131351028, %v1612
      %v1619 = vor.u32 %v1617, %v1618
      %v1620 = vshll.u32 2131351028, %v1611
      %v1621 = vshrl.u32 2102212464, %v1612
      %v1622 = vor.u32 %v1620, %v1621
      %v1623 = vshll.u32 2102212464, %v1611
      %v1624 = vshrl.u32 920167782, %v1612
      %v1625 = vor.u32 %v1623, %v1624
      %v1626 = vshll.u32 920167782, %v1611
      %v1627 = vshrl.u32 1326507024, %v1612
      %v1628 = vor.u32 %v1626, %v1627
      %vm1629 = vcmp.lt.s32.totalorder %v1610, 1
      %vm1630 = vcmp.lt.s32.totalorder %v1610, 2
      %vm1631 = vcmp.lt.s32.totalorder %v1610, 3
      %vm1632 = vcmp.lt.s32.totalorder %v1610, 4
      %v1633 = vsel %vm1629, %v1613, %v1616
      %v1634 = vsel %vm1632, %v1622, 2102212464
      %v1635 = vsel %vm1631, %v1619, %v1634
      %v1636 = vsel %vm1630, %v1633, %v1635
      %v1637 = vsel %vm1629, %v1616, %v1619
      %v1638 = vsel %vm1632, %v1625, 920167782
      %v1639 = vsel %vm1631, %v1622, %v1638
      %v1640 = vsel %vm1630, %v1637, %v1639
      %v1641 = vsel %vm1629, %v1619, %v1622
      %v1642 = vsel %vm1632, %v1628, 1326507024
      %v1643 = vsel %vm1631, %v1625, %v1642
      %v1644 = vsel %vm1630, %v1641, %v1643
      %v1645 = vshll.u32 %v1605, 8
      %v1646 = vmul.u32.u64.compose %v1645, %v1644
      %v1647 = vextract.low.u32 %v1646
      %v1648 = vextract.high.u32 %v1646
      %v1649 = vmul.u32.u64.compose %v1645, %v1640
      %v1650 = vextract.low.u32 %v1649
      %v1651 = vextract.high.u32 %v1649
      %v1652 = vmul.u32 %v1645, %v1636
      %v1653 = vadd.s32 %v1648, %v1650
      %vm1654 = vc.u32 %v1648, %v1650
      %v1655 = vadd.s32 %v1651, 1
      %v1656 = vsel %vm1654, %v1655, %v1651
      %v1657 = vadd.s32 %v1652, %v1656
      %v1658 = vadd.s32 %v1657, 536870912
      %v1659 = vshrl.u32 %v1658, 30
      %v1660 = vshll.u32 %v1659, 30
      %v1661 = vsub.s32 %v1657, %v1660
      %vm1662 = vcmp.lt.s32.totalorder %v1661, 0
      %v1663 = vsub.s32 0, %v1661
      %v1664 = vsel %vm1662, %v1663, %v1661
      %v1665 = vclz %v1664
      %v1666 = vsub.s32 %v1665, 2
      %vm1667 = vcmp.gt.s32.totalorder 0, %v1666
      %v1668 = vsel %vm1667, 0, %v1666
      %v1669 = vsub.s32 32, %v1668
      %v1670 = vshll.u32 %v1661, %v1668
      %v1671 = vshrl.u32 %v1653, %v1669
      %v1672 = vor.u32 %v1670, %v1671
      %v1673 = vsub.s32 4294967266, %v1668
      %v1674 = vadd.s32 %v1673, 127
      %v1675 = vshll.u32 %v1674, 23
      %v1676 = vor.u32 4788187, %v1675
      %v1677 = vand.u32 2147483647, %v1676
      %v1679 = vcvt.s32.f32 %v1672
      %v1680 = vmul.f32 %v1679, %v1677
      %v1681 = vxor.u32 %v1680, 2147483648
      %v1682 = vsel %vm1599, %v1681, %v1680
      %v1683 = vsub.s32 4, %v1659
      %v1684 = vsel %vm1599, %v1683, %v1659
      %v1685 = vsel %vm1598, %v1272, %v1682
      %v1686 = vsel %vm1598, 0, %v1684
      %v1687 = vcosq.f32.pop %v1685
      %v1688 = vsinq.f32.pop %v1685
      %vm1689 = vweird.f32 %v1272
      %v1690 = vadd.s32 %v1686, 3
      %v1691 = vand.u32 %v1690, 3
      %vm1692 = vcmp.lt.s32.totalorder %v1691, 2
      %vm1693 = vcmp.eq.s32.totalorder %v1691, 0
      %v1694 = vxor.u32 %v1688, 2147483648
      %v1695 = vsel %vm1693, %v1687, %v1694
      %vm1696 = vcmp.eq.s32.totalorder %v1691, 2
      %v1697 = vxor.u32 %v1687, 2147483648
      %v1698 = vsel %vm1696, %v1697, %v1688
      %v1699 = vsel %vm1692, %v1695, %v1698
      %v1700 = vsel %vm1689, nan, %v1699
      %v1703 = vrot.slane %v1596, 4
      %v1704 = vrot.slane %v1700, 4
      %v1707 = vmul.f32 %v1270, %v1703
      %v1708 = vmul.f32 %v1272, %v1704
      %v1711 = vcombine.low %v1707, %v1708
      %1713 = vst [vmem:[%s313] sm:$0xff] %v1711
      %s1714 = smul.u32 2, %s23
      %p1715 = scmp.lt.s32.totalorder %s22, 1
      %s1716 = scalar_select %p1715, %s22, 1
      %p1717 = scmp.lt.s32.totalorder %s1714, 1
      %s1718 = scalar_select %p1717, %s1714, 1
      %s1719 = smul.addr %s1716, 2
      %s1720 = sadd.s32 %s1718, %s1719
      %s1721 = smul.addr %s1720, 4
      %s1722 = scalar_lea.vmem %s5, %s1721
      %s1723 = smul.u32 2, %s23
      %p1724 = scmp.lt.s32.totalorder %s22, 1
      %s1725 = scalar_select %p1724, %s22, 1
      %p1726 = scmp.lt.s32.totalorder %s1723, 1
      %s1727 = scalar_select %p1726, %s1723, 1
      %s1728 = smul.addr %s1725, 2
      %s1729 = sadd.s32 %s1727, %s1728
      %s1730 = smul.addr %s1729, 4
      %s1731 = scalar_lea.vmem %s6, %s1730
      // Predicated region
      $region41: #{frescat_area_v2.2} parent=39 // pred_check
        %p1732 = pneg %p162
      $region42: #{frescat_area_v2.2} parent=39 // pred_check_branch
        %1734 = sbr.rel (%p1732) target = $region44
      $region43: #{frescat_area_v2.2} parent=39 // pred_region
        %s1735 = smul.u32 2, %s23
      $region44: #{frescat_area_v2.2} parent=39 // pred_fallthru
        _
      // Predicated region
      $region45: #{frescat_area_v2.2} parent=39 // pred_check
        %p1736 = pneg %p190
      $region46: #{frescat_area_v2.2} parent=39 // pred_check_branch
        %1738 = sbr.rel (%p1736) target = $region48
      $region47: #{frescat_area_v2.2} parent=39 // pred_region
        %s1739 = smul.u32 2, %s23
      $region48: #{frescat_area_v2.2} parent=39 // pred_fallthru
        _
    $region40: #{frescat_area_v2.2} parent=5 // pred_fallthru
      _
    %p1740 = scmp.le.s32.totalorder 2, %s13
    // Predicated region
    $region49: #{frescat_area_v2.2} parent=5 // pred_check
      %p1741 = pneg %p1740
    $region50: #{frescat_area_v2.2} parent=5 // pred_check_branch
      %1743 = sbr.rel (%p1741) target = $region52
    $region51: #{frescat_area_v2.2} parent=5 // pred_region
      %s1744 = ssub.s32 %s13, 2
      // Predicated region
      $region53: #{frescat_area_v2.2} parent=51 // pred_check
        %p1745 = pneg %p168
      $region54: #{frescat_area_v2.2} parent=51 // pred_check_branch
        %1747 = sbr.rel (%p1745) target = $region56
      $region55: #{frescat_area_v2.2} parent=51 // pred_region
        %s1748 = smul.u32 2, %s25
        %p1749 = scmp.lt.s32.totalorder %s24, 1
        %s1750 = scalar_select %p1749, %s24, 1
        %p1751 = scmp.lt.s32.totalorder %s1748, 1
        %s1752 = scalar_select %p1751, %s1748, 1
        %s1753 = smul.addr %s1750, 2
        %s1754 = sadd.s32 %s1752, %s1753
        %s1755 = smul.addr %s1754, 4
        %s1756 = scalar_lea.vmem %s5, %s1755
      $region56: #{frescat_area_v2.2} parent=51 // pred_fallthru
        _
      // Predicated region
      $region57: #{frescat_area_v2.2} parent=51 // pred_check
        %p1757 = pneg %p196
      $region58: #{frescat_area_v2.2} parent=51 // pred_check_branch
        %1759 = sbr.rel (%p1757) target = $region60
      $region59: #{frescat_area_v2.2} parent=51 // pred_region
        %s1760 = smul.u32 2, %s25
        %p1761 = scmp.lt.s32.totalorder %s24, 1
        %s1762 = scalar_select %p1761, %s24, 1
        %p1763 = scmp.lt.s32.totalorder %s1760, 1
        %s1764 = scalar_select %p1763, %s1760, 1
        %s1765 = smul.addr %s1762, 2
        %s1766 = sadd.s32 %s1764, %s1765
        %s1767 = smul.addr %s1766, 4
        %s1768 = scalar_lea.vmem %s6, %s1767
      $region60: #{frescat_area_v2.2} parent=51 // pred_fallthru
        _
    $region52: #{frescat_area_v2.2} parent=5 // pred_fallthru
      _
  $region6: #{frescat_area_v2.2} parent=0 // loop_footer
    %s17 = sadd.s32 1, %s13
  $region7: #{frescat_area_v2.2} parent=0 // loop_footer_branch
    %12 = sbr.rel target = $region3
  $region8: #{frescat_area_v2.2} parent=0 // loop_exit
    _

// kernel: frescat_area_v2.3
$region0: #{frescat_area_v2.3}
  #allocation0 [shape = 'u32[]', space=smem, size = 0x4, offset = 0x4, fixed_abs, tag = 'smem constant byte address 0x4 - core index']
  #allocation1 [shape = 'u32[144,128]{1,0:T(1,128)}', space=vmem, size = 0x12000, scoped, tag = 'internal scratch']
  %s0 = inlined_call_operand.vmem [shape: f32[2,1,4,290], index: 0, kind: input, shape index: {}]
  %s1 = inlined_call_operand.vmem [shape: f32[2,4,256], index: 1, kind: input, shape index: {}]
  %s2 = inlined_call_operand.vmem [shape: f32[16,40], index: 2, kind: input, shape index: {}]
  %s3 = inlined_call_operand.vmem [shape: f32[16,1], index: 3, kind: input, shape index: {}]
  %s4 = inlined_call_operand.vmem [shape: f32[2,16,256], index: 4, kind: output, shape index: {}]
  %s5 = sld [smem:[#allocation0]]
  $region49: #{frescat_area_v2.3} parent=0
    _
  %s7 = ssub.s32 1, %s5
  %s8 = scalar_select 0, %s7, %s5
  loop: start=0, step=1, limit=4
  $region2: #{frescat_area_v2.3} parent=0 // loop_pre_header
    _
  $region3: #{frescat_area_v2.3} parent=0 // loop_header
    %s10 = sphi 0, %s14
    %p11 = scmp.ge.s32.totalorder %s10, 4
    %s17 = sphi 0, %s29
    %s18 = sphi 0, %s25
    %s19 = sphi 0, %s17
    %s20 = sphi 0, %s18
    %s21 = sphi 0, %s19
    %s22 = sphi 0, %s20
    %s34 = sphi 0, %s36
    %s37 = sphi 0, %s34
    %s38 = sphi 0, %s37
    %s54 = sphi 0, %s38
    %s62 = sphi 0, %s64
    %s65 = sphi 0, %s62
    %s66 = sphi 0, %s65
    %s82 = sphi 0, %s66
    %s86 = sphi 0, %s86
    %s88 = sphi 0, %s86
    %s89 = sphi 0, %s88
    %s103 = sphi 0, %s89
    %s107 = sphi 0, %s107
    %s109 = sphi 0, %s107
    %s110 = sphi 0, %s109
    %s124 = sphi 0, %s110
    %s132 = sphi 0, %s134
    %s135 = sphi 0, %s132
    %s136 = sphi 0, %s135
    %s152 = sphi 0, %s136
  $region4: #{frescat_area_v2.3} parent=0 // loop_header_branch
    %13 = sbr.rel (%p11) target = $region8
  $region5: #{frescat_area_v2.3} parent=0 // loop_body
    %s15 = ssub.s32 %s10, 1
    %s16 = ssub.s32 %s10, 2
    %s23 = sadd.s32 1, %s18
    %p24 = scmp.ge.s32.totalorder %s23, 1
    %s25 = scalar_select %p24, 0, %s23
    %s26 = sadd.s32 1, %s17
    %s27 = scalar_select %p24, %s26, %s17
    %p28 = scmp.ge.s32.totalorder %s27, 2
    %s29 = scalar_select %p28, 0, %s27
    %s30 = ssub.s32 %s17, %s29
    %s31 = ssub.s32 %s18, %s25
    %s32 = sor.u32 %s30, %s31
    %p33 = scmp.eq.s32.totalorder %s32, 0
    %s35 = sadd.s32 %s34, 1
    %s36 = scalar_select %p33, %s34, %s35
    %p39 = pneg %p33
    %p40 = scmp.eq.s32.totalorder %s10, 1
    %p41 = por %p39, %p40
    %p42 = scmp.ne.s32.totalorder %s34, %s37
    %p43 = scmp.eq.s32.totalorder %s10, 0
    %p44 = por %p42, %p43
    %p45 = scmp.ne.s32.totalorder %s34, %s37
    %p46 = scmp.eq.s32.totalorder %s15, 1
    %p47 = por %p45, %p46
    %p48 = scmp.ne.s32.totalorder %s37, %s38
    %p49 = scmp.eq.s32.totalorder %s15, 0
    %p50 = por %p48, %p49
    %p51 = scmp.ne.s32.totalorder %s37, %s38
    %p52 = scmp.eq.s32.totalorder %s16, 1
    %p53 = por %p51, %p52
    %p55 = scmp.ne.s32.totalorder %s38, %s54
    %p56 = scmp.eq.s32.totalorder %s16, 0
    %p57 = por %p55, %p56
    %s58 = ssub.s32 %s17, %s29
    %s59 = ssub.s32 %s18, %s25
    %s60 = sor.u32 %s58, %s59
    %p61 = scmp.eq.s32.totalorder %s60, 0
    %s63 = sadd.s32 %s62, 1
    %s64 = scalar_select %p61, %s62, %s63
    %p67 = pneg %p61
    %p68 = scmp.eq.s32.totalorder %s10, 1
    %p69 = por %p67, %p68
    %p70 = scmp.ne.s32.totalorder %s62, %s65
    %p71 = scmp.eq.s32.totalorder %s10, 0
    %p72 = por %p70, %p71
    %p73 = scmp.ne.s32.totalorder %s62, %s65
    %p74 = scmp.eq.s32.totalorder %s15, 1
    %p75 = por %p73, %p74
    %p76 = scmp.ne.s32.totalorder %s65, %s66
    %p77 = scmp.eq.s32.totalorder %s15, 0
    %p78 = por %p76, %p77
    %p79 = scmp.ne.s32.totalorder %s65, %s66
    %p80 = scmp.eq.s32.totalorder %s16, 1
    %p81 = por %p79, %p80
    %p83 = scmp.ne.s32.totalorder %s66, %s82
    %p84 = scmp.eq.s32.totalorder %s16, 0
    %p85 = por %p83, %p84
    %s87 = sadd.s32 %s86, 1
    %p90 = scmp.eq.s32.totalorder %s10, 1
    %p91 = scmp.ne.s32.totalorder %s86, %s88
    %p92 = scmp.eq.s32.totalorder %s10, 0
    %p93 = por %p91, %p92
    %p94 = scmp.ne.s32.totalorder %s86, %s88
    %p95 = scmp.eq.s32.totalorder %s15, 1
    %p96 = por %p94, %p95
    %p97 = scmp.ne.s32.totalorder %s88, %s89
    %p98 = scmp.eq.s32.totalorder %s15, 0
    %p99 = por %p97, %p98
    %p100 = scmp.ne.s32.totalorder %s88, %s89
    %p101 = scmp.eq.s32.totalorder %s16, 1
    %p102 = por %p100, %p101
    %p104 = scmp.ne.s32.totalorder %s89, %s103
    %p105 = scmp.eq.s32.totalorder %s16, 0
    %p106 = por %p104, %p105
    %s108 = sadd.s32 %s107, 1
    %p111 = scmp.eq.s32.totalorder %s10, 1
    %p112 = scmp.ne.s32.totalorder %s107, %s109
    %p113 = scmp.eq.s32.totalorder %s10, 0
    %p114 = por %p112, %p113
    %p115 = scmp.ne.s32.totalorder %s107, %s109
    %p116 = scmp.eq.s32.totalorder %s15, 1
    %p117 = por %p115, %p116
    %p118 = scmp.ne.s32.totalorder %s109, %s110
    %p119 = scmp.eq.s32.totalorder %s15, 0
    %p120 = por %p118, %p119
    %p121 = scmp.ne.s32.totalorder %s109, %s110
    %p122 = scmp.eq.s32.totalorder %s16, 1
    %p123 = por %p121, %p122
    %p125 = scmp.ne.s32.totalorder %s110, %s124
    %p126 = scmp.eq.s32.totalorder %s16, 0
    %p127 = por %p125, %p126
    %s128 = ssub.s32 %s17, %s29
    %s129 = ssub.s32 %s18, %s25
    %s130 = sor.u32 %s128, %s129
    %p131 = scmp.eq.s32.totalorder %s130, 0
    %s133 = sadd.s32 %s132, 1
    %s134 = scalar_select %p131, %s132, %s133
    %p137 = pneg %p131
    %p138 = scmp.eq.s32.totalorder %s10, 1
    %p139 = por %p137, %p138
    %p140 = scmp.ne.s32.totalorder %s132, %s135
    %p141 = scmp.eq.s32.totalorder %s10, 0
    %p142 = por %p140, %p141
    %p143 = scmp.ne.s32.totalorder %s132, %s135
    %p144 = scmp.eq.s32.totalorder %s15, 1
    %p145 = por %p143, %p144
    %p146 = scmp.ne.s32.totalorder %s135, %s136
    %p147 = scmp.eq.s32.totalorder %s15, 0
    %p148 = por %p146, %p147
    %p149 = scmp.ne.s32.totalorder %s135, %s136
    %p150 = scmp.eq.s32.totalorder %s16, 1
    %p151 = por %p149, %p150
    %p153 = scmp.ne.s32.totalorder %s136, %s152
    %p154 = scmp.eq.s32.totalorder %s16, 0
    %p155 = por %p153, %p154
    %p156 = scmp.le.s32.totalorder 1, %s10
    %p157 = scmp.lt.s32.totalorder %s10, 3
    %p158 = pnand %p156, %p157
    %p159 = pneg %p158
    // Predicated region
    $region9: #{frescat_area_v2.3} parent=5 // pred_check
      _
    $region10: #{frescat_area_v2.3} parent=5 // pred_check_branch
      %161 = sbr.rel (%p158) target = $region12
    $region11: #{frescat_area_v2.3} parent=5 // pred_region
      %s162 = ssub.s32 %s10, 1
      // Predicated region
      $region13: #{frescat_area_v2.3} parent=11 // pred_check
        %p163 = pneg %p99
      $region14: #{frescat_area_v2.3} parent=11 // pred_check_branch
        %165 = sbr.rel (%p163) target = $region16
      $region15: #{frescat_area_v2.3} parent=11 // pred_region
        _
      $region16: #{frescat_area_v2.3} parent=11 // pred_fallthru
        _
      // Predicated region
      $region17: #{frescat_area_v2.3} parent=11 // pred_check
        %p166 = pneg %p120
      $region18: #{frescat_area_v2.3} parent=11 // pred_check_branch
        %168 = sbr.rel (%p166) target = $region20
      $region19: #{frescat_area_v2.3} parent=11 // pred_region
        _
      $region20: #{frescat_area_v2.3} parent=11 // pred_fallthru
        _
    $region12: #{frescat_area_v2.3} parent=5 // pred_fallthru
      _
    %p169 = scmp.lt.s32.totalorder %s10, 2
    // Predicated region
    $region21: #{frescat_area_v2.3} parent=5 // pred_check
      %p170 = pneg %p169
    $region22: #{frescat_area_v2.3} parent=5 // pred_check_branch
      %172 = sbr.rel (%p170) target = $region24
    $region23: #{frescat_area_v2.3} parent=5 // pred_region
      // Predicated region
      $region25: #{frescat_area_v2.3} parent=23 // pred_check
        %p173 = pneg %p44
      $region26: #{frescat_area_v2.3} parent=23 // pred_check_branch
        %175 = sbr.rel (%p173) target = $region28
      $region27: #{frescat_area_v2.3} parent=23 // pred_region
        %p176 = scmp.lt.s32.totalorder %s17, 1
        %s177 = scalar_select %p176, %s17, 1
        %p178 = scmp.lt.s32.totalorder %s18, 0
        %s179 = scalar_select %p178, %s18, 0
        %s180 = smul.addr %s179, 3
        %s181 = smul.addr %s177, 3
        %s182 = sadd.s32 %s180, %s181
        %s183 = smul.addr %s182, 4
        %s184 = scalar_lea.vmem %s0, %s183
      $region28: #{frescat_area_v2.3} parent=23 // pred_fallthru
        _
      // Predicated region
      $region29: #{frescat_area_v2.3} parent=23 // pred_check
        %p185 = pneg %p72
      $region30: #{frescat_area_v2.3} parent=23 // pred_check_branch
        %187 = sbr.rel (%p185) target = $region32
      $region31: #{frescat_area_v2.3} parent=23 // pred_region
        %s188 = smul.u32 2, %s18
        %p189 = scmp.lt.s32.totalorder %s17, 1
        %s190 = scalar_select %p189, %s17, 1
        %p191 = scmp.lt.s32.totalorder %s188, 1
        %s192 = scalar_select %p191, %s188, 1
        %s193 = smul.addr %s190, 2
        %s194 = sadd.s32 %s192, %s193
        %s195 = smul.addr %s194, 4
        %s196 = scalar_lea.vmem %s1, %s195
        %s197 = smul.u32 2, %s18
      $region32: #{frescat_area_v2.3} parent=23 // pred_fallthru
        _
    $region24: #{frescat_area_v2.3} parent=5 // pred_fallthru
      _
    %p198 = scmp.le.s32.totalorder 1, %s10
    %p199 = scmp.lt.s32.totalorder %s10, 3
    %p200 = pnand %p198, %p199
    %p201 = pneg %p200
    // Predicated region
    $region33: #{frescat_area_v2.3} parent=5 // pred_check
      _
    $region34: #{frescat_area_v2.3} parent=5 // pred_check_branch
      %203 = sbr.rel (%p200) target = $region36
    $region35: #{frescat_area_v2.3} parent=5 // pred_region
      %s204 = ssub.s32 %s10, 1
      %p205 = scmp.lt.s32.totalorder %s19, 1
      %s206 = scalar_select %p205, %s19, 1
      %p207 = scmp.lt.s32.totalorder %s20, 0
      %s208 = scalar_select %p207, %s20, 0
      %s209 = smul.addr %s208, 3
      %s210 = smul.addr %s206, 3
      %s211 = sadd.s32 %s209, %s210
      %s212 = smul.addr %s211, 4
      %s213 = scalar_lea.vmem %s0, %s212
      %p214 = pneg %p50
      %p215 = pneg %p47
      %s216 = smul.u32 2, %s20
      %p217 = scmp.lt.s32.totalorder %s19, 1
      %s218 = scalar_select %p217, %s19, 1
      %p219 = scmp.lt.s32.totalorder %s216, 1
      %s220 = scalar_select %p219, %s216, 1
      %s221 = smul.addr %s218, 2
      %s222 = sadd.s32 %s220, %s221
      %s223 = smul.addr %s222, 4
      %s224 = scalar_lea.vmem %s1, %s223
      %p225 = pneg %p78
      %p226 = pneg %p75
      %p227 = pneg %p99
      %p228 = pneg %p96
      %p229 = pneg %p120
      %p230 = pneg %p117
      %p231 = pneg %p148
      %p232 = pneg %p145
      %s233 = smul.u32 2, %s20
      %p234 = scmp.lt.s32.totalorder %s19, 1
      %s235 = scalar_select %p234, %s19, 1
      %p236 = scmp.lt.s32.totalorder %s233, 1
      %s237 = scalar_select %p236, %s233, 1
      %s238 = smul.addr %s235, 4
      %s239 = sadd.s32 %s237, %s238
      %s240 = smul.addr %s239, 8
      %s241 = scalar_lea.vmem %s4, %s240
      %p242 = scmp.lt.s32.totalorder %s19, 1
      %s243 = scalar_select %p242, %s19, 1
      %p244 = scmp.lt.s32.totalorder %s20, 0
      %s245 = scalar_select %p244, %s20, 0
      %s246 = smul.addr %s245, 3
      %s247 = smul.addr %s243, 3
      %s248 = sadd.s32 %s246, %s247
      %s249 = smul.addr %s248, 4
      %s250 = scalar_lea.vmem %s0, %s249
      %s251 = smul.u32 2, %s20
      %p252 = scmp.lt.s32.totalorder %s19, 1
      %s253 = scalar_select %p252, %s19, 1
      %p254 = scmp.lt.s32.totalorder %s251, 1
      %s255 = scalar_select %p254, %s251, 1
      %s256 = smul.addr %s253, 2
      %s257 = sadd.s32 %s255, %s256
      %s258 = smul.addr %s257, 4
      %s259 = scalar_lea.vmem %s1, %s258
      %s260 = smul.u32 2, %s20
      %s261 = smul.u32 2, %s20
      %p262 = scmp.lt.s32.totalorder %s19, 1
      %s263 = scalar_select %p262, %s19, 1
      %p264 = scmp.lt.s32.totalorder %s261, 1
      %s265 = scalar_select %p264, %s261, 1
      %s266 = smul.addr %s263, 4
      %s267 = sadd.s32 %s265, %s266
      %s268 = smul.addr %s267, 8
      %s269 = scalar_lea.vmem %s4, %s268
      %s270 = smul.u32 2, %s20
      %v271 = vld [vmem:[%s250] sm:$0xff]
      %v272 = vld [vmem:[%s250 + $0x8] sm:$0xf]
      %v273 = vld [vmem:[%s259] sm:$0xff]
      %v274 = vlaneseq
      %v275 = vand.u32 %v274, 127
      %v276 = vadd.s32 %v275, 128
      %vm277 = vcmp.lt.s32.totalorder %v275, 0
      %v278 = vsub.s32 0, %v275
      %v279 = vsel %vm277, %v278, %v275
      %v280 = vshrl.u32 %v279, 4
      %v281 = vand.u32 %v279, 15
      %v282 = vsub.s32 0, %v281
      %v283 = vsel %vm277, %v282, %v281
      %vm284 = vcmp.lt.s32.totalorder %v276, 0
      %v285 = vsub.s32 0, %v276
      %v286 = vsel %vm284, %v285, %v276
      %v287 = vshrl.u32 %v286, 4
      %v288 = vand.u32 %v286, 15
      %v289 = vsub.s32 0, %v288
      %v290 = vsel %vm284, %v289, %v288
      %vm291 = vcmp.ne.s32.totalorder %v283, 0
      %vm292 = vcmp.ne.s32.totalorder %v290, 0
      %vm293 = vcmp.lt.s32.totalorder %v283, 0
      %vm294 = vcmp.lt.s32.totalorder %v290, 0
      %vm295 = vmand %vm293, %vm291
      %vm296 = vmand %vm294, %vm292
      %v297 = vadd.s32 %v283, 16
      %v298 = vadd.s32 %v290, 16
      %v299 = vsel %vm295, %v297, %v283
      %v300 = vsel %vm296, %v298, %v290
      %vm301 = vcmp.ge.s32.totalorder %v299, 1
      %vm302 = vcmp.ge.s32.totalorder %v300, 1
      %vm303 = vcmp.le.s32.totalorder %v299, 14
      %vm304 = vcmp.le.s32.totalorder %v300, 14
      %v305 = vsel %vm301, 1, 0
      %v306 = vsel %vm302, 1, 0
      %vm307 = vcmp.eq.s32.totalorder %v305, 1
      %vm308 = vcmp.eq.s32.totalorder %v306, 1
      %v310 = vcombine.high %v271, %v271
      %v312 = vsel %vm307, %v271, 0.0
      %v313 = vsel %vm308, %v310, 0.0
      %v314 = vsel %vm303, 1, 0
      %v315 = vsel %vm304, 1, 0
      %vm316 = vcmp.eq.s32.totalorder %v314, 1
      %vm317 = vcmp.eq.s32.totalorder %v315, 1
      %319 = vrot.lane.b32.xlu0 %v271, 126
      %v320 = vpop.permute.xlu0 %319
      %321 = vrot.lane.b32.xlu0 %v310, 126
      %v322 = vpop.permute.xlu0 %321
      %323 = vrot.lane.b32.xlu0 %v272, 126
      %v324 = vpop.permute.xlu0 %323
      %vm325 = vcmask 1031168
      %v326 = vsel %vm325, %v320, %v322
      %v327 = vsel %vm325, %v322, %v324
      %v330 = vsel %vm316, %v326, 0.0
      %v331 = vsel %vm317, %v327, 0.0
      %332 = vrot.lane.b32.xlu0 %v271, 112
      %v333 = vpop.permute.xlu0 %332
      %334 = vrot.lane.b32.xlu0 %v310, 112
      %v335 = vpop.permute.xlu0 %334
      %336 = vrot.lane.b32.xlu0 %v272, 112
      %v337 = vpop.permute.xlu0 %336
      %vm338 = vcmask 916480
      %v339 = vsel %vm338, %v333, %v335
      %v340 = vsel %vm338, %v335, %v337
      %v343 = vsel %vm307, %v339, 0.0
      %v344 = vsel %vm308, %v340, 0.0
      %345 = vrot.lane.b32.xlu0 %v271, 110
      %v346 = vpop.permute.xlu0 %345
      %347 = vrot.lane.b32.xlu0 %v310, 110
      %v348 = vpop.permute.xlu0 %347
      %349 = vrot.lane.b32.xlu0 %v272, 110
      %v350 = vpop.permute.xlu0 %349
      %vm351 = vcmask 900096
      %v352 = vsel %vm351, %v346, %v348
      %v353 = vsel %vm351, %v348, %v350
      %v356 = vsel %vm316, %v352, 0.0
      %v357 = vsel %vm317, %v353, 0.0
      %358 = vrot.lane.b32.xlu0 %v271, 96
      %v359 = vpop.permute.xlu0 %358
      %360 = vrot.lane.b32.xlu0 %v310, 96
      %v361 = vpop.permute.xlu0 %360
      %362 = vrot.lane.b32.xlu0 %v272, 96
      %v363 = vpop.permute.xlu0 %362
      %vm364 = vcmask 785408
      %v365 = vsel %vm364, %v359, %v361
      %v366 = vsel %vm364, %v361, %v363
      %v369 = vsel %vm307, %v365, 0.0
      %v370 = vsel %vm308, %v366, 0.0
      %371 = vrot.lane.b32.xlu0 %v271, 94
      %v372 = vpop.permute.xlu0 %371
      %373 = vrot.lane.b32.xlu0 %v310, 94
      %v374 = vpop.permute.xlu0 %373
      %375 = vrot.lane.b32.xlu0 %v272, 94
      %v376 = vpop.permute.xlu0 %375
      %vm377 = vcmask 769024
      %v378 = vsel %vm377, %v372, %v374
      %v379 = vsel %vm377, %v374, %v376
      %v382 = vsel %vm316, %v378, 0.0
      %v383 = vsel %vm317, %v379, 0.0
      %v384 = vcombine.low %v271, %v271
      %v385 = vcombine.low %v272, %v272
      %386 = vrot.lane.b32.xlu0 %v384, 127
      %v387 = vpop.permute.xlu0 %386
      %388 = vrot.lane.b32.xlu0 %v271, 127
      %v389 = vpop.permute.xlu0 %388
      %390 = vrot.lane.b32.xlu0 %v385, 127
      %v391 = vpop.permute.xlu0 %390
      %vm392 = vcmask 1039360
      %v393 = vsel %vm392, %v387, %v389
      %v394 = vsel %vm392, %v389, %v391
      %v399 = vrot.slane %v343, 4
      %v400 = vrot.slane %v344, 4
      %403 = vrot.lane.b32.xlu0 %v271, 111
      %v404 = vpop.permute.xlu0 %403
      %405 = vrot.lane.b32.xlu0 %v310, 111
      %v406 = vpop.permute.xlu0 %405
      %407 = vrot.lane.b32.xlu0 %v272, 111
      %v408 = vpop.permute.xlu0 %407
      %vm409 = vcmask 908288
      %v410 = vsel %vm409, %v404, %v406
      %v411 = vsel %vm409, %v406, %v408
      %v416 = vrot.slane %v356, 4
      %v417 = vrot.slane %v357, 4
      %420 = vrot.lane.b32.xlu0 %v384, 95
      %v421 = vpop.permute.xlu0 %420
      %422 = vrot.lane.b32.xlu0 %v271, 95
      %v423 = vpop.permute.xlu0 %422
      %424 = vrot.lane.b32.xlu0 %v385, 95
      %v425 = vpop.permute.xlu0 %424
      %vm426 = vcmask 777216
      %v427 = vsel %vm426, %v421, %v423
      %v428 = vsel %vm426, %v423, %v425
      %v432 = vcombine.low %v273, %v273
      %vm434 = vcmask 1043456
      %v435 = vsel %vm434, %v312, %v393
      %v436 = vsel %vm434, %v313, %v394
      %v437 = vsel %vm434, %v330, %v399
      %v438 = vsel %vm434, %v331, %v400
      %v439 = vsel %vm434, %v410, %v416
      %v440 = vsel %vm434, %v411, %v417
      %v441 = vsel %vm434, %v369, %v427
      %v442 = vsel %vm434, %v370, %v428
      %v443 = vsel %vm434, %v382, %v432
      %v444 = vsel %vm434, %v383, %v273
      %v445 = vld [vmem:[%s2] sm:$0xff]
      %v446 = vld [vmem:[%s2 + $0x8] sm:$0xff]
      %v447 = vld [vmem:[%s3] sm:$0xff]
      %v448 = vld [vmem:[%s3 + $0x8] sm:$0xff]
      %450 = vset.pattern.permute.xlu0 0
      %451 = vperm.xlu0 %450, %v447
      %v452 = vpop.permute.xlu0 %451
      %455 = vset.pattern.permute.xlu0 0
      %456 = vperm.xlu0 %455, %v448
      %v457 = vpop.permute.xlu0 %456
      %vm459 = vcmask 326656
      %v461 = vsel %vm459, %v445, 0
      %v464 = vsel %vm459, %v446, 0
      %v466 = vand.u32 %v436, 4294901760
      %467 = vmatprep.subr.mxu0 %v466
      %v468 = vand.u32 %v435, 4294901760
      %469 = vmatpush1.msra.mxu0 %v468
      %v470 = vand.u32 %v438, 4294901760
      %471 = vmatprep.subr.mxu0 %v470
      %v472 = vand.u32 %v437, 4294901760
      %473 = vmatpush1.msra.mxu0 %v472
      %v474 = vand.u32 %v440, 4294901760
      %475 = vmatprep.subr.mxu0 %v474
      %v476 = vand.u32 %v439, 4294901760
      %477 = vmatpush1.msra.mxu0 %v476
      %v478 = vand.u32 %v442, 4294901760
      %479 = vmatprep.subr.mxu0 %v478
      %v480 = vand.u32 %v441, 4294901760
      %481 = vmatpush1.msra.mxu0 %v480
      %v482 = vand.u32 %v444, 4294901760
      %483 = vmatprep.subr.mxu0 %v482
      %v484 = vand.u32 %v443, 4294901760
      %485 = vmatpush1.msra.mxu0 %v484
      %486 = vmatprep.subr.mxu0 0.0
      %487 = vmatpush1.msra.mxu0 0.0
      %488 = vmatprep.subr.mxu0 0.0
      %489 = vmatpush1.msra.mxu0 0.0
      %490 = vmatprep.subr.mxu0 0.0
      %491 = vmatpush1.msra.mxu0 0.0
      %492 = vmatprep.subr.mxu0 0.0
      %493 = vmatpush1.msra.mxu0 0.0
      %494 = vmatprep.subr.mxu0 0.0
      %495 = vmatpush1.msra.mxu0 0.0
      %496 = vmatprep.subr.mxu0 0.0
      %497 = vmatpush1.msra.mxu0 0.0
      %498 = vmatprep.subr.mxu0 0.0
      %499 = vmatpush1.msra.mxu0 0.0
      %500 = vmatprep.subr.mxu0 0.0
      %501 = vmatpush1.msra.mxu0 0.0
      %502 = vmatprep.subr.mxu0 0.0
      %503 = vmatpush1.msra.mxu0 0.0
      %504 = vmatprep.subr.mxu0 0.0
      %505 = vmatpush1.msra.mxu0 0.0
      %506 = vmatprep.subr.mxu0 0.0
      %507 = vmatpush1.msra.mxu0 0.0
      %508 = vmatprep.subr.mxu0 0.0
      %509 = vmatpush1.msra.mxu0 0.0
      %510 = vmatprep.subr.mxu0 0.0
      %511 = vmatpush1.msra.mxu0 0.0
      %512 = vmatprep.subr.mxu0 0.0
      %513 = vmatpush1.msra.mxu0 0.0
      %514 = vmatprep.subr.mxu0 0.0
      %515 = vmatpush1.msra.mxu0 0.0
      %516 = vmatprep.subr.mxu0 0.0
      %517 = vmatpush1.msra.mxu0 0.0
      %518 = vmatprep.subr.mxu0 0.0
      %519 = vmatpush1.msra.mxu0 0.0
      %520 = vmatprep.subr.mxu0 0.0
      %521 = vmatpush1.msra.mxu0 0.0
      %522 = vmatprep.subr.mxu0 0.0
      %523 = vmatpush1.msra.mxu0 0.0
      %524 = vmatprep.subr.mxu0 0.0
      %525 = vmatpush1.msra.mxu0 0.0
      %526 = vmatprep.subr.mxu0 0.0
      %527 = vmatpush1.msra.mxu0 0.0
      %528 = vmatprep.subr.mxu0 0.0
      %529 = vmatpush1.msra.mxu0 0.0
      %530 = vmatprep.subr.mxu0 0.0
      %531 = vmatpush1.msra.mxu0 0.0
      %532 = vmatprep.subr.mxu0 0.0
      %533 = vmatpush1.msra.mxu0 0.0
      %534 = vmatprep.subr.mxu0 0.0
      %535 = vmatpush1.msra.mxu0 0.0
      %536 = vmatprep.subr.mxu0 0.0
      %537 = vmatpush1.msra.mxu0 0.0
      %538 = vmatprep.subr.mxu0 0.0
      %539 = vmatpush1.msra.mxu0 0.0
      %540 = vmatprep.mubr.f32.mxu0 0.0
      %v541 = vand.u32 %v461, 4294901760
      %v542 = vsub.f32 %v461, %v541
      %v543 = vand.u32 %v542, 4294901760
      %v544 = vsub.f32 %v542, %v543
      %v545 = vand.u32 %v544, 4294901760
      %546 = vmatmul.mubr.f32.gmra.mrb[0].mxu0 %v545
      %v547 = vpop.f32.mrb[0].mxu0
      %v548 = vadd.f32 %v452, %v547
      %v549 = vpop.f32.mrb[0].mxu0
      %v550 = vadd.f32 %v452, %v549
      %551 = vmatprep.mubr.f32.mxu0 0.0
      %v552 = vand.u32 %v464, 4294901760
      %v553 = vsub.f32 %v464, %v552
      %v554 = vand.u32 %v553, 4294901760
      %v555 = vsub.f32 %v553, %v554
      %v556 = vand.u32 %v555, 4294901760
      %557 = vmatmul.mubr.f32.gmra.mrb[0].mxu0 %v556
      %v558 = vpop.f32.mrb[0].mxu0
      %v559 = vadd.f32 %v457, %v558
      %v560 = vpop.f32.mrb[0].mxu0
      %v561 = vadd.f32 %v457, %v560
      %562 = vdwg.mxu0
      %v563 = vand.u32 %v436, 4294901760
      %v564 = vsub.f32 %v436, %v563
      %v565 = vand.u32 %v564, 4294901760
      %v566 = vsub.f32 %v564, %v565
      %v567 = vand.u32 %v566, 4294901760
      %568 = vmatprep.subr.mxu0 %v567
      %v569 = vand.u32 %v435, 4294901760
      %v570 = vsub.f32 %v435, %v569
      %v571 = vand.u32 %v570, 4294901760
      %v572 = vsub.f32 %v570, %v571
      %v573 = vand.u32 %v572, 4294901760
      %574 = vmatpush1.msra.mxu0 %v573
      %v575 = vand.u32 %v438, 4294901760
      %v576 = vsub.f32 %v438, %v575
      %v577 = vand.u32 %v576, 4294901760
      %v578 = vsub.f32 %v576, %v577
      %v579 = vand.u32 %v578, 4294901760
      %580 = vmatprep.subr.mxu0 %v579
      %v581 = vand.u32 %v437, 4294901760
      %v582 = vsub.f32 %v437, %v581
      %v583 = vand.u32 %v582, 4294901760
      %v584 = vsub.f32 %v582, %v583
      %v585 = vand.u32 %v584, 4294901760
      %586 = vmatpush1.msra.mxu0 %v585
      %v587 = vand.u32 %v440, 4294901760
      %v588 = vsub.f32 %v440, %v587
      %v589 = vand.u32 %v588, 4294901760
      %v590 = vsub.f32 %v588, %v589
      %v591 = vand.u32 %v590, 4294901760
      %592 = vmatprep.subr.mxu0 %v591
      %v593 = vand.u32 %v439, 4294901760
      %v594 = vsub.f32 %v439, %v593
      %v595 = vand.u32 %v594, 4294901760
      %v596 = vsub.f32 %v594, %v595
      %v597 = vand.u32 %v596, 4294901760
      %598 = vmatpush1.msra.mxu0 %v597
      %v599 = vand.u32 %v442, 4294901760
      %v600 = vsub.f32 %v442, %v599
      %v601 = vand.u32 %v600, 4294901760
      %v602 = vsub.f32 %v600, %v601
      %v603 = vand.u32 %v602, 4294901760
      %604 = vmatprep.subr.mxu0 %v603
      %v605 = vand.u32 %v441, 4294901760
      %v606 = vsub.f32 %v441, %v605
      %v607 = vand.u32 %v606, 4294901760
      %v608 = vsub.f32 %v606, %v607
      %v609 = vand.u32 %v608, 4294901760
      %610 = vmatpush1.msra.mxu0 %v609
      %v611 = vand.u32 %v444, 4294901760
      %v612 = vsub.f32 %v444, %v611
      %v613 = vand.u32 %v612, 4294901760
      %v614 = vsub.f32 %v612, %v613
      %v615 = vand.u32 %v614, 4294901760
      %616 = vmatprep.subr.mxu0 %v615
      %v617 = vand.u32 %v443, 4294901760
      %v618 = vsub.f32 %v443, %v617
      %v619 = vand.u32 %v618, 4294901760
      %v620 = vsub.f32 %v618, %v619
      %v621 = vand.u32 %v620, 4294901760
      %622 = vmatpush1.msra.mxu0 %v621
      %623 = vmatprep.subr.mxu0 0.0
      %624 = vmatpush1.msra.mxu0 0.0
      %625 = vmatprep.subr.mxu0 0.0
      %626 = vmatpush1.msra.mxu0 0.0
      %627 = vmatprep.subr.mxu0 0.0
      %628 = vmatpush1.msra.mxu0 0.0
      %629 = vmatprep.subr.mxu0 0.0
      %630 = vmatpush1.msra.mxu0 0.0
      %631 = vmatprep.subr.mxu0 0.0
      %632 = vmatpush1.msra.mxu0 0.0
      %633 = vmatprep.subr.mxu0 0.0
      %634 = vmatpush1.msra.mxu0 0.0
      %635 = vmatprep.subr.mxu0 0.0
      %636 = vmatpush1.msra.mxu0 0.0
      %637 = vmatprep.subr.mxu0 0.0
      %638 = vmatpush1.msra.mxu0 0.0
      %639 = vmatprep.subr.mxu0 0.0
      %640 = vmatpush1.msra.mxu0 0.0
      %641 = vmatprep.subr.mxu0 0.0
      %642 = vmatpush1.msra.mxu0 0.0
      %643 = vmatprep.subr.mxu0 0.0
      %644 = vmatpush1.msra.mxu0 0.0
      %645 = vmatprep.subr.mxu0 0.0
      %646 = vmatpush1.msra.mxu0 0.0
      %647 = vmatprep.subr.mxu0 0.0
      %648 = vmatpush1.msra.mxu0 0.0
      %649 = vmatprep.subr.mxu0 0.0
      %650 = vmatpush1.msra.mxu0 0.0
      %651 = vmatprep.subr.mxu0 0.0
      %652 = vmatpush1.msra.mxu0 0.0
      %653 = vmatprep.subr.mxu0 0.0
      %654 = vmatpush1.msra.mxu0 0.0
      %655 = vmatprep.subr.mxu0 0.0
      %656 = vmatpush1.msra.mxu0 0.0
      %657 = vmatprep.subr.mxu0 0.0
      %658 = vmatpush1.msra.mxu0 0.0
      %659 = vmatprep.subr.mxu0 0.0
      %660 = vmatpush1.msra.mxu0 0.0
      %661 = vmatprep.subr.mxu0 0.0
      %662 = vmatpush1.msra.mxu0 0.0
      %663 = vmatprep.subr.mxu0 0.0
      %664 = vmatpush1.msra.mxu0 0.0
      %665 = vmatprep.subr.mxu0 0.0
      %666 = vmatpush1.msra.mxu0 0.0
      %667 = vmatprep.subr.mxu0 0.0
      %668 = vmatpush1.msra.mxu0 0.0
      %669 = vmatprep.subr.mxu0 0.0
      %670 = vmatpush1.msra.mxu0 0.0
      %671 = vmatprep.subr.mxu0 0.0
      %672 = vmatpush1.msra.mxu0 0.0
      %673 = vmatprep.subr.mxu0 0.0
      %674 = vmatpush1.msra.mxu0 0.0
      %675 = vmatprep.subr.mxu0 0.0
      %676 = vmatpush1.msra.mxu0 0.0
      %677 = vmatprep.mubr.f32.mxu0 0.0
      %v678 = vand.u32 %v461, 4294901760
      %679 = vmatmul.mubr.f32.gmra.mrb[0].mxu0 %v678
      %v680 = vpop.f32.mrb[0].mxu0
      %v681 = vadd.f32 %v548, %v680
      %v682 = vpop.f32.mrb[0].mxu0
      %v683 = vadd.f32 %v550, %v682
      %684 = vmatprep.mubr.f32.mxu0 0.0
      %v685 = vand.u32 %v464, 4294901760
      %686 = vmatmul.mubr.f32.gmra.mrb[0].mxu0 %v685
      %v687 = vpop.f32.mrb[0].mxu0
      %v688 = vadd.f32 %v559, %v687
      %v689 = vpop.f32.mrb[0].mxu0
      %v690 = vadd.f32 %v561, %v689
      %691 = vdwg.mxu0
      %v692 = vand.u32 %v436, 4294901760
      %v693 = vsub.f32 %v436, %v692
      %694 = vmatprep.subr.mxu0 %v693
      %v695 = vand.u32 %v435, 4294901760
      %v696 = vsub.f32 %v435, %v695
      %697 = vmatpush1.msra.mxu0 %v696
      %v698 = vand.u32 %v438, 4294901760
      %v699 = vsub.f32 %v438, %v698
      %700 = vmatprep.subr.mxu0 %v699
      %v701 = vand.u32 %v437, 4294901760
      %v702 = vsub.f32 %v437, %v701
      %703 = vmatpush1.msra.mxu0 %v702
      %v704 = vand.u32 %v440, 4294901760
      %v705 = vsub.f32 %v440, %v704
      %706 = vmatprep.subr.mxu0 %v705
      %v707 = vand.u32 %v439, 4294901760
      %v708 = vsub.f32 %v439, %v707
      %709 = vmatpush1.msra.mxu0 %v708
      %v710 = vand.u32 %v442, 4294901760
      %v711 = vsub.f32 %v442, %v710
      %712 = vmatprep.subr.mxu0 %v711
      %v713 = vand.u32 %v441, 4294901760
      %v714 = vsub.f32 %v441, %v713
      %715 = vmatpush1.msra.mxu0 %v714
      %v716 = vand.u32 %v444, 4294901760
      %v717 = vsub.f32 %v444, %v716
      %718 = vmatprep.subr.mxu0 %v717
      %v719 = vand.u32 %v443, 4294901760
      %v720 = vsub.f32 %v443, %v719
      %721 = vmatpush1.msra.mxu0 %v720
      %722 = vmatprep.subr.mxu0 0.0
      %723 = vmatpush1.msra.mxu0 0.0
      %724 = vmatprep.subr.mxu0 0.0
      %725 = vmatpush1.msra.mxu0 0.0
      %726 = vmatprep.subr.mxu0 0.0
      %727 = vmatpush1.msra.mxu0 0.0
      %728 = vmatprep.subr.mxu0 0.0
      %729 = vmatpush1.msra.mxu0 0.0
      %730 = vmatprep.subr.mxu0 0.0
      %731 = vmatpush1.msra.mxu0 0.0
      %732 = vmatprep.subr.mxu0 0.0
      %733 = vmatpush1.msra.mxu0 0.0
      %734 = vmatprep.subr.mxu0 0.0
      %735 = vmatpush1.msra.mxu0 0.0
      %736 = vmatprep.subr.mxu0 0.0
      %737 = vmatpush1.msra.mxu0 0.0
      %738 = vmatprep.subr.mxu0 0.0
      %739 = vmatpush1.msra.mxu0 0.0
      %740 = vmatprep.subr.mxu0 0.0
      %741 = vmatpush1.msra.mxu0 0.0
      %742 = vmatprep.subr.mxu0 0.0
      %743 = vmatpush1.msra.mxu0 0.0
      %744 = vmatprep.subr.mxu0 0.0
      %745 = vmatpush1.msra.mxu0 0.0
      %746 = vmatprep.subr.mxu0 0.0
      %747 = vmatpush1.msra.mxu0 0.0
      %748 = vmatprep.subr.mxu0 0.0
      %749 = vmatpush1.msra.mxu0 0.0
      %750 = vmatprep.subr.mxu0 0.0
      %751 = vmatpush1.msra.mxu0 0.0
      %752 = vmatprep.subr.mxu0 0.0
      %753 = vmatpush1.msra.mxu0 0.0
      %754 = vmatprep.subr.mxu0 0.0
      %755 = vmatpush1.msra.mxu0 0.0
      %756 = vmatprep.subr.mxu0 0.0
      %757 = vmatpush1.msra.mxu0 0.0
      %758 = vmatprep.subr.mxu0 0.0
      %759 = vmatpush1.msra.mxu0 0.0
      %760 = vmatprep.subr.mxu0 0.0
      %761 = vmatpush1.msra.mxu0 0.0
      %762 = vmatprep.subr.mxu0 0.0
      %763 = vmatpush1.msra.mxu0 0.0
      %764 = vmatprep.subr.mxu0 0.0
      %765 = vmatpush1.msra.mxu0 0.0
      %766 = vmatprep.subr.mxu0 0.0
      %767 = vmatpush1.msra.mxu0 0.0
      %768 = vmatprep.subr.mxu0 0.0
      %769 = vmatpush1.msra.mxu0 0.0
      %770 = vmatprep.subr.mxu0 0.0
      %771 = vmatpush1.msra.mxu0 0.0
      %772 = vmatprep.subr.mxu0 0.0
      %773 = vmatpush1.msra.mxu0 0.0
      %774 = vmatprep.subr.mxu0 0.0
      %775 = vmatpush1.msra.mxu0 0.0
      %776 = vmatprep.mubr.f32.mxu0 0.0
      %v777 = vand.u32 %v461, 4294901760
      %v778 = vsub.f32 %v461, %v777
      %779 = vmatmul.mubr.f32.gmra.mrb[0].mxu0 %v778
      %v780 = vpop.f32.mrb[0].mxu0
      %v781 = vadd.f32 %v681, %v780
      %v782 = vpop.f32.mrb[0].mxu0
      %v783 = vadd.f32 %v683, %v782
      %784 = vmatprep.mubr.f32.mxu0 0.0
      %v785 = vand.u32 %v464, 4294901760
      %v786 = vsub.f32 %v464, %v785
      %787 = vmatmul.mubr.f32.gmra.mrb[0].mxu0 %v786
      %v788 = vpop.f32.mrb[0].mxu0
      %v789 = vadd.f32 %v688, %v788
      %v790 = vpop.f32.mrb[0].mxu0
      %v791 = vadd.f32 %v690, %v790
      %792 = vdwg.mxu0
      %v793 = vand.u32 %v436, 4294901760
      %794 = vmatprep.subr.mxu0 %v793
      %v795 = vand.u32 %v435, 4294901760
      %796 = vmatpush1.msra.mxu0 %v795
      %v797 = vand.u32 %v438, 4294901760
      %798 = vmatprep.subr.mxu0 %v797
      %v799 = vand.u32 %v437, 4294901760
      %800 = vmatpush1.msra.mxu0 %v799
      %v801 = vand.u32 %v440, 4294901760
      %802 = vmatprep.subr.mxu0 %v801
      %v803 = vand.u32 %v439, 4294901760
      %804 = vmatpush1.msra.mxu0 %v803
      %v805 = vand.u32 %v442, 4294901760
      %806 = vmatprep.subr.mxu0 %v805
      %v807 = vand.u32 %v441, 4294901760
      %808 = vmatpush1.msra.mxu0 %v807
      %v809 = vand.u32 %v444, 4294901760
      %810 = vmatprep.subr.mxu0 %v809
      %v811 = vand.u32 %v443, 4294901760
      %812 = vmatpush1.msra.mxu0 %v811
      %813 = vmatprep.subr.mxu0 0.0
      %814 = vmatpush1.msra.mxu0 0.0
      %815 = vmatprep.subr.mxu0 0.0
      %816 = vmatpush1.msra.mxu0 0.0
      %817 = vmatprep.subr.mxu0 0.0
      %818 = vmatpush1.msra.mxu0 0.0
      %819 = vmatprep.subr.mxu0 0.0
      %820 = vmatpush1.msra.mxu0 0.0
      %821 = vmatprep.subr.mxu0 0.0
      %822 = vmatpush1.msra.mxu0 0.0
      %823 = vmatprep.subr.mxu0 0.0
      %824 = vmatpush1.msra.mxu0 0.0
      %825 = vmatprep.subr.mxu0 0.0
      %826 = vmatpush1.msra.mxu0 0.0
      %827 = vmatprep.subr.mxu0 0.0
      %828 = vmatpush1.msra.mxu0 0.0
      %829 = vmatprep.subr.mxu0 0.0
      %830 = vmatpush1.msra.mxu0 0.0
      %831 = vmatprep.subr.mxu0 0.0
      %832 = vmatpush1.msra.mxu0 0.0
      %833 = vmatprep.subr.mxu0 0.0
      %834 = vmatpush1.msra.mxu0 0.0
      %835 = vmatprep.subr.mxu0 0.0
      %836 = vmatpush1.msra.mxu0 0.0
      %837 = vmatprep.subr.mxu0 0.0
      %838 = vmatpush1.msra.mxu0 0.0
      %839 = vmatprep.subr.mxu0 0.0
      %840 = vmatpush1.msra.mxu0 0.0
      %841 = vmatprep.subr.mxu0 0.0
      %842 = vmatpush1.msra.mxu0 0.0
      %843 = vmatprep.subr.mxu0 0.0
      %844 = vmatpush1.msra.mxu0 0.0
      %845 = vmatprep.subr.mxu0 0.0
      %846 = vmatpush1.msra.mxu0 0.0
      %847 = vmatprep.subr.mxu0 0.0
      %848 = vmatpush1.msra.mxu0 0.0
      %849 = vmatprep.subr.mxu0 0.0
      %850 = vmatpush1.msra.mxu0 0.0
      %851 = vmatprep.subr.mxu0 0.0
      %852 = vmatpush1.msra.mxu0 0.0
      %853 = vmatprep.subr.mxu0 0.0
      %854 = vmatpush1.msra.mxu0 0.0
      %855 = vmatprep.subr.mxu0 0.0
      %856 = vmatpush1.msra.mxu0 0.0
      %857 = vmatprep.subr.mxu0 0.0
      %858 = vmatpush1.msra.mxu0 0.0
      %859 = vmatprep.subr.mxu0 0.0
      %860 = vmatpush1.msra.mxu0 0.0
      %861 = vmatprep.subr.mxu0 0.0
      %862 = vmatpush1.msra.mxu0 0.0
      %863 = vmatprep.subr.mxu0 0.0
      %864 = vmatpush1.msra.mxu0 0.0
      %865 = vmatprep.subr.mxu0 0.0
      %866 = vmatpush1.msra.mxu0 0.0
      %867 = vmatprep.mubr.f32.mxu0 0.0
      %v868 = vand.u32 %v461, 4294901760
      %v869 = vsub.f32 %v461, %v868
      %v870 = vand.u32 %v869, 4294901760
      %871 = vmatmul.mubr.f32.gmra.mrb[0].mxu0 %v870
      %v872 = vpop.f32.mrb[0].mxu0
      %v873 = vadd.f32 %v781, %v872
      %v874 = vpop.f32.mrb[0].mxu0
      %v875 = vadd.f32 %v783, %v874
      %876 = vmatprep.mubr.f32.mxu0 0.0
      %v877 = vand.u32 %v464, 4294901760
      %v878 = vsub.f32 %v464, %v877
      %v879 = vand.u32 %v878, 4294901760
      %880 = vmatmul.mubr.f32.gmra.mrb[0].mxu0 %v879
      %v881 = vpop.f32.mrb[0].mxu0
      %v882 = vadd.f32 %v789, %v881
      %v883 = vpop.f32.mrb[0].mxu0
      %v884 = vadd.f32 %v791, %v883
      %885 = vdwg.mxu0
      %v886 = vand.u32 %v436, 4294901760
      %v887 = vsub.f32 %v436, %v886
      %v888 = vand.u32 %v887, 4294901760
      %889 = vmatprep.subr.mxu0 %v888
      %v890 = vand.u32 %v435, 4294901760
      %v891 = vsub.f32 %v435, %v890
      %v892 = vand.u32 %v891, 4294901760
      %893 = vmatpush1.msra.mxu0 %v892
      %v894 = vand.u32 %v438, 4294901760
      %v895 = vsub.f32 %v438, %v894
      %v896 = vand.u32 %v895, 4294901760
      %897 = vmatprep.subr.mxu0 %v896
      %v898 = vand.u32 %v437, 4294901760
      %v899 = vsub.f32 %v437, %v898
      %v900 = vand.u32 %v899, 4294901760
      %901 = vmatpush1.msra.mxu0 %v900
      %v902 = vand.u32 %v440, 4294901760
      %v903 = vsub.f32 %v440, %v902
      %v904 = vand.u32 %v903, 4294901760
      %905 = vmatprep.subr.mxu0 %v904
      %v906 = vand.u32 %v439, 4294901760
      %v907 = vsub.f32 %v439, %v906
      %v908 = vand.u32 %v907, 4294901760
      %909 = vmatpush1.msra.mxu0 %v908
      %v910 = vand.u32 %v442, 4294901760
      %v911 = vsub.f32 %v442, %v910
      %v912 = vand.u32 %v911, 4294901760
      %913 = vmatprep.subr.mxu0 %v912
      %v914 = vand.u32 %v441, 4294901760
      %v915 = vsub.f32 %v441, %v914
      %v916 = vand.u32 %v915, 4294901760
      %917 = vmatpush1.msra.mxu0 %v916
      %v918 = vand.u32 %v444, 4294901760
      %v919 = vsub.f32 %v444, %v918
      %v920 = vand.u32 %v919, 4294901760
      %921 = vmatprep.subr.mxu0 %v920
      %v922 = vand.u32 %v443, 4294901760
      %v923 = vsub.f32 %v443, %v922
      %v924 = vand.u32 %v923, 4294901760
      %925 = vmatpush1.msra.mxu0 %v924
      %926 = vmatprep.subr.mxu0 0.0
      %927 = vmatpush1.msra.mxu0 0.0
      %928 = vmatprep.subr.mxu0 0.0
      %929 = vmatpush1.msra.mxu0 0.0
      %930 = vmatprep.subr.mxu0 0.0
      %931 = vmatpush1.msra.mxu0 0.0
      %932 = vmatprep.subr.mxu0 0.0
      %933 = vmatpush1.msra.mxu0 0.0
      %934 = vmatprep.subr.mxu0 0.0
      %935 = vmatpush1.msra.mxu0 0.0
      %936 = vmatprep.subr.mxu0 0.0
      %937 = vmatpush1.msra.mxu0 0.0
      %938 = vmatprep.subr.mxu0 0.0
      %939 = vmatpush1.msra.mxu0 0.0
      %940 = vmatprep.subr.mxu0 0.0
      %941 = vmatpush1.msra.mxu0 0.0
      %942 = vmatprep.subr.mxu0 0.0
      %943 = vmatpush1.msra.mxu0 0.0
      %944 = vmatprep.subr.mxu0 0.0
      %945 = vmatpush1.msra.mxu0 0.0
      %946 = vmatprep.subr.mxu0 0.0
      %947 = vmatpush1.msra.mxu0 0.0
      %948 = vmatprep.subr.mxu0 0.0
      %949 = vmatpush1.msra.mxu0 0.0
      %950 = vmatprep.subr.mxu0 0.0
      %951 = vmatpush1.msra.mxu0 0.0
      %952 = vmatprep.subr.mxu0 0.0
      %953 = vmatpush1.msra.mxu0 0.0
      %954 = vmatprep.subr.mxu0 0.0
      %955 = vmatpush1.msra.mxu0 0.0
      %956 = vmatprep.subr.mxu0 0.0
      %957 = vmatpush1.msra.mxu0 0.0
      %958 = vmatprep.subr.mxu0 0.0
      %959 = vmatpush1.msra.mxu0 0.0
      %960 = vmatprep.subr.mxu0 0.0
      %961 = vmatpush1.msra.mxu0 0.0
      %962 = vmatprep.subr.mxu0 0.0
      %963 = vmatpush1.msra.mxu0 0.0
      %964 = vmatprep.subr.mxu0 0.0
      %965 = vmatpush1.msra.mxu0 0.0
      %966 = vmatprep.subr.mxu0 0.0
      %967 = vmatpush1.msra.mxu0 0.0
      %968 = vmatprep.subr.mxu0 0.0
      %969 = vmatpush1.msra.mxu0 0.0
      %970 = vmatprep.subr.mxu0 0.0
      %971 = vmatpush1.msra.mxu0 0.0
      %972 = vmatprep.subr.mxu0 0.0
      %973 = vmatpush1.msra.mxu0 0.0
      %974 = vmatprep.subr.mxu0 0.0
      %975 = vmatpush1.msra.mxu0 0.0
      %976 = vmatprep.subr.mxu0 0.0
      %977 = vmatpush1.msra.mxu0 0.0
      %978 = vmatprep.subr.mxu0 0.0
      %979 = vmatpush1.msra.mxu0 0.0
      %980 = vmatprep.mubr.f32.mxu0 0.0
      %v981 = vand.u32 %v461, 4294901760
      %982 = vmatmul.mubr.f32.gmra.mrb[0].mxu0 %v981
      %v983 = vpop.f32.mrb[0].mxu0
      %v984 = vadd.f32 %v873, %v983
      %v985 = vpop.f32.mrb[0].mxu0
      %v986 = vadd.f32 %v875, %v985
      %987 = vmatprep.mubr.f32.mxu0 0.0
      %v988 = vand.u32 %v464, 4294901760
      %989 = vmatmul.mubr.f32.gmra.mrb[0].mxu0 %v988
      %v990 = vpop.f32.mrb[0].mxu0
      %v991 = vadd.f32 %v882, %v990
      %v992 = vpop.f32.mrb[0].mxu0
      %v993 = vadd.f32 %v884, %v992
      %994 = vdwg.mxu0
      %v995 = vand.u32 %v436, 4294901760
      %996 = vmatprep.subr.mxu0 %v995
      %v997 = vand.u32 %v435, 4294901760
      %998 = vmatpush1.msra.mxu0 %v997
      %v999 = vand.u32 %v438, 4294901760
      %1000 = vmatprep.subr.mxu0 %v999
      %v1001 = vand.u32 %v437, 4294901760
      %1002 = vmatpush1.msra.mxu0 %v1001
      %v1003 = vand.u32 %v440, 4294901760
      %1004 = vmatprep.subr.mxu0 %v1003
      %v1005 = vand.u32 %v439, 4294901760
      %1006 = vmatpush1.msra.mxu0 %v1005
      %v1007 = vand.u32 %v442, 4294901760
      %1008 = vmatprep.subr.mxu0 %v1007
      %v1009 = vand.u32 %v441, 4294901760
      %1010 = vmatpush1.msra.mxu0 %v1009
      %v1011 = vand.u32 %v444, 4294901760
      %1012 = vmatprep.subr.mxu0 %v1011
      %v1013 = vand.u32 %v443, 4294901760
      %1014 = vmatpush1.msra.mxu0 %v1013
      %1015 = vmatprep.subr.mxu0 0.0
      %1016 = vmatpush1.msra.mxu0 0.0
      %1017 = vmatprep.subr.mxu0 0.0
      %1018 = vmatpush1.msra.mxu0 0.0
      %1019 = vmatprep.subr.mxu0 0.0
      %1020 = vmatpush1.msra.mxu0 0.0
      %1021 = vmatprep.subr.mxu0 0.0
      %1022 = vmatpush1.msra.mxu0 0.0
      %1023 = vmatprep.subr.mxu0 0.0
      %1024 = vmatpush1.msra.mxu0 0.0
      %1025 = vmatprep.subr.mxu0 0.0
      %1026 = vmatpush1.msra.mxu0 0.0
      %1027 = vmatprep.subr.mxu0 0.0
      %1028 = vmatpush1.msra.mxu0 0.0
      %1029 = vmatprep.subr.mxu0 0.0
      %1030 = vmatpush1.msra.mxu0 0.0
      %1031 = vmatprep.subr.mxu0 0.0
      %1032 = vmatpush1.msra.mxu0 0.0
      %1033 = vmatprep.subr.mxu0 0.0
      %1034 = vmatpush1.msra.mxu0 0.0
      %1035 = vmatprep.subr.mxu0 0.0
      %1036 = vmatpush1.msra.mxu0 0.0
      %1037 = vmatprep.subr.mxu0 0.0
      %1038 = vmatpush1.msra.mxu0 0.0
      %1039 = vmatprep.subr.mxu0 0.0
      %1040 = vmatpush1.msra.mxu0 0.0
      %1041 = vmatprep.subr.mxu0 0.0
      %1042 = vmatpush1.msra.mxu0 0.0
      %1043 = vmatprep.subr.mxu0 0.0
      %1044 = vmatpush1.msra.mxu0 0.0
      %1045 = vmatprep.subr.mxu0 0.0
      %1046 = vmatpush1.msra.mxu0 0.0
      %1047 = vmatprep.subr.mxu0 0.0
      %1048 = vmatpush1.msra.mxu0 0.0
      %1049 = vmatprep.subr.mxu0 0.0
      %1050 = vmatpush1.msra.mxu0 0.0
      %1051 = vmatprep.subr.mxu0 0.0
      %1052 = vmatpush1.msra.mxu0 0.0
      %1053 = vmatprep.subr.mxu0 0.0
      %1054 = vmatpush1.msra.mxu0 0.0
      %1055 = vmatprep.subr.mxu0 0.0
      %1056 = vmatpush1.msra.mxu0 0.0
      %1057 = vmatprep.subr.mxu0 0.0
      %1058 = vmatpush1.msra.mxu0 0.0
      %1059 = vmatprep.subr.mxu0 0.0
      %1060 = vmatpush1.msra.mxu0 0.0
      %1061 = vmatprep.subr.mxu0 0.0
      %1062 = vmatpush1.msra.mxu0 0.0
      %1063 = vmatprep.subr.mxu0 0.0
      %1064 = vmatpush1.msra.mxu0 0.0
      %1065 = vmatprep.subr.mxu0 0.0
      %1066 = vmatpush1.msra.mxu0 0.0
      %1067 = vmatprep.subr.mxu0 0.0
      %1068 = vmatpush1.msra.mxu0 0.0
      %1069 = vmatprep.mubr.f32.mxu0 0.0
      %v1070 = vand.u32 %v461, 4294901760
      %1071 = vmatmul.mubr.f32.gmra.mrb[0].mxu0 %v1070
      %v1072 = vpop.f32.mrb[0].mxu0
      %v1073 = vadd.f32 %v984, %v1072
      %v1074 = vpop.f32.mrb[0].mxu0
      %v1075 = vadd.f32 %v986, %v1074
      %1076 = vmatprep.mubr.f32.mxu0 0.0
      %v1077 = vand.u32 %v464, 4294901760
      %1078 = vmatmul.mubr.f32.gmra.mrb[0].mxu0 %v1077
      %v1079 = vpop.f32.mrb[0].mxu0
      %v1080 = vadd.f32 %v991, %v1079
      %v1081 = vpop.f32.mrb[0].mxu0
      %v1082 = vadd.f32 %v993, %v1081
      %1083 = vdwg.mxu0
      %1084 = vst [vmem:[%s269] sm:$0xff] %v1073
      %1085 = vst [vmem:[%s269 + $0x8] sm:$0xff] %v1075
      %1086 = vst [vmem:[%s269 + $0x10] sm:$0xff] %v1080
      %1087 = vst [vmem:[%s269 + $0x18] sm:$0xff] %v1082
      %s1088 = smul.u32 2, %s20
      %p1089 = scmp.lt.s32.totalorder %s19, 1
      %s1090 = scalar_select %p1089, %s19, 1
      %p1091 = scmp.lt.s32.totalorder %s1088, 1
      %s1092 = scalar_select %p1091, %s1088, 1
      %s1093 = smul.addr %s1090, 4
      %s1094 = sadd.s32 %s1092, %s1093
      %s1095 = smul.addr %s1094, 8
      %s1096 = scalar_lea.vmem %s4, %s1095
      // Predicated region
      $region37: #{frescat_area_v2.3} parent=35 // pred_check
        %p1097 = pneg %p145
      $region38: #{frescat_area_v2.3} parent=35 // pred_check_branch
        %1099 = sbr.rel (%p1097) target = $region40
      $region39: #{frescat_area_v2.3} parent=35 // pred_region
        %s1100 = smul.u32 2, %s20
      $region40: #{frescat_area_v2.3} parent=35 // pred_fallthru
        _
    $region36: #{frescat_area_v2.3} parent=5 // pred_fallthru
      _
    %p1101 = scmp.le.s32.totalorder 2, %s10
    // Predicated region
    $region41: #{frescat_area_v2.3} parent=5 // pred_check
      %p1102 = pneg %p1101
    $region42: #{frescat_area_v2.3} parent=5 // pred_check_branch
      %1104 = sbr.rel (%p1102) target = $region44
    $region43: #{frescat_area_v2.3} parent=5 // pred_region
      %s1105 = ssub.s32 %s10, 2
      // Predicated region
      $region45: #{frescat_area_v2.3} parent=43 // pred_check
        %p1106 = pneg %p151
      $region46: #{frescat_area_v2.3} parent=43 // pred_check_branch
        %1108 = sbr.rel (%p1106) target = $region48
      $region47: #{frescat_area_v2.3} parent=43 // pred_region
        %s1109 = smul.u32 2, %s22
        %p1110 = scmp.lt.s32.totalorder %s21, 1
        %s1111 = scalar_select %p1110, %s21, 1
        %p1112 = scmp.lt.s32.totalorder %s1109, 1
        %s1113 = scalar_select %p1112, %s1109, 1
        %s1114 = smul.addr %s1111, 4
        %s1115 = sadd.s32 %s1113, %s1114
        %s1116 = smul.addr %s1115, 8
        %s1117 = scalar_lea.vmem %s4, %s1116
      $region48: #{frescat_area_v2.3} parent=43 // pred_fallthru
        _
    $region44: #{frescat_area_v2.3} parent=5 // pred_fallthru
      _
  $region6: #{frescat_area_v2.3} parent=0 // loop_footer
    %s14 = sadd.s32 1, %s10
  $region7: #{frescat_area_v2.3} parent=0 // loop_footer_branch
    %9 = sbr.rel target = $region3
  $region8: #{frescat_area_v2.3} parent=0 // loop_exit
    _

</llo_original>
